<compile_context>
chip_gen: v6e
topology: v6e:2x2x1
jax: 0.10.0
libtpu: 0.0.40
codegen_flags: <defaults>
</compile_context>

<pallas_src>
import jax
import jax.numpy as jnp
from jax import lax
from jax.experimental import pallas as pl
from jax.experimental.pallas import tpu as pltpu

# ---------------- config (small, consistent with the module) ----------------
B = 2
DIM = 32            # C
HEADS = 4
HEAD_DIM = DIM // HEADS
WIN = 4             # win_size
H = W = 8
L = H * W
N = WIN * WIN       # tokens per window
MLP_RATIO = 4.0
HIDDEN = int(DIM * MLP_RATIO)
SCALE = HEAD_DIM ** -0.5
EPS = 1e-5
NEG_INF = -1e30     # cross-window mask value


def _layernorm(v, w, b):
    mu = jnp.mean(v, axis=-1, keepdims=True)
    var = jnp.mean((v - mu) ** 2, axis=-1, keepdims=True)
    return (v - mu) * lax.rsqrt(var + EPS) * w + b


# ---------------- the single fused kernel (one grid step = one batch element) ----------
def _fused_block_kernel(x_ref, f_ref, ln_ref,
                        wx_ref, bx_ref, wf_ref, bf_ref,
                        bm_ref, wproj_ref, bproj_ref,
                        w1_ref, b1_ref, wdw_ref, bdw_ref,
                        w2_ref, b2_ref, out_ref):
    x = x_ref[...]                                       # (L, C)
    f = f_ref[...]                                       # (L, C)

    # ---- norm1 / norm1_f (rows of the packed LN table) ----
    xn = _layernorm(x, ln_ref[0:1, :], ln_ref[1:2, :])
    fn = _layernorm(f, ln_ref[2:3, :], ln_ref[3:4, :])

    # ---- fused projections: [q|k|v] for x, [q_f|k_f] for f ----
    qkv = jnp.dot(xn, wx_ref[...], preferred_element_type=jnp.float32) + bx_ref[...]   # (L, 3C)
    qkf = jnp.dot(fn, wf_ref[...], preferred_element_type=jnp.float32) + bf_ref[...]   # (L, 2C)

    mask = bm_ref[HEADS]                                 # (L, L): 0 same-window, -1e30 otherwise
    dn = (((1,), (1,)), ((), ()))                        # (L,d) x (L,d) -> (L,L)

    # ---- joint attention, per head; PV folded straight into the output projection ----
    attn_out = jnp.zeros((L, DIM), jnp.float32)
    for h in range(HEADS):                               # static unroll (4 heads)
        lo = h * HEAD_DIM
        hi = lo + HEAD_DIM
        q_h = qkv[:, lo:hi] * SCALE
        k_h = qkv[:, DIM + lo:DIM + hi]
        v_h = qkv[:, 2 * DIM + lo:2 * DIM + hi]
        qf_h = qkf[:, lo:hi] * SCALE
        kf_h = qkf[:, DIM + lo:DIM + hi]
        bias_h = bm_ref[h]                               # (L, L) relative-position bias

        s = lax.dot_general(q_h, k_h, dn, preferred_element_type=jnp.float32) + bias_h
        sf = lax.dot_general(qf_h, kf_h, dn, preferred_element_type=jnp.float32) + bias_h
        a = s * sf + mask                                # joint attention + window mask
        a = a - jnp.max(a, axis=-1, keepdims=True)
        e = jnp.exp(a)
        p = e * pl.reciprocal(jnp.sum(e, axis=-1, keepdims=True), approx=True)
        pv = jnp.dot(p, v_h, preferred_element_type=jnp.float32)          # (L, hd)
        attn_out = attn_out + jnp.dot(pv, wproj_ref[lo:hi, :],
                                      preferred_element_type=jnp.float32)  # (L, C)

    x1 = x + attn_out + bproj_ref[...]                   # residual 1 (+ proj bias)

    # ---- norm2 + Simple_mlp (fc1 -> depthwise 3x3 conv -> ReLU -> fc2) + residual ----
    xn2 = _layernorm(x1, ln_ref[4:5, :], ln_ref[5:6, :])
    h1 = jnp.dot(xn2, w1_ref[...], preferred_element_type=jnp.float32) + b1_ref[...]   # (L, HIDDEN)

    # depthwise 3x3, padding=1: 9 taps of sublane roll on the flat (L, HIDDEN) image,
    # with row/col boundary masks (W == 8 is a power of two -> shift/and).
    tok = lax.broadcasted_iota(jnp.int32, (L, 1), 0)
    row = tok >> 3
    col = tok & (W - 1)
    acc = jnp.zeros((L, HIDDEN), jnp.float32) + bdw_ref[...]
    for dy in (-1, 0, 1):
        for dx in (-1, 0, 1):
            off = dy * W + dx
            tap = (dy + 1) * 3 + (dx + 1)
            shifted = h1 if off == 0 else pltpu.roll(h1, shift=(-off) % L, axis=0)
            ok = ((row + dy >= 0) & (row + dy < H) &
                  (col + dx >= 0) & (col + dx < W)).astype(jnp.float32)   # (L, 1)
            acc = acc + shifted * ok * wdw_ref[tap:tap + 1, :]
    acc = jnp.maximum(acc, 0.0)                          # ReLU

    out_ref[...] = x1 + (jnp.dot(acc, w2_ref[...], preferred_element_type=jnp.float32)
                         + b2_ref[...])


# ---------------- bias / mask construction for the masked full attention ---------------
def _full_bias_and_mask(table):
    """(HEADS+1, L, L): heads 0..3 = relative-position bias (valid on same-window pairs),
    last slice = additive window mask (0 same-window, NEG_INF cross-window)."""
    ii, jj = jnp.meshgrid(jnp.arange(H), jnp.arange(W), indexing='ij')
    row = ii.reshape(-1)
    col = jj.reshape(-1)
    same = ((row[:, None] // WIN) == (row[None, :] // WIN)) & \
           ((col[:, None] // WIN) == (col[None, :] // WIN))
    dr = jnp.clip(row[:, None] - row[None, :] + (WIN - 1), 0, 2 * WIN - 2)
    dc = jnp.clip(col[:, None] - col[None, :] + (WIN - 1), 0, 2 * WIN - 2)
    idx = dr * (2 * WIN - 1) + dc                        # (L, L)
    bias = table[idx.reshape(-1)].reshape(L, L, HEADS)
    bias = jnp.transpose(bias, (2, 0, 1)).astype(jnp.float32)        # (HEADS, L, L)
    mask = jnp.where(same, 0.0, NEG_INF).astype(jnp.float32)[None]   # (1, L, L)
    return jnp.concatenate([bias, mask], axis=0)


# ---------------- wrapper: one pallas_call for the whole block -------------------------
def jsa_transformer_block(x, f, p):
    B_ = x.shape[0]
    bias_mask = _full_bias_and_mask(p['rpb_table'])
    ln = jnp.concatenate([p['n1_w'], p['n1_b'], p['n1f_w'], p['n1f_b'],
                          p['n2_w'], p['n2_b']], axis=0)                 # (6, C)
    w_x = jnp.concatenate([p['wq'], p['wkv']], axis=1)                   # (C, 3C)  [q|k|v]
    b_x = jnp.concatenate([p['bq'], p['bkv']], axis=1)                   # (1, 3C)
    w_f = jnp.concatenate([p['wq_f'], p['wkv_f'][:, :DIM]], axis=1)      # (C, 2C)  [q_f|k_f]
    b_f = jnp.concatenate([p['bq_f'], p['bkv_f'][:, :DIM]], axis=1)      # (1, 2C)
    wdw = p['wdw'].reshape(9, HIDDEN)                                    # taps row-major
    bdw = p['bdw'].reshape(1, HIDDEN)

    tok_spec = pl.BlockSpec((None, L, DIM), lambda b: (b, 0, 0))
    full2 = lambda s: pl.BlockSpec(s, lambda b: (0, 0))
    full3 = lambda s: pl.BlockSpec(s, lambda b: (0, 0, 0))

    return pl.pallas_call(
        _fused_block_kernel,
        out_shape=jax.ShapeDtypeStruct((B_, L, DIM), jnp.float32),
        grid=(B_,),
        in_specs=[
            tok_spec, tok_spec,
            full2((6, DIM)),
            full2((DIM, 3 * DIM)), full2((1, 3 * DIM)),
            full2((DIM, 2 * DIM)), full2((1, 2 * DIM)),
            full3((HEADS + 1, L, L)),
            full2((DIM, DIM)), full2((1, DIM)),
            full2((DIM, HIDDEN)), full2((1, HIDDEN)),
            full2((9, HIDDEN)), full2((1, HIDDEN)),
            full2((HIDDEN, DIM)), full2((1, DIM)),
        ],
        out_specs=tok_spec,
        compiler_params=pltpu.CompilerParams(dimension_semantics=("parallel",)),
    )(x, f, ln, w_x, b_x, w_f, b_f, bias_mask,
      p['wproj'], p['bproj'], p['w1'], p['b1'], wdw, bdw, p['w2'], p['b2'])


# ---------------- deterministic parameter init -----------------------------------------
def init_params(key):
    ks = jax.random.split(key, 24)
    rnd = lambda k, shape, s=0.05: jax.random.normal(k, shape, jnp.float32) * s
    return {
        'n1_w': 1.0 + rnd(ks[0], (1, DIM), 0.02), 'n1_b': rnd(ks[1], (1, DIM), 0.02),
        'n1f_w': 1.0 + rnd(ks[2], (1, DIM), 0.02), 'n1f_b': rnd(ks[3], (1, DIM), 0.02),
        'n2_w': 1.0 + rnd(ks[4], (1, DIM), 0.02), 'n2_b': rnd(ks[5], (1, DIM), 0.02),
        'wq': rnd(ks[6], (DIM, DIM)), 'bq': rnd(ks[7], (1, DIM)),
        'wkv': rnd(ks[8], (DIM, 2 * DIM)), 'bkv': rnd(ks[9], (1, 2 * DIM)),
        'wq_f': rnd(ks[10], (DIM, DIM)), 'bq_f': rnd(ks[11], (1, DIM)),
        'wkv_f': rnd(ks[12], (DIM, 2 * DIM)), 'bkv_f': rnd(ks[13], (1, 2 * DIM)),
        'wproj': rnd(ks[14], (DIM, DIM)), 'bproj': rnd(ks[15], (1, DIM)),
        'rpb_table': rnd(ks[16], ((2 * WIN - 1) ** 2, HEADS), 0.02),
        'w1': rnd(ks[17], (DIM, HIDDEN)), 'b1': rnd(ks[18], (1, HIDDEN)),
        'wdw': rnd(ks[19], (3, 3, HIDDEN)), 'bdw': rnd(ks[20], (1, 1, HIDDEN)),
        'w2': rnd(ks[21], (HIDDEN, DIM)), 'b2': rnd(ks[22], (1, DIM)),
    }


# ---------------- pure-JAX reference (mirrors the PyTorch forward, windowed form) -------
def window_partition(t):
    Bt, Lt, Ct = t.shape
    t = t.reshape(Bt, H // WIN, WIN, W // WIN, WIN, Ct)
    return t.transpose(0, 1, 3, 2, 4, 5).reshape(-1, N, Ct)


def window_reverse(wins):
    wins = wins.reshape(B, H // WIN, W // WIN, WIN, WIN, DIM)
    return wins.transpose(0, 1, 3, 2, 4, 5).reshape(B, L, DIM)


def relative_position_bias(table):
    coords = jnp.stack(jnp.meshgrid(jnp.arange(WIN), jnp.arange(WIN), indexing='ij'))
    cf = coords.reshape(2, -1)
    rel = cf[:, :, None] - cf[:, None, :]               # (2, N, N)
    rel = jnp.transpose(rel, (1, 2, 0))
    rel = rel.at[:, :, 0].add(WIN - 1)
    rel = rel.at[:, :, 1].add(WIN - 1)
    rel = rel.at[:, :, 0].multiply(2 * WIN - 1)
    idx = rel.sum(-1)                                   # (N, N)
    bias = table[idx.reshape(-1)].reshape(N, N, HEADS)
    return jnp.transpose(bias, (2, 0, 1)).astype(jnp.float32)   # (HEADS, N, N)


def reference_block(x, f, p):
    bias = relative_position_bias(p['rpb_table'])

    def ln(v, w, b):
        mu = v.mean(-1, keepdims=True)
        var = ((v - mu) ** 2).mean(-1, keepdims=True)
        return (v - mu) / jnp.sqrt(var + EPS) * w[0] + b[0]

    shortcut = x
    xw = window_partition(ln(x, p['n1_w'], p['n1_b']))
    fw = window_partition(ln(f, p['n1f_w'], p['n1f_b']))
    B_ = xw.shape[0]

    def qkv(t, wq, bq, wkv, bkv):
        q = t @ wq + bq[0]
        kv = t @ wkv + bkv[0]
        k, v = kv[..., :DIM], kv[..., DIM:]
        sp = lambda a: a.reshape(B_, N, HEADS, HEAD_DIM).transpose(0, 2, 1, 3)
        return sp(q), sp(k), sp(v)

    q, k, v = qkv(xw, p['wq'], p['bq'], p['wkv'], p['bkv'])
    qf, kf, _ = qkv(fw, p['wq_f'], p['bq_f'], p['wkv_f'], p['bkv_f'])
    attn = (q * SCALE) @ jnp.swapaxes(k, -1, -2) + bias[None]
    attn_f = (qf * SCALE) @ jnp.swapaxes(kf, -1, -2) + bias[None]
    a = jax.nn.softmax(attn * attn_f, axis=-1)
    o = (a @ v).transpose(0, 2, 1, 3).reshape(B_, N, DIM)
    o = o @ p['wproj'] + p['bproj'][0]
    x = shortcut + window_reverse(o)

    xn = ln(x, p['n2_w'], p['n2_b'])
    h1 = xn @ p['w1'] + p['b1'][0]
    img = h1.reshape(B, H, W, HIDDEN)
    conv = lax.conv_general_dilated(
        img, p['wdw'].reshape(3, 3, 1, HIDDEN), (1, 1), 'SAME',
        dimension_numbers=('NHWC', 'HWIO', 'NHWC'), feature_group_count=HIDDEN)
    conv = jnp.maximum(conv + p['bdw'].reshape(1, 1, 1, HIDDEN), 0.0)
    h2 = conv.reshape(B, L, HIDDEN)
    return x + h2 @ p['w2'] + p['b2'][0]


if __name__ == "__main__":
    key = jax.random.PRNGKey(0)
    kx, kf, kp = jax.random.split(key, 3)
    x = jax.random.normal(kx, (B, L, DIM), jnp.float32)
    f = jax.random.normal(kf, (B, L, DIM), jnp.float32)
    params = init_params(kp)

    out = jax.jit(jsa_transformer_block)(x, f, params)
    out = jax.block_until_ready(out)
    assert out.shape == (B, L, DIM)

    ref = reference_block(x, f, params)
    err = float(jnp.max(jnp.abs(out - ref)))
    if err < 1e-3:
        print("KERNEL_OK")
    else:
        print("MISMATCH max_abs_err=", err)
</pallas_src>

<mosaic_0001>
module attributes {stable_mosaic.version = 11 : i64} {
  func.func @_fused_block_kernel(%arg0: i32, %arg1: memref<1x64x32xf32, #tpu.memory_space<vmem>>, %arg2: memref<1x64x32xf32, #tpu.memory_space<vmem>>, %arg3: memref<6x32xf32, #tpu.memory_space<vmem>>, %arg4: memref<32x96xf32, #tpu.memory_space<vmem>>, %arg5: memref<1x96xf32, #tpu.memory_space<vmem>>, %arg6: memref<32x64xf32, #tpu.memory_space<vmem>>, %arg7: memref<1x64xf32, #tpu.memory_space<vmem>>, %arg8: memref<5x64x64xf32, #tpu.memory_space<vmem>>, %arg9: memref<32x32xf32, #tpu.memory_space<vmem>>, %arg10: memref<1x32xf32, #tpu.memory_space<vmem>>, %arg11: memref<32x128xf32, #tpu.memory_space<vmem>>, %arg12: memref<1x128xf32, #tpu.memory_space<vmem>>, %arg13: memref<9x128xf32, #tpu.memory_space<vmem>>, %arg14: memref<1x128xf32, #tpu.memory_space<vmem>>, %arg15: memref<128x32xf32, #tpu.memory_space<vmem>>, %arg16: memref<1x32xf32, #tpu.memory_space<vmem>>, %arg17: memref<1x64x32xf32, #tpu.memory_space<vmem>>) attributes {dimension_semantics = [#tpu.dimension_semantics<parallel>], iteration_bounds = array<i64: 2>, scalar_prefetch = 0 : i64, scratch_operands = 0 : i64, tpu.core_type = #tpu.core_type<tc>, window_params = [{transform_indices = @transform_0, window_bounds = array<i64: 1, 64, 32>}, {transform_indices = @transform_1, window_bounds = array<i64: 1, 64, 32>}, {pipeline_mode = #tpu.pipeline_mode<synchronous>, transform_indices = @transform_2, window_bounds = array<i64: 6, 32>}, {pipeline_mode = #tpu.pipeline_mode<synchronous>, transform_indices = @transform_3, window_bounds = array<i64: 32, 96>}, {pipeline_mode = #tpu.pipeline_mode<synchronous>, transform_indices = @transform_4, window_bounds = array<i64: 1, 96>}, {pipeline_mode = #tpu.pipeline_mode<synchronous>, transform_indices = @transform_5, window_bounds = array<i64: 32, 64>}, {pipeline_mode = #tpu.pipeline_mode<synchronous>, transform_indices = @transform_6, window_bounds = array<i64: 1, 64>}, {pipeline_mode = #tpu.pipeline_mode<synchronous>, transform_indices = @transform_7, window_bounds = array<i64: 5, 64, 64>}, {pipeline_mode = #tpu.pipeline_mode<synchronous>, transform_indices = @transform_8, window_bounds = array<i64: 32, 32>}, {pipeline_mode = #tpu.pipeline_mode<synchronous>, transform_indices = @transform_9, window_bounds = array<i64: 1, 32>}, {pipeline_mode = #tpu.pipeline_mode<synchronous>, transform_indices = @transform_10, window_bounds = array<i64: 32, 128>}, {pipeline_mode = #tpu.pipeline_mode<synchronous>, transform_indices = @transform_11, window_bounds = array<i64: 1, 128>}, {pipeline_mode = #tpu.pipeline_mode<synchronous>, transform_indices = @transform_12, window_bounds = array<i64: 9, 128>}, {pipeline_mode = #tpu.pipeline_mode<synchronous>, transform_indices = @transform_13, window_bounds = array<i64: 1, 128>}, {pipeline_mode = #tpu.pipeline_mode<synchronous>, transform_indices = @transform_14, window_bounds = array<i64: 128, 32>}, {pipeline_mode = #tpu.pipeline_mode<synchronous>, transform_indices = @transform_15, window_bounds = array<i64: 1, 32>}, {transform_indices = @transform_16, window_bounds = array<i64: 1, 64, 32>}]} {
    %c0 = arith.constant 0 : index
    %c0_0 = arith.constant 0 : index
    %c0_1 = arith.constant 0 : index
    %0 = vector.load %arg1[%c0, %c0_0, %c0_1] : memref<1x64x32xf32, #tpu.memory_space<vmem>>, vector<1x64x32xf32>
    %1 = vector.shape_cast %0 : vector<1x64x32xf32> to vector<64x32xf32>
    %c0_2 = arith.constant 0 : index
    %c0_3 = arith.constant 0 : index
    %c0_4 = arith.constant 0 : index
    %2 = vector.load %arg2[%c0_2, %c0_3, %c0_4] : memref<1x64x32xf32, #tpu.memory_space<vmem>>, vector<1x64x32xf32>
    %3 = vector.shape_cast %2 : vector<1x64x32xf32> to vector<64x32xf32>
    %c0_5 = arith.constant 0 : index
    %c0_6 = arith.constant 0 : index
    %4 = vector.load %arg3[%c0_5, %c0_6] : memref<6x32xf32, #tpu.memory_space<vmem>>, vector<1x32xf32>
    %c1 = arith.constant 1 : index
    %c0_7 = arith.constant 0 : index
    %5 = vector.load %arg3[%c1, %c0_7] : memref<6x32xf32, #tpu.memory_space<vmem>>, vector<1x32xf32>
    %cst = arith.constant dense<0.000000e+00> : vector<64xf32>
    %6 = vector.multi_reduction <add>, %1, %cst [1] : vector<64x32xf32> to vector<64xf32>
    %7 = vector.shape_cast %6 : vector<64xf32> to vector<64x1xf32>
    %cst_8 = arith.constant 3.200000e+01 : f32
    %8 = vector.broadcast %cst_8 : f32 to vector<64x1xf32>
    %9 = arith.divf %7, %8 : vector<64x1xf32>
    %10 = vector.broadcast %9 : vector<64x1xf32> to vector<64x32xf32>
    %11 = arith.subf %1, %10 : vector<64x32xf32>
    %12 = arith.mulf %11, %11 : vector<64x32xf32>
    %cst_9 = arith.constant dense<0.000000e+00> : vector<64xf32>
    %13 = vector.multi_reduction <add>, %12, %cst_9 [1] : vector<64x32xf32> to vector<64xf32>
    %14 = vector.shape_cast %13 : vector<64xf32> to vector<64x1xf32>
    %cst_10 = arith.constant 3.200000e+01 : f32
    %15 = vector.broadcast %cst_10 : f32 to vector<64x1xf32>
    %16 = arith.divf %14, %15 : vector<64x1xf32>
    %17 = vector.broadcast %9 : vector<64x1xf32> to vector<64x32xf32>
    %18 = arith.subf %1, %17 : vector<64x32xf32>
    %cst_11 = arith.constant 9.99999974E-6 : f32
    %19 = vector.broadcast %cst_11 : f32 to vector<64x1xf32>
    %20 = arith.addf %16, %19 : vector<64x1xf32>
    %21 = math.rsqrt %20 : vector<64x1xf32>
    %22 = vector.broadcast %21 : vector<64x1xf32> to vector<64x32xf32>
    %23 = arith.mulf %18, %22 : vector<64x32xf32>
    %24 = vector.broadcast %4 : vector<1x32xf32> to vector<64x32xf32>
    %25 = arith.mulf %23, %24 : vector<64x32xf32>
    %26 = vector.broadcast %5 : vector<1x32xf32> to vector<64x32xf32>
    %27 = arith.addf %25, %26 : vector<64x32xf32>
    %c2 = arith.constant 2 : index
    %c0_12 = arith.constant 0 : index
    %28 = vector.load %arg3[%c2, %c0_12] : memref<6x32xf32, #tpu.memory_space<vmem>>, vector<1x32xf32>
    %c3 = arith.constant 3 : index
    %c0_13 = arith.constant 0 : index
    %29 = vector.load %arg3[%c3, %c0_13] : memref<6x32xf32, #tpu.memory_space<vmem>>, vector<1x32xf32>
    %cst_14 = arith.constant dense<0.000000e+00> : vector<64xf32>
    %30 = vector.multi_reduction <add>, %3, %cst_14 [1] : vector<64x32xf32> to vector<64xf32>
    %31 = vector.shape_cast %30 : vector<64xf32> to vector<64x1xf32>
    %cst_15 = arith.constant 3.200000e+01 : f32
    %32 = vector.broadcast %cst_15 : f32 to vector<64x1xf32>
    %33 = arith.divf %31, %32 : vector<64x1xf32>
    %34 = vector.broadcast %33 : vector<64x1xf32> to vector<64x32xf32>
    %35 = arith.subf %3, %34 : vector<64x32xf32>
    %36 = arith.mulf %35, %35 : vector<64x32xf32>
    %cst_16 = arith.constant dense<0.000000e+00> : vector<64xf32>
    %37 = vector.multi_reduction <add>, %36, %cst_16 [1] : vector<64x32xf32> to vector<64xf32>
    %38 = vector.shape_cast %37 : vector<64xf32> to vector<64x1xf32>
    %cst_17 = arith.constant 3.200000e+01 : f32
    %39 = vector.broadcast %cst_17 : f32 to vector<64x1xf32>
    %40 = arith.divf %38, %39 : vector<64x1xf32>
    %41 = vector.broadcast %33 : vector<64x1xf32> to vector<64x32xf32>
    %42 = arith.subf %3, %41 : vector<64x32xf32>
    %cst_18 = arith.constant 9.99999974E-6 : f32
    %43 = vector.broadcast %cst_18 : f32 to vector<64x1xf32>
    %44 = arith.addf %40, %43 : vector<64x1xf32>
    %45 = math.rsqrt %44 : vector<64x1xf32>
    %46 = vector.broadcast %45 : vector<64x1xf32> to vector<64x32xf32>
    %47 = arith.mulf %42, %46 : vector<64x32xf32>
    %48 = vector.broadcast %28 : vector<1x32xf32> to vector<64x32xf32>
    %49 = arith.mulf %47, %48 : vector<64x32xf32>
    %50 = vector.broadcast %29 : vector<1x32xf32> to vector<64x32xf32>
    %51 = arith.addf %49, %50 : vector<64x32xf32>
    %c0_19 = arith.constant 0 : index
    %c0_20 = arith.constant 0 : index
    %52 = vector.load %arg4[%c0_19, %c0_20] : memref<32x96xf32, #tpu.memory_space<vmem>>, vector<32x96xf32>
    %cst_21 = arith.constant dense<0.000000e+00> : vector<64x96xf32>
    %53 = tpu.matmul %27, %52, %cst_21 {dimension_numbers = #tpu.dot_dimension_numbers<[1], [0], [0], [1], [0, 0, 1, 1], [], []>} : vector<64x32xf32>, vector<32x96xf32>, vector<64x96xf32> -> vector<64x96xf32>
    %c0_22 = arith.constant 0 : index
    %c0_23 = arith.constant 0 : index
    %54 = vector.load %arg5[%c0_22, %c0_23] : memref<1x96xf32, #tpu.memory_space<vmem>>, vector<1x96xf32>
    %55 = vector.broadcast %54 : vector<1x96xf32> to vector<64x96xf32>
    %56 = arith.addf %53, %55 : vector<64x96xf32>
    %c0_24 = arith.constant 0 : index
    %c0_25 = arith.constant 0 : index
    %57 = vector.load %arg6[%c0_24, %c0_25] : memref<32x64xf32, #tpu.memory_space<vmem>>, vector<32x64xf32>
    %cst_26 = arith.constant dense<0.000000e+00> : vector<64x64xf32>
    %58 = tpu.matmul %51, %57, %cst_26 {dimension_numbers = #tpu.dot_dimension_numbers<[1], [0], [0], [1], [0, 0, 1, 1], [], []>} : vector<64x32xf32>, vector<32x64xf32>, vector<64x64xf32> -> vector<64x64xf32>
    %c0_27 = arith.constant 0 : index
    %c0_28 = arith.constant 0 : index
    %59 = vector.load %arg7[%c0_27, %c0_28] : memref<1x64xf32, #tpu.memory_space<vmem>>, vector<1x64xf32>
    %60 = vector.broadcast %59 : vector<1x64xf32> to vector<64x64xf32>
    %61 = arith.addf %58, %60 : vector<64x64xf32>
    %c4 = arith.constant 4 : index
    %c0_29 = arith.constant 0 : index
    %c0_30 = arith.constant 0 : index
    %62 = vector.load %arg8[%c4, %c0_29, %c0_30] : memref<5x64x64xf32, #tpu.memory_space<vmem>>, vector<1x64x64xf32>
    %63 = vector.shape_cast %62 : vector<1x64x64xf32> to vector<64x64xf32>
    %cst_31 = arith.constant 0.000000e+00 : f32
    %64 = vector.broadcast %cst_31 : f32 to vector<64x32xf32>
    %65 = vector.extract_strided_slice %56 {offsets = [0, 0], sizes = [64, 8], strides = [1, 1]} : vector<64x96xf32> to vector<64x8xf32>
    %cst_32 = arith.constant 0.353553385 : f32
    %66 = vector.broadcast %cst_32 : f32 to vector<64x8xf32>
    %67 = arith.mulf %65, %66 : vector<64x8xf32>
    %68 = vector.extract_strided_slice %56 {offsets = [0, 32], sizes = [64, 8], strides = [1, 1]} : vector<64x96xf32> to vector<64x8xf32>
    %69 = vector.extract_strided_slice %56 {offsets = [0, 64], sizes = [64, 8], strides = [1, 1]} : vector<64x96xf32> to vector<64x8xf32>
    %70 = vector.extract_strided_slice %61 {offsets = [0, 0], sizes = [64, 8], strides = [1, 1]} : vector<64x64xf32> to vector<64x8xf32>
    %cst_33 = arith.constant 0.353553385 : f32
    %71 = vector.broadcast %cst_33 : f32 to vector<64x8xf32>
    %72 = arith.mulf %70, %71 : vector<64x8xf32>
    %73 = vector.extract_strided_slice %61 {offsets = [0, 32], sizes = [64, 8], strides = [1, 1]} : vector<64x64xf32> to vector<64x8xf32>
    %c0_34 = arith.constant 0 : index
    %c0_35 = arith.constant 0 : index
    %c0_36 = arith.constant 0 : index
    %74 = vector.load %arg8[%c0_34, %c0_35, %c0_36] : memref<5x64x64xf32, #tpu.memory_space<vmem>>, vector<1x64x64xf32>
    %75 = vector.shape_cast %74 : vector<1x64x64xf32> to vector<64x64xf32>
    %cst_37 = arith.constant dense<0.000000e+00> : vector<64x64xf32>
    %76 = tpu.matmul %67, %68, %cst_37 {dimension_numbers = #tpu.dot_dimension_numbers<[1], [1], [0], [0], [0, 0, 1, 0], [], []>} : vector<64x8xf32>, vector<64x8xf32>, vector<64x64xf32> -> vector<64x64xf32>
    %77 = arith.addf %76, %75 : vector<64x64xf32>
    %cst_38 = arith.constant dense<0.000000e+00> : vector<64x64xf32>
    %78 = tpu.matmul %72, %73, %cst_38 {dimension_numbers = #tpu.dot_dimension_numbers<[1], [1], [0], [0], [0, 0, 1, 0], [], []>} : vector<64x8xf32>, vector<64x8xf32>, vector<64x64xf32> -> vector<64x64xf32>
    %79 = arith.addf %78, %75 : vector<64x64xf32>
    %80 = arith.mulf %77, %79 : vector<64x64xf32>
    %81 = arith.addf %80, %63 : vector<64x64xf32>
    %cst_39 = arith.constant dense<0xFF800000> : vector<64xf32>
    %82 = vector.multi_reduction <maximumf>, %81, %cst_39 [1] : vector<64x64xf32> to vector<64xf32>
    %83 = vector.shape_cast %82 : vector<64xf32> to vector<64x1xf32>
    %84 = vector.broadcast %83 : vector<64x1xf32> to vector<64x64xf32>
    %85 = arith.subf %81, %84 : vector<64x64xf32>
    %86 = math.exp %85 : vector<64x64xf32>
    %cst_40 = arith.constant dense<0.000000e+00> : vector<64xf32>
    %87 = vector.multi_reduction <add>, %86, %cst_40 [1] : vector<64x64xf32> to vector<64xf32>
    %88 = vector.shape_cast %87 : vector<64xf32> to vector<64x1xf32>
    %89 = tpu.reciprocal %88 {approx = true} : vector<64x1xf32> -> vector<64x1xf32>
    %90 = vector.broadcast %89 : vector<64x1xf32> to vector<64x64xf32>
    %91 = arith.mulf %86, %90 : vector<64x64xf32>
    %cst_41 = arith.constant dense<0.000000e+00> : vector<64x8xf32>
    %92 = tpu.matmul %91, %69, %cst_41 {dimension_numbers = #tpu.dot_dimension_numbers<[1], [0], [0], [1], [0, 0, 1, 1], [], []>} : vector<64x64xf32>, vector<64x8xf32>, vector<64x8xf32> -> vector<64x8xf32>
    %c0_42 = arith.constant 0 : index
    %c0_43 = arith.constant 0 : index
    %93 = vector.load %arg9[%c0_42, %c0_43] : memref<32x32xf32, #tpu.memory_space<vmem>>, vector<8x32xf32>
    %cst_44 = arith.constant dense<0.000000e+00> : vector<64x32xf32>
    %94 = tpu.matmul %92, %93, %cst_44 {dimension_numbers = #tpu.dot_dimension_numbers<[1], [0], [0], [1], [0, 0, 1, 1], [], []>} : vector<64x8xf32>, vector<8x32xf32>, vector<64x32xf32> -> vector<64x32xf32>
    %95 = arith.addf %64, %94 : vector<64x32xf32>
    %96 = vector.extract_strided_slice %56 {offsets = [0, 8], sizes = [64, 8], strides = [1, 1]} : vector<64x96xf32> to vector<64x8xf32>
    %cst_45 = arith.constant 0.353553385 : f32
    %97 = vector.broadcast %cst_45 : f32 to vector<64x8xf32>
    %98 = arith.mulf %96, %97 : vector<64x8xf32>
    %99 = vector.extract_strided_slice %56 {offsets = [0, 40], sizes = [64, 8], strides = [1, 1]} : vector<64x96xf32> to vector<64x8xf32>
    %100 = vector.extract_strided_slice %56 {offsets = [0, 72], sizes = [64, 8], strides = [1, 1]} : vector<64x96xf32> to vector<64x8xf32>
    %101 = vector.extract_strided_slice %61 {offsets = [0, 8], sizes = [64, 8], strides = [1, 1]} : vector<64x64xf32> to vector<64x8xf32>
    %cst_46 = arith.constant 0.353553385 : f32
    %102 = vector.broadcast %cst_46 : f32 to vector<64x8xf32>
    %103 = arith.mulf %101, %102 : vector<64x8xf32>
    %104 = vector.extract_strided_slice %61 {offsets = [0, 40], sizes = [64, 8], strides = [1, 1]} : vector<64x64xf32> to vector<64x8xf32>
    %c1_47 = arith.constant 1 : index
    %c0_48 = arith.constant 0 : index
    %c0_49 = arith.constant 0 : index
    %105 = vector.load %arg8[%c1_47, %c0_48, %c0_49] : memref<5x64x64xf32, #tpu.memory_space<vmem>>, vector<1x64x64xf32>
    %106 = vector.shape_cast %105 : vector<1x64x64xf32> to vector<64x64xf32>
    %cst_50 = arith.constant dense<0.000000e+00> : vector<64x64xf32>
    %107 = tpu.matmul %98, %99, %cst_50 {dimension_numbers = #tpu.dot_dimension_numbers<[1], [1], [0], [0], [0, 0, 1, 0], [], []>} : vector<64x8xf32>, vector<64x8xf32>, vector<64x64xf32> -> vector<64x64xf32>
    %108 = arith.addf %107, %106 : vector<64x64xf32>
    %cst_51 = arith.constant dense<0.000000e+00> : vector<64x64xf32>
    %109 = tpu.matmul %103, %104, %cst_51 {dimension_numbers = #tpu.dot_dimension_numbers<[1], [1], [0], [0], [0, 0, 1, 0], [], []>} : vector<64x8xf32>, vector<64x8xf32>, vector<64x64xf32> -> vector<64x64xf32>
    %110 = arith.addf %109, %106 : vector<64x64xf32>
    %111 = arith.mulf %108, %110 : vector<64x64xf32>
    %112 = arith.addf %111, %63 : vector<64x64xf32>
    %cst_52 = arith.constant dense<0xFF800000> : vector<64xf32>
    %113 = vector.multi_reduction <maximumf>, %112, %cst_52 [1] : vector<64x64xf32> to vector<64xf32>
    %114 = vector.shape_cast %113 : vector<64xf32> to vector<64x1xf32>
    %115 = vector.broadcast %114 : vector<64x1xf32> to vector<64x64xf32>
    %116 = arith.subf %112, %115 : vector<64x64xf32>
    %117 = math.exp %116 : vector<64x64xf32>
    %cst_53 = arith.constant dense<0.000000e+00> : vector<64xf32>
    %118 = vector.multi_reduction <add>, %117, %cst_53 [1] : vector<64x64xf32> to vector<64xf32>
    %119 = vector.shape_cast %118 : vector<64xf32> to vector<64x1xf32>
    %120 = tpu.reciprocal %119 {approx = true} : vector<64x1xf32> -> vector<64x1xf32>
    %121 = vector.broadcast %120 : vector<64x1xf32> to vector<64x64xf32>
    %122 = arith.mulf %117, %121 : vector<64x64xf32>
    %cst_54 = arith.constant dense<0.000000e+00> : vector<64x8xf32>
    %123 = tpu.matmul %122, %100, %cst_54 {dimension_numbers = #tpu.dot_dimension_numbers<[1], [0], [0], [1], [0, 0, 1, 1], [], []>} : vector<64x64xf32>, vector<64x8xf32>, vector<64x8xf32> -> vector<64x8xf32>
    %c8 = arith.constant 8 : index
    %c0_55 = arith.constant 0 : index
    %124 = vector.load %arg9[%c8, %c0_55] : memref<32x32xf32, #tpu.memory_space<vmem>>, vector<8x32xf32>
    %cst_56 = arith.constant dense<0.000000e+00> : vector<64x32xf32>
    %125 = tpu.matmul %123, %124, %cst_56 {dimension_numbers = #tpu.dot_dimension_numbers<[1], [0], [0], [1], [0, 0, 1, 1], [], []>} : vector<64x8xf32>, vector<8x32xf32>, vector<64x32xf32> -> vector<64x32xf32>
    %126 = arith.addf %95, %125 : vector<64x32xf32>
    %127 = vector.extract_strided_slice %56 {offsets = [0, 16], sizes = [64, 8], strides = [1, 1]} : vector<64x96xf32> to vector<64x8xf32>
    %cst_57 = arith.constant 0.353553385 : f32
    %128 = vector.broadcast %cst_57 : f32 to vector<64x8xf32>
    %129 = arith.mulf %127, %128 : vector<64x8xf32>
    %130 = vector.extract_strided_slice %56 {offsets = [0, 48], sizes = [64, 8], strides = [1, 1]} : vector<64x96xf32> to vector<64x8xf32>
    %131 = vector.extract_strided_slice %56 {offsets = [0, 80], sizes = [64, 8], strides = [1, 1]} : vector<64x96xf32> to vector<64x8xf32>
    %132 = vector.extract_strided_slice %61 {offsets = [0, 16], sizes = [64, 8], strides = [1, 1]} : vector<64x64xf32> to vector<64x8xf32>
    %cst_58 = arith.constant 0.353553385 : f32
    %133 = vector.broadcast %cst_58 : f32 to vector<64x8xf32>
    %134 = arith.mulf %132, %133 : vector<64x8xf32>
    %135 = vector.extract_strided_slice %61 {offsets = [0, 48], sizes = [64, 8], strides = [1, 1]} : vector<64x64xf32> to vector<64x8xf32>
    %c2_59 = arith.constant 2 : index
    %c0_60 = arith.constant 0 : index
    %c0_61 = arith.constant 0 : index
    %136 = vector.load %arg8[%c2_59, %c0_60, %c0_61] : memref<5x64x64xf32, #tpu.memory_space<vmem>>, vector<1x64x64xf32>
    %137 = vector.shape_cast %136 : vector<1x64x64xf32> to vector<64x64xf32>
    %cst_62 = arith.constant dense<0.000000e+00> : vector<64x64xf32>
    %138 = tpu.matmul %129, %130, %cst_62 {dimension_numbers = #tpu.dot_dimension_numbers<[1], [1], [0], [0], [0, 0, 1, 0], [], []>} : vector<64x8xf32>, vector<64x8xf32>, vector<64x64xf32> -> vector<64x64xf32>
    %139 = arith.addf %138, %137 : vector<64x64xf32>
    %cst_63 = arith.constant dense<0.000000e+00> : vector<64x64xf32>
    %140 = tpu.matmul %134, %135, %cst_63 {dimension_numbers = #tpu.dot_dimension_numbers<[1], [1], [0], [0], [0, 0, 1, 0], [], []>} : vector<64x8xf32>, vector<64x8xf32>, vector<64x64xf32> -> vector<64x64xf32>
    %141 = arith.addf %140, %137 : vector<64x64xf32>
    %142 = arith.mulf %139, %141 : vector<64x64xf32>
    %143 = arith.addf %142, %63 : vector<64x64xf32>
    %cst_64 = arith.constant dense<0xFF800000> : vector<64xf32>
    %144 = vector.multi_reduction <maximumf>, %143, %cst_64 [1] : vector<64x64xf32> to vector<64xf32>
    %145 = vector.shape_cast %144 : vector<64xf32> to vector<64x1xf32>
    %146 = vector.broadcast %145 : vector<64x1xf32> to vector<64x64xf32>
    %147 = arith.subf %143, %146 : vector<64x64xf32>
    %148 = math.exp %147 : vector<64x64xf32>
    %cst_65 = arith.constant dense<0.000000e+00> : vector<64xf32>
    %149 = vector.multi_reduction <add>, %148, %cst_65 [1] : vector<64x64xf32> to vector<64xf32>
    %150 = vector.shape_cast %149 : vector<64xf32> to vector<64x1xf32>
    %151 = tpu.reciprocal %150 {approx = true} : vector<64x1xf32> -> vector<64x1xf32>
    %152 = vector.broadcast %151 : vector<64x1xf32> to vector<64x64xf32>
    %153 = arith.mulf %148, %152 : vector<64x64xf32>
    %cst_66 = arith.constant dense<0.000000e+00> : vector<64x8xf32>
    %154 = tpu.matmul %153, %131, %cst_66 {dimension_numbers = #tpu.dot_dimension_numbers<[1], [0], [0], [1], [0, 0, 1, 1], [], []>} : vector<64x64xf32>, vector<64x8xf32>, vector<64x8xf32> -> vector<64x8xf32>
    %c16 = arith.constant 16 : index
    %c0_67 = arith.constant 0 : index
    %155 = vector.load %arg9[%c16, %c0_67] : memref<32x32xf32, #tpu.memory_space<vmem>>, vector<8x32xf32>
    %cst_68 = arith.constant dense<0.000000e+00> : vector<64x32xf32>
    %156 = tpu.matmul %154, %155, %cst_68 {dimension_numbers = #tpu.dot_dimension_numbers<[1], [0], [0], [1], [0, 0, 1, 1], [], []>} : vector<64x8xf32>, vector<8x32xf32>, vector<64x32xf32> -> vector<64x32xf32>
    %157 = arith.addf %126, %156 : vector<64x32xf32>
    %158 = vector.extract_strided_slice %56 {offsets = [0, 24], sizes = [64, 8], strides = [1, 1]} : vector<64x96xf32> to vector<64x8xf32>
    %cst_69 = arith.constant 0.353553385 : f32
    %159 = vector.broadcast %cst_69 : f32 to vector<64x8xf32>
    %160 = arith.mulf %158, %159 : vector<64x8xf32>
    %161 = vector.extract_strided_slice %56 {offsets = [0, 56], sizes = [64, 8], strides = [1, 1]} : vector<64x96xf32> to vector<64x8xf32>
    %162 = vector.extract_strided_slice %56 {offsets = [0, 88], sizes = [64, 8], strides = [1, 1]} : vector<64x96xf32> to vector<64x8xf32>
    %163 = vector.extract_strided_slice %61 {offsets = [0, 24], sizes = [64, 8], strides = [1, 1]} : vector<64x64xf32> to vector<64x8xf32>
    %cst_70 = arith.constant 0.353553385 : f32
    %164 = vector.broadcast %cst_70 : f32 to vector<64x8xf32>
    %165 = arith.mulf %163, %164 : vector<64x8xf32>
    %166 = vector.extract_strided_slice %61 {offsets = [0, 56], sizes = [64, 8], strides = [1, 1]} : vector<64x64xf32> to vector<64x8xf32>
    %c3_71 = arith.constant 3 : index
    %c0_72 = arith.constant 0 : index
    %c0_73 = arith.constant 0 : index
    %167 = vector.load %arg8[%c3_71, %c0_72, %c0_73] : memref<5x64x64xf32, #tpu.memory_space<vmem>>, vector<1x64x64xf32>
    %168 = vector.shape_cast %167 : vector<1x64x64xf32> to vector<64x64xf32>
    %cst_74 = arith.constant dense<0.000000e+00> : vector<64x64xf32>
    %169 = tpu.matmul %160, %161, %cst_74 {dimension_numbers = #tpu.dot_dimension_numbers<[1], [1], [0], [0], [0, 0, 1, 0], [], []>} : vector<64x8xf32>, vector<64x8xf32>, vector<64x64xf32> -> vector<64x64xf32>
    %170 = arith.addf %169, %168 : vector<64x64xf32>
    %cst_75 = arith.constant dense<0.000000e+00> : vector<64x64xf32>
    %171 = tpu.matmul %165, %166, %cst_75 {dimension_numbers = #tpu.dot_dimension_numbers<[1], [1], [0], [0], [0, 0, 1, 0], [], []>} : vector<64x8xf32>, vector<64x8xf32>, vector<64x64xf32> -> vector<64x64xf32>
    %172 = arith.addf %171, %168 : vector<64x64xf32>
    %173 = arith.mulf %170, %172 : vector<64x64xf32>
    %174 = arith.addf %173, %63 : vector<64x64xf32>
    %cst_76 = arith.constant dense<0xFF800000> : vector<64xf32>
    %175 = vector.multi_reduction <maximumf>, %174, %cst_76 [1] : vector<64x64xf32> to vector<64xf32>
    %176 = vector.shape_cast %175 : vector<64xf32> to vector<64x1xf32>
    %177 = vector.broadcast %176 : vector<64x1xf32> to vector<64x64xf32>
    %178 = arith.subf %174, %177 : vector<64x64xf32>
    %179 = math.exp %178 : vector<64x64xf32>
    %cst_77 = arith.constant dense<0.000000e+00> : vector<64xf32>
    %180 = vector.multi_reduction <add>, %179, %cst_77 [1] : vector<64x64xf32> to vector<64xf32>
    %181 = vector.shape_cast %180 : vector<64xf32> to vector<64x1xf32>
    %182 = tpu.reciprocal %181 {approx = true} : vector<64x1xf32> -> vector<64x1xf32>
    %183 = vector.broadcast %182 : vector<64x1xf32> to vector<64x64xf32>
    %184 = arith.mulf %179, %183 : vector<64x64xf32>
    %cst_78 = arith.constant dense<0.000000e+00> : vector<64x8xf32>
    %185 = tpu.matmul %184, %162, %cst_78 {dimension_numbers = #tpu.dot_dimension_numbers<[1], [0], [0], [1], [0, 0, 1, 1], [], []>} : vector<64x64xf32>, vector<64x8xf32>, vector<64x8xf32> -> vector<64x8xf32>
    %c24 = arith.constant 24 : index
    %c0_79 = arith.constant 0 : index
    %186 = vector.load %arg9[%c24, %c0_79] : memref<32x32xf32, #tpu.memory_space<vmem>>, vector<8x32xf32>
    %cst_80 = arith.constant dense<0.000000e+00> : vector<64x32xf32>
    %187 = tpu.matmul %185, %186, %cst_80 {dimension_numbers = #tpu.dot_dimension_numbers<[1], [0], [0], [1], [0, 0, 1, 1], [], []>} : vector<64x8xf32>, vector<8x32xf32>, vector<64x32xf32> -> vector<64x32xf32>
    %188 = arith.addf %157, %187 : vector<64x32xf32>
    %189 = arith.addf %1, %188 : vector<64x32xf32>
    %c0_81 = arith.constant 0 : index
    %c0_82 = arith.constant 0 : index
    %190 = vector.load %arg10[%c0_81, %c0_82] : memref<1x32xf32, #tpu.memory_space<vmem>>, vector<1x32xf32>
    %191 = vector.broadcast %190 : vector<1x32xf32> to vector<64x32xf32>
    %192 = arith.addf %189, %191 : vector<64x32xf32>
    %c4_83 = arith.constant 4 : index
    %c0_84 = arith.constant 0 : index
    %193 = vector.load %arg3[%c4_83, %c0_84] : memref<6x32xf32, #tpu.memory_space<vmem>>, vector<1x32xf32>
    %c5 = arith.constant 5 : index
    %c0_85 = arith.constant 0 : index
    %194 = vector.load %arg3[%c5, %c0_85] : memref<6x32xf32, #tpu.memory_space<vmem>>, vector<1x32xf32>
    %cst_86 = arith.constant dense<0.000000e+00> : vector<64xf32>
    %195 = vector.multi_reduction <add>, %192, %cst_86 [1] : vector<64x32xf32> to vector<64xf32>
    %196 = vector.shape_cast %195 : vector<64xf32> to vector<64x1xf32>
    %cst_87 = arith.constant 3.200000e+01 : f32
    %197 = vector.broadcast %cst_87 : f32 to vector<64x1xf32>
    %198 = arith.divf %196, %197 : vector<64x1xf32>
    %199 = vector.broadcast %198 : vector<64x1xf32> to vector<64x32xf32>
    %200 = arith.subf %192, %199 : vector<64x32xf32>
    %201 = arith.mulf %200, %200 : vector<64x32xf32>
    %cst_88 = arith.constant dense<0.000000e+00> : vector<64xf32>
    %202 = vector.multi_reduction <add>, %201, %cst_88 [1] : vector<64x32xf32> to vector<64xf32>
    %203 = vector.shape_cast %202 : vector<64xf32> to vector<64x1xf32>
    %cst_89 = arith.constant 3.200000e+01 : f32
    %204 = vector.broadcast %cst_89 : f32 to vector<64x1xf32>
    %205 = arith.divf %203, %204 : vector<64x1xf32>
    %206 = vector.broadcast %198 : vector<64x1xf32> to vector<64x32xf32>
    %207 = arith.subf %192, %206 : vector<64x32xf32>
    %cst_90 = arith.constant 9.99999974E-6 : f32
    %208 = vector.broadcast %cst_90 : f32 to vector<64x1xf32>
    %209 = arith.addf %205, %208 : vector<64x1xf32>
    %210 = math.rsqrt %209 : vector<64x1xf32>
    %211 = vector.broadcast %210 : vector<64x1xf32> to vector<64x32xf32>
    %212 = arith.mulf %207, %211 : vector<64x32xf32>
    %213 = vector.broadcast %193 : vector<1x32xf32> to vector<64x32xf32>
    %214 = arith.mulf %212, %213 : vector<64x32xf32>
    %215 = vector.broadcast %194 : vector<1x32xf32> to vector<64x32xf32>
    %216 = arith.addf %214, %215 : vector<64x32xf32>
    %c0_91 = arith.constant 0 : index
    %c0_92 = arith.constant 0 : index
    %217 = vector.load %arg11[%c0_91, %c0_92] : memref<32x128xf32, #tpu.memory_space<vmem>>, vector<32x128xf32>
    %cst_93 = arith.constant dense<0.000000e+00> : vector<64x128xf32>
    %218 = tpu.matmul %216, %217, %cst_93 {dimension_numbers = #tpu.dot_dimension_numbers<[1], [0], [0], [1], [0, 0, 1, 1], [], []>} : vector<64x32xf32>, vector<32x128xf32>, vector<64x128xf32> -> vector<64x128xf32>
    %c0_94 = arith.constant 0 : index
    %c0_95 = arith.constant 0 : index
    %219 = vector.load %arg12[%c0_94, %c0_95] : memref<1x128xf32, #tpu.memory_space<vmem>>, vector<1x128xf32>
    %220 = vector.broadcast %219 : vector<1x128xf32> to vector<64x128xf32>
    %221 = arith.addf %218, %220 : vector<64x128xf32>
    %222 = tpu.iota {dimensions = array<i32: 0>} : vector<64x1xi32>
    %c3_i32 = arith.constant 3 : i32
    %223 = vector.broadcast %c3_i32 : i32 to vector<64x1xi32>
    %224 = arith.shrsi %222, %223 : vector<64x1xi32>
    %c7_i32 = arith.constant 7 : i32
    %225 = vector.broadcast %c7_i32 : i32 to vector<64x1xi32>
    %226 = arith.andi %222, %225 : vector<64x1xi32>
    %cst_96 = arith.constant 0.000000e+00 : f32
    %227 = vector.broadcast %cst_96 : f32 to vector<64x128xf32>
    %c0_97 = arith.constant 0 : index
    %c0_98 = arith.constant 0 : index
    %228 = vector.load %arg14[%c0_97, %c0_98] : memref<1x128xf32, #tpu.memory_space<vmem>>, vector<1x128xf32>
    %229 = vector.broadcast %228 : vector<1x128xf32> to vector<64x128xf32>
    %230 = arith.addf %227, %229 : vector<64x128xf32>
    %c9_i32 = arith.constant 9 : i32
    %231 = tpu.dynamic_rotate %221 by %c9_i32 dim 0 : vector<64x128xf32>, i32 -> vector<64x128xf32>
    %c-1_i32 = arith.constant -1 : i32
    %232 = vector.broadcast %c-1_i32 : i32 to vector<64x1xi32>
    %233 = arith.addi %224, %232 : vector<64x1xi32>
    %c0_i32 = arith.constant 0 : i32
    %234 = vector.broadcast %c0_i32 : i32 to vector<64x1xi32>
    %235 = arith.cmpi sge, %233, %234 : vector<64x1xi32>
    %c-1_i32_99 = arith.constant -1 : i32
    %236 = vector.broadcast %c-1_i32_99 : i32 to vector<64x1xi32>
    %237 = arith.addi %224, %236 : vector<64x1xi32>
    %c8_i32 = arith.constant 8 : i32
    %238 = vector.broadcast %c8_i32 : i32 to vector<64x1xi32>
    %239 = arith.cmpi slt, %237, %238 : vector<64x1xi32>
    %240 = arith.andi %235, %239 : vector<64x1xi1>
    %c-1_i32_100 = arith.constant -1 : i32
    %241 = vector.broadcast %c-1_i32_100 : i32 to vector<64x1xi32>
    %242 = arith.addi %226, %241 : vector<64x1xi32>
    %c0_i32_101 = arith.constant 0 : i32
    %243 = vector.broadcast %c0_i32_101 : i32 to vector<64x1xi32>
    %244 = arith.cmpi sge, %242, %243 : vector<64x1xi32>
    %245 = arith.andi %240, %244 : vector<64x1xi1>
    %c-1_i32_102 = arith.constant -1 : i32
    %246 = vector.broadcast %c-1_i32_102 : i32 to vector<64x1xi32>
    %247 = arith.addi %226, %246 : vector<64x1xi32>
    %c8_i32_103 = arith.constant 8 : i32
    %248 = vector.broadcast %c8_i32_103 : i32 to vector<64x1xi32>
    %249 = arith.cmpi slt, %247, %248 : vector<64x1xi32>
    %250 = arith.andi %245, %249 : vector<64x1xi1>
    %251 = arith.extui %250 : vector<64x1xi1> to vector<64x1xi32>
    %252 = arith.sitofp %251 : vector<64x1xi32> to vector<64x1xf32>
    %253 = vector.broadcast %252 : vector<64x1xf32> to vector<64x128xf32>
    %254 = arith.mulf %231, %253 : vector<64x128xf32>
    %c0_104 = arith.constant 0 : index
    %c0_105 = arith.constant 0 : index
    %255 = vector.load %arg13[%c0_104, %c0_105] : memref<9x128xf32, #tpu.memory_space<vmem>>, vector<1x128xf32>
    %256 = vector.broadcast %255 : vector<1x128xf32> to vector<64x128xf32>
    %257 = arith.mulf %254, %256 : vector<64x128xf32>
    %258 = arith.addf %230, %257 : vector<64x128xf32>
    %c8_i32_106 = arith.constant 8 : i32
    %259 = tpu.dynamic_rotate %221 by %c8_i32_106 dim 0 : vector<64x128xf32>, i32 -> vector<64x128xf32>
    %c-1_i32_107 = arith.constant -1 : i32
    %260 = vector.broadcast %c-1_i32_107 : i32 to vector<64x1xi32>
    %261 = arith.addi %224, %260 : vector<64x1xi32>
    %c0_i32_108 = arith.constant 0 : i32
    %262 = vector.broadcast %c0_i32_108 : i32 to vector<64x1xi32>
    %263 = arith.cmpi sge, %261, %262 : vector<64x1xi32>
    %c-1_i32_109 = arith.constant -1 : i32
    %264 = vector.broadcast %c-1_i32_109 : i32 to vector<64x1xi32>
    %265 = arith.addi %224, %264 : vector<64x1xi32>
    %c8_i32_110 = arith.constant 8 : i32
    %266 = vector.broadcast %c8_i32_110 : i32 to vector<64x1xi32>
    %267 = arith.cmpi slt, %265, %266 : vector<64x1xi32>
    %268 = arith.andi %263, %267 : vector<64x1xi1>
    %c0_i32_111 = arith.constant 0 : i32
    %269 = vector.broadcast %c0_i32_111 : i32 to vector<64x1xi32>
    %270 = arith.addi %226, %269 : vector<64x1xi32>
    %c0_i32_112 = arith.constant 0 : i32
    %271 = vector.broadcast %c0_i32_112 : i32 to vector<64x1xi32>
    %272 = arith.cmpi sge, %270, %271 : vector<64x1xi32>
    %273 = arith.andi %268, %272 : vector<64x1xi1>
    %c0_i32_113 = arith.constant 0 : i32
    %274 = vector.broadcast %c0_i32_113 : i32 to vector<64x1xi32>
    %275 = arith.addi %226, %274 : vector<64x1xi32>
    %c8_i32_114 = arith.constant 8 : i32
    %276 = vector.broadcast %c8_i32_114 : i32 to vector<64x1xi32>
    %277 = arith.cmpi slt, %275, %276 : vector<64x1xi32>
    %278 = arith.andi %273, %277 : vector<64x1xi1>
    %279 = arith.extui %278 : vector<64x1xi1> to vector<64x1xi32>
    %280 = arith.sitofp %279 : vector<64x1xi32> to vector<64x1xf32>
    %281 = vector.broadcast %280 : vector<64x1xf32> to vector<64x128xf32>
    %282 = arith.mulf %259, %281 : vector<64x128xf32>
    %c1_115 = arith.constant 1 : index
    %c0_116 = arith.constant 0 : index
    %283 = vector.load %arg13[%c1_115, %c0_116] : memref<9x128xf32, #tpu.memory_space<vmem>>, vector<1x128xf32>
    %284 = vector.broadcast %283 : vector<1x128xf32> to vector<64x128xf32>
    %285 = arith.mulf %282, %284 : vector<64x128xf32>
    %286 = arith.addf %258, %285 : vector<64x128xf32>
    %c7_i32_117 = arith.constant 7 : i32
    %287 = tpu.dynamic_rotate %221 by %c7_i32_117 dim 0 : vector<64x128xf32>, i32 -> vector<64x128xf32>
    %c-1_i32_118 = arith.constant -1 : i32
    %288 = vector.broadcast %c-1_i32_118 : i32 to vector<64x1xi32>
    %289 = arith.addi %224, %288 : vector<64x1xi32>
    %c0_i32_119 = arith.constant 0 : i32
    %290 = vector.broadcast %c0_i32_119 : i32 to vector<64x1xi32>
    %291 = arith.cmpi sge, %289, %290 : vector<64x1xi32>
    %c-1_i32_120 = arith.constant -1 : i32
    %292 = vector.broadcast %c-1_i32_120 : i32 to vector<64x1xi32>
    %293 = arith.addi %224, %292 : vector<64x1xi32>
    %c8_i32_121 = arith.constant 8 : i32
    %294 = vector.broadcast %c8_i32_121 : i32 to vector<64x1xi32>
    %295 = arith.cmpi slt, %293, %294 : vector<64x1xi32>
    %296 = arith.andi %291, %295 : vector<64x1xi1>
    %c1_i32 = arith.constant 1 : i32
    %297 = vector.broadcast %c1_i32 : i32 to vector<64x1xi32>
    %298 = arith.addi %226, %297 : vector<64x1xi32>
    %c0_i32_122 = arith.constant 0 : i32
    %299 = vector.broadcast %c0_i32_122 : i32 to vector<64x1xi32>
    %300 = arith.cmpi sge, %298, %299 : vector<64x1xi32>
    %301 = arith.andi %296, %300 : vector<64x1xi1>
    %c1_i32_123 = arith.constant 1 : i32
    %302 = vector.broadcast %c1_i32_123 : i32 to vector<64x1xi32>
    %303 = arith.addi %226, %302 : vector<64x1xi32>
    %c8_i32_124 = arith.constant 8 : i32
    %304 = vector.broadcast %c8_i32_124 : i32 to vector<64x1xi32>
    %305 = arith.cmpi slt, %303, %304 : vector<64x1xi32>
    %306 = arith.andi %301, %305 : vector<64x1xi1>
    %307 = arith.extui %306 : vector<64x1xi1> to vector<64x1xi32>
    %308 = arith.sitofp %307 : vector<64x1xi32> to vector<64x1xf32>
    %309 = vector.broadcast %308 : vector<64x1xf32> to vector<64x128xf32>
    %310 = arith.mulf %287, %309 : vector<64x128xf32>
    %c2_125 = arith.constant 2 : index
    %c0_126 = arith.constant 0 : index
    %311 = vector.load %arg13[%c2_125, %c0_126] : memref<9x128xf32, #tpu.memory_space<vmem>>, vector<1x128xf32>
    %312 = vector.broadcast %311 : vector<1x128xf32> to vector<64x128xf32>
    %313 = arith.mulf %310, %312 : vector<64x128xf32>
    %314 = arith.addf %286, %313 : vector<64x128xf32>
    %c1_i32_127 = arith.constant 1 : i32
    %315 = tpu.dynamic_rotate %221 by %c1_i32_127 dim 0 : vector<64x128xf32>, i32 -> vector<64x128xf32>
    %c0_i32_128 = arith.constant 0 : i32
    %316 = vector.broadcast %c0_i32_128 : i32 to vector<64x1xi32>
    %317 = arith.addi %224, %316 : vector<64x1xi32>
    %c0_i32_129 = arith.constant 0 : i32
    %318 = vector.broadcast %c0_i32_129 : i32 to vector<64x1xi32>
    %319 = arith.cmpi sge, %317, %318 : vector<64x1xi32>
    %c0_i32_130 = arith.constant 0 : i32
    %320 = vector.broadcast %c0_i32_130 : i32 to vector<64x1xi32>
    %321 = arith.addi %224, %320 : vector<64x1xi32>
    %c8_i32_131 = arith.constant 8 : i32
    %322 = vector.broadcast %c8_i32_131 : i32 to vector<64x1xi32>
    %323 = arith.cmpi slt, %321, %322 : vector<64x1xi32>
    %324 = arith.andi %319, %323 : vector<64x1xi1>
    %c-1_i32_132 = arith.constant -1 : i32
    %325 = vector.broadcast %c-1_i32_132 : i32 to vector<64x1xi32>
    %326 = arith.addi %226, %325 : vector<64x1xi32>
    %c0_i32_133 = arith.constant 0 : i32
    %327 = vector.broadcast %c0_i32_133 : i32 to vector<64x1xi32>
    %328 = arith.cmpi sge, %326, %327 : vector<64x1xi32>
    %329 = arith.andi %324, %328 : vector<64x1xi1>
    %c-1_i32_134 = arith.constant -1 : i32
    %330 = vector.broadcast %c-1_i32_134 : i32 to vector<64x1xi32>
    %331 = arith.addi %226, %330 : vector<64x1xi32>
    %c8_i32_135 = arith.constant 8 : i32
    %332 = vector.broadcast %c8_i32_135 : i32 to vector<64x1xi32>
    %333 = arith.cmpi slt, %331, %332 : vector<64x1xi32>
    %334 = arith.andi %329, %333 : vector<64x1xi1>
    %335 = arith.extui %334 : vector<64x1xi1> to vector<64x1xi32>
    %336 = arith.sitofp %335 : vector<64x1xi32> to vector<64x1xf32>
    %337 = vector.broadcast %336 : vector<64x1xf32> to vector<64x128xf32>
    %338 = arith.mulf %315, %337 : vector<64x128xf32>
    %c3_136 = arith.constant 3 : index
    %c0_137 = arith.constant 0 : index
    %339 = vector.load %arg13[%c3_136, %c0_137] : memref<9x128xf32, #tpu.memory_space<vmem>>, vector<1x128xf32>
    %340 = vector.broadcast %339 : vector<1x128xf32> to vector<64x128xf32>
    %341 = arith.mulf %338, %340 : vector<64x128xf32>
    %342 = arith.addf %314, %341 : vector<64x128xf32>
    %c0_i32_138 = arith.constant 0 : i32
    %343 = vector.broadcast %c0_i32_138 : i32 to vector<64x1xi32>
    %344 = arith.addi %224, %343 : vector<64x1xi32>
    %c0_i32_139 = arith.constant 0 : i32
    %345 = vector.broadcast %c0_i32_139 : i32 to vector<64x1xi32>
    %346 = arith.cmpi sge, %344, %345 : vector<64x1xi32>
    %c0_i32_140 = arith.constant 0 : i32
    %347 = vector.broadcast %c0_i32_140 : i32 to vector<64x1xi32>
    %348 = arith.addi %224, %347 : vector<64x1xi32>
    %c8_i32_141 = arith.constant 8 : i32
    %349 = vector.broadcast %c8_i32_141 : i32 to vector<64x1xi32>
    %350 = arith.cmpi slt, %348, %349 : vector<64x1xi32>
    %351 = arith.andi %346, %350 : vector<64x1xi1>
    %c0_i32_142 = arith.constant 0 : i32
    %352 = vector.broadcast %c0_i32_142 : i32 to vector<64x1xi32>
    %353 = arith.addi %226, %352 : vector<64x1xi32>
    %c0_i32_143 = arith.constant 0 : i32
    %354 = vector.broadcast %c0_i32_143 : i32 to vector<64x1xi32>
    %355 = arith.cmpi sge, %353, %354 : vector<64x1xi32>
    %356 = arith.andi %351, %355 : vector<64x1xi1>
    %c0_i32_144 = arith.constant 0 : i32
    %357 = vector.broadcast %c0_i32_144 : i32 to vector<64x1xi32>
    %358 = arith.addi %226, %357 : vector<64x1xi32>
    %c8_i32_145 = arith.constant 8 : i32
    %359 = vector.broadcast %c8_i32_145 : i32 to vector<64x1xi32>
    %360 = arith.cmpi slt, %358, %359 : vector<64x1xi32>
    %361 = arith.andi %356, %360 : vector<64x1xi1>
    %362 = arith.extui %361 : vector<64x1xi1> to vector<64x1xi32>
    %363 = arith.sitofp %362 : vector<64x1xi32> to vector<64x1xf32>
    %364 = vector.broadcast %363 : vector<64x1xf32> to vector<64x128xf32>
    %365 = arith.mulf %221, %364 : vector<64x128xf32>
    %c4_146 = arith.constant 4 : index
    %c0_147 = arith.constant 0 : index
    %366 = vector.load %arg13[%c4_146, %c0_147] : memref<9x128xf32, #tpu.memory_space<vmem>>, vector<1x128xf32>
    %367 = vector.broadcast %366 : vector<1x128xf32> to vector<64x128xf32>
    %368 = arith.mulf %365, %367 : vector<64x128xf32>
    %369 = arith.addf %342, %368 : vector<64x128xf32>
    %c63_i32 = arith.constant 63 : i32
    %370 = tpu.dynamic_rotate %221 by %c63_i32 dim 0 : vector<64x128xf32>, i32 -> vector<64x128xf32>
    %c0_i32_148 = arith.constant 0 : i32
    %371 = vector.broadcast %c0_i32_148 : i32 to vector<64x1xi32>
    %372 = arith.addi %224, %371 : vector<64x1xi32>
    %c0_i32_149 = arith.constant 0 : i32
    %373 = vector.broadcast %c0_i32_149 : i32 to vector<64x1xi32>
    %374 = arith.cmpi sge, %372, %373 : vector<64x1xi32>
    %c0_i32_150 = arith.constant 0 : i32
    %375 = vector.broadcast %c0_i32_150 : i32 to vector<64x1xi32>
    %376 = arith.addi %224, %375 : vector<64x1xi32>
    %c8_i32_151 = arith.constant 8 : i32
    %377 = vector.broadcast %c8_i32_151 : i32 to vector<64x1xi32>
    %378 = arith.cmpi slt, %376, %377 : vector<64x1xi32>
    %379 = arith.andi %374, %378 : vector<64x1xi1>
    %c1_i32_152 = arith.constant 1 : i32
    %380 = vector.broadcast %c1_i32_152 : i32 to vector<64x1xi32>
    %381 = arith.addi %226, %380 : vector<64x1xi32>
    %c0_i32_153 = arith.constant 0 : i32
    %382 = vector.broadcast %c0_i32_153 : i32 to vector<64x1xi32>
    %383 = arith.cmpi sge, %381, %382 : vector<64x1xi32>
    %384 = arith.andi %379, %383 : vector<64x1xi1>
    %c1_i32_154 = arith.constant 1 : i32
    %385 = vector.broadcast %c1_i32_154 : i32 to vector<64x1xi32>
    %386 = arith.addi %226, %385 : vector<64x1xi32>
    %c8_i32_155 = arith.constant 8 : i32
    %387 = vector.broadcast %c8_i32_155 : i32 to vector<64x1xi32>
    %388 = arith.cmpi slt, %386, %387 : vector<64x1xi32>
    %389 = arith.andi %384, %388 : vector<64x1xi1>
    %390 = arith.extui %389 : vector<64x1xi1> to vector<64x1xi32>
    %391 = arith.sitofp %390 : vector<64x1xi32> to vector<64x1xf32>
    %392 = vector.broadcast %391 : vector<64x1xf32> to vector<64x128xf32>
    %393 = arith.mulf %370, %392 : vector<64x128xf32>
    %c5_156 = arith.constant 5 : index
    %c0_157 = arith.constant 0 : index
    %394 = vector.load %arg13[%c5_156, %c0_157] : memref<9x128xf32, #tpu.memory_space<vmem>>, vector<1x128xf32>
    %395 = vector.broadcast %394 : vector<1x128xf32> to vector<64x128xf32>
    %396 = arith.mulf %393, %395 : vector<64x128xf32>
    %397 = arith.addf %369, %396 : vector<64x128xf32>
    %c57_i32 = arith.constant 57 : i32
    %398 = tpu.dynamic_rotate %221 by %c57_i32 dim 0 : vector<64x128xf32>, i32 -> vector<64x128xf32>
    %c1_i32_158 = arith.constant 1 : i32
    %399 = vector.broadcast %c1_i32_158 : i32 to vector<64x1xi32>
    %400 = arith.addi %224, %399 : vector<64x1xi32>
    %c0_i32_159 = arith.constant 0 : i32
    %401 = vector.broadcast %c0_i32_159 : i32 to vector<64x1xi32>
    %402 = arith.cmpi sge, %400, %401 : vector<64x1xi32>
    %c1_i32_160 = arith.constant 1 : i32
    %403 = vector.broadcast %c1_i32_160 : i32 to vector<64x1xi32>
    %404 = arith.addi %224, %403 : vector<64x1xi32>
    %c8_i32_161 = arith.constant 8 : i32
    %405 = vector.broadcast %c8_i32_161 : i32 to vector<64x1xi32>
    %406 = arith.cmpi slt, %404, %405 : vector<64x1xi32>
    %407 = arith.andi %402, %406 : vector<64x1xi1>
    %c-1_i32_162 = arith.constant -1 : i32
    %408 = vector.broadcast %c-1_i32_162 : i32 to vector<64x1xi32>
    %409 = arith.addi %226, %408 : vector<64x1xi32>
    %c0_i32_163 = arith.constant 0 : i32
    %410 = vector.broadcast %c0_i32_163 : i32 to vector<64x1xi32>
    %411 = arith.cmpi sge, %409, %410 : vector<64x1xi32>
    %412 = arith.andi %407, %411 : vector<64x1xi1>
    %c-1_i32_164 = arith.constant -1 : i32
    %413 = vector.broadcast %c-1_i32_164 : i32 to vector<64x1xi32>
    %414 = arith.addi %226, %413 : vector<64x1xi32>
    %c8_i32_165 = arith.constant 8 : i32
    %415 = vector.broadcast %c8_i32_165 : i32 to vector<64x1xi32>
    %416 = arith.cmpi slt, %414, %415 : vector<64x1xi32>
    %417 = arith.andi %412, %416 : vector<64x1xi1>
    %418 = arith.extui %417 : vector<64x1xi1> to vector<64x1xi32>
    %419 = arith.sitofp %418 : vector<64x1xi32> to vector<64x1xf32>
    %420 = vector.broadcast %419 : vector<64x1xf32> to vector<64x128xf32>
    %421 = arith.mulf %398, %420 : vector<64x128xf32>
    %c6 = arith.constant 6 : index
    %c0_166 = arith.constant 0 : index
    %422 = vector.load %arg13[%c6, %c0_166] : memref<9x128xf32, #tpu.memory_space<vmem>>, vector<1x128xf32>
    %423 = vector.broadcast %422 : vector<1x128xf32> to vector<64x128xf32>
    %424 = arith.mulf %421, %423 : vector<64x128xf32>
    %425 = arith.addf %397, %424 : vector<64x128xf32>
    %c56_i32 = arith.constant 56 : i32
    %426 = tpu.dynamic_rotate %221 by %c56_i32 dim 0 : vector<64x128xf32>, i32 -> vector<64x128xf32>
    %c1_i32_167 = arith.constant 1 : i32
    %427 = vector.broadcast %c1_i32_167 : i32 to vector<64x1xi32>
    %428 = arith.addi %224, %427 : vector<64x1xi32>
    %c0_i32_168 = arith.constant 0 : i32
    %429 = vector.broadcast %c0_i32_168 : i32 to vector<64x1xi32>
    %430 = arith.cmpi sge, %428, %429 : vector<64x1xi32>
    %c1_i32_169 = arith.constant 1 : i32
    %431 = vector.broadcast %c1_i32_169 : i32 to vector<64x1xi32>
    %432 = arith.addi %224, %431 : vector<64x1xi32>
    %c8_i32_170 = arith.constant 8 : i32
    %433 = vector.broadcast %c8_i32_170 : i32 to vector<64x1xi32>
    %434 = arith.cmpi slt, %432, %433 : vector<64x1xi32>
    %435 = arith.andi %430, %434 : vector<64x1xi1>
    %c0_i32_171 = arith.constant 0 : i32
    %436 = vector.broadcast %c0_i32_171 : i32 to vector<64x1xi32>
    %437 = arith.addi %226, %436 : vector<64x1xi32>
    %c0_i32_172 = arith.constant 0 : i32
    %438 = vector.broadcast %c0_i32_172 : i32 to vector<64x1xi32>
    %439 = arith.cmpi sge, %437, %438 : vector<64x1xi32>
    %440 = arith.andi %435, %439 : vector<64x1xi1>
    %c0_i32_173 = arith.constant 0 : i32
    %441 = vector.broadcast %c0_i32_173 : i32 to vector<64x1xi32>
    %442 = arith.addi %226, %441 : vector<64x1xi32>
    %c8_i32_174 = arith.constant 8 : i32
    %443 = vector.broadcast %c8_i32_174 : i32 to vector<64x1xi32>
    %444 = arith.cmpi slt, %442, %443 : vector<64x1xi32>
    %445 = arith.andi %440, %444 : vector<64x1xi1>
    %446 = arith.extui %445 : vector<64x1xi1> to vector<64x1xi32>
    %447 = arith.sitofp %446 : vector<64x1xi32> to vector<64x1xf32>
    %448 = vector.broadcast %447 : vector<64x1xf32> to vector<64x128xf32>
    %449 = arith.mulf %426, %448 : vector<64x128xf32>
    %c7 = arith.constant 7 : index
    %c0_175 = arith.constant 0 : index
    %450 = vector.load %arg13[%c7, %c0_175] : memref<9x128xf32, #tpu.memory_space<vmem>>, vector<1x128xf32>
    %451 = vector.broadcast %450 : vector<1x128xf32> to vector<64x128xf32>
    %452 = arith.mulf %449, %451 : vector<64x128xf32>
    %453 = arith.addf %425, %452 : vector<64x128xf32>
    %c55_i32 = arith.constant 55 : i32
    %454 = tpu.dynamic_rotate %221 by %c55_i32 dim 0 : vector<64x128xf32>, i32 -> vector<64x128xf32>
    %c1_i32_176 = arith.constant 1 : i32
    %455 = vector.broadcast %c1_i32_176 : i32 to vector<64x1xi32>
    %456 = arith.addi %224, %455 : vector<64x1xi32>
    %c0_i32_177 = arith.constant 0 : i32
    %457 = vector.broadcast %c0_i32_177 : i32 to vector<64x1xi32>
    %458 = arith.cmpi sge, %456, %457 : vector<64x1xi32>
    %c1_i32_178 = arith.constant 1 : i32
    %459 = vector.broadcast %c1_i32_178 : i32 to vector<64x1xi32>
    %460 = arith.addi %224, %459 : vector<64x1xi32>
    %c8_i32_179 = arith.constant 8 : i32
    %461 = vector.broadcast %c8_i32_179 : i32 to vector<64x1xi32>
    %462 = arith.cmpi slt, %460, %461 : vector<64x1xi32>
    %463 = arith.andi %458, %462 : vector<64x1xi1>
    %c1_i32_180 = arith.constant 1 : i32
    %464 = vector.broadcast %c1_i32_180 : i32 to vector<64x1xi32>
    %465 = arith.addi %226, %464 : vector<64x1xi32>
    %c0_i32_181 = arith.constant 0 : i32
    %466 = vector.broadcast %c0_i32_181 : i32 to vector<64x1xi32>
    %467 = arith.cmpi sge, %465, %466 : vector<64x1xi32>
    %468 = arith.andi %463, %467 : vector<64x1xi1>
    %c1_i32_182 = arith.constant 1 : i32
    %469 = vector.broadcast %c1_i32_182 : i32 to vector<64x1xi32>
    %470 = arith.addi %226, %469 : vector<64x1xi32>
    %c8_i32_183 = arith.constant 8 : i32
    %471 = vector.broadcast %c8_i32_183 : i32 to vector<64x1xi32>
    %472 = arith.cmpi slt, %470, %471 : vector<64x1xi32>
    %473 = arith.andi %468, %472 : vector<64x1xi1>
    %474 = arith.extui %473 : vector<64x1xi1> to vector<64x1xi32>
    %475 = arith.sitofp %474 : vector<64x1xi32> to vector<64x1xf32>
    %476 = vector.broadcast %475 : vector<64x1xf32> to vector<64x128xf32>
    %477 = arith.mulf %454, %476 : vector<64x128xf32>
    %c8_184 = arith.constant 8 : index
    %c0_185 = arith.constant 0 : index
    %478 = vector.load %arg13[%c8_184, %c0_185] : memref<9x128xf32, #tpu.memory_space<vmem>>, vector<1x128xf32>
    %479 = vector.broadcast %478 : vector<1x128xf32> to vector<64x128xf32>
    %480 = arith.mulf %477, %479 : vector<64x128xf32>
    %481 = arith.addf %453, %480 : vector<64x128xf32>
    %cst_186 = arith.constant 0.000000e+00 : f32
    %482 = vector.broadcast %cst_186 : f32 to vector<64x128xf32>
    %483 = arith.maximumf %481, %482 : vector<64x128xf32>
    %c0_187 = arith.constant 0 : index
    %c0_188 = arith.constant 0 : index
    %484 = vector.load %arg15[%c0_187, %c0_188] : memref<128x32xf32, #tpu.memory_space<vmem>>, vector<128x32xf32>
    %cst_189 = arith.constant dense<0.000000e+00> : vector<64x32xf32>
    %485 = tpu.matmul %483, %484, %cst_189 {dimension_numbers = #tpu.dot_dimension_numbers<[1], [0], [0], [1], [0, 0, 1, 1], [], []>} : vector<64x128xf32>, vector<128x32xf32>, vector<64x32xf32> -> vector<64x32xf32>
    %c0_190 = arith.constant 0 : index
    %c0_191 = arith.constant 0 : index
    %486 = vector.load %arg16[%c0_190, %c0_191] : memref<1x32xf32, #tpu.memory_space<vmem>>, vector<1x32xf32>
    %487 = vector.broadcast %486 : vector<1x32xf32> to vector<64x32xf32>
    %488 = arith.addf %485, %487 : vector<64x32xf32>
    %489 = arith.addf %192, %488 : vector<64x32xf32>
    %c0_192 = arith.constant 0 : index
    %c0_193 = arith.constant 0 : index
    %c0_194 = arith.constant 0 : index
    %490 = vector.load %arg17[%c0_192, %c0_193, %c0_194] : memref<1x64x32xf32, #tpu.memory_space<vmem>>, vector<1x64x32xf32>
    %491 = vector.shape_cast %490 : vector<1x64x32xf32> to vector<64x32xf32>
    %492 = vector.shape_cast %489 : vector<64x32xf32> to vector<1x64x32xf32>
    tpu.vector_store %arg17[%c0_192, %c0_193, %c0_194], %492 {strides = array<i32>} : memref<1x64x32xf32, #tpu.memory_space<vmem>>, vector<1x64x32xf32>,
    return
  }
  func.func @transform_0(%arg0: i32) -> (i32, i32, i32) {
    %c0_i32 = arith.constant 0 : i32
    %c0_i32_0 = arith.constant 0 : i32
    %c0_i32_1 = arith.constant 0 : i32
    return %arg0, %c0_i32, %c0_i32_0 : i32, i32, i32
  }
  func.func @transform_1(%arg0: i32) -> (i32, i32, i32) {
    %c0_i32 = arith.constant 0 : i32
    %c0_i32_0 = arith.constant 0 : i32
    %c0_i32_1 = arith.constant 0 : i32
    return %arg0, %c0_i32, %c0_i32_0 : i32, i32, i32
  }
  func.func @transform_2(%arg0: i32) -> (i32, i32) {
    %c0_i32 = arith.constant 0 : i32
    %c0_i32_0 = arith.constant 0 : i32
    %c0_i32_1 = arith.constant 0 : i32
    return %c0_i32, %c0_i32_0 : i32, i32
  }
  func.func @transform_3(%arg0: i32) -> (i32, i32) {
    %c0_i32 = arith.constant 0 : i32
    %c0_i32_0 = arith.constant 0 : i32
    %c0_i32_1 = arith.constant 0 : i32
    return %c0_i32, %c0_i32_0 : i32, i32
  }
  func.func @transform_4(%arg0: i32) -> (i32, i32) {
    %c0_i32 = arith.constant 0 : i32
    %c0_i32_0 = arith.constant 0 : i32
    %c0_i32_1 = arith.constant 0 : i32
    return %c0_i32, %c0_i32_0 : i32, i32
  }
  func.func @transform_5(%arg0: i32) -> (i32, i32) {
    %c0_i32 = arith.constant 0 : i32
    %c0_i32_0 = arith.constant 0 : i32
    %c0_i32_1 = arith.constant 0 : i32
    return %c0_i32, %c0_i32_0 : i32, i32
  }
  func.func @transform_6(%arg0: i32) -> (i32, i32) {
    %c0_i32 = arith.constant 0 : i32
    %c0_i32_0 = arith.constant 0 : i32
    %c0_i32_1 = arith.constant 0 : i32
    return %c0_i32, %c0_i32_0 : i32, i32
  }
  func.func @transform_7(%arg0: i32) -> (i32, i32, i32) {
    %c0_i32 = arith.constant 0 : i32
    %c0_i32_0 = arith.constant 0 : i32
    %c0_i32_1 = arith.constant 0 : i32
    %c0_i32_2 = arith.constant 0 : i32
    return %c0_i32, %c0_i32_0, %c0_i32_1 : i32, i32, i32
  }
  func.func @transform_8(%arg0: i32) -> (i32, i32) {
    %c0_i32 = arith.constant 0 : i32
    %c0_i32_0 = arith.constant 0 : i32
    %c0_i32_1 = arith.constant 0 : i32
    return %c0_i32, %c0_i32_0 : i32, i32
  }
  func.func @transform_9(%arg0: i32) -> (i32, i32) {
    %c0_i32 = arith.constant 0 : i32
    %c0_i32_0 = arith.constant 0 : i32
    %c0_i32_1 = arith.constant 0 : i32
    return %c0_i32, %c0_i32_0 : i32, i32
  }
  func.func @transform_10(%arg0: i32) -> (i32, i32) {
    %c0_i32 = arith.constant 0 : i32
    %c0_i32_0 = arith.constant 0 : i32
    %c0_i32_1 = arith.constant 0 : i32
    return %c0_i32, %c0_i32_0 : i32, i32
  }
  func.func @transform_11(%arg0: i32) -> (i32, i32) {
    %c0_i32 = arith.constant 0 : i32
    %c0_i32_0 = arith.constant 0 : i32
    %c0_i32_1 = arith.constant 0 : i32
    return %c0_i32, %c0_i32_0 : i32, i32
  }
  func.func @transform_12(%arg0: i32) -> (i32, i32) {
    %c0_i32 = arith.constant 0 : i32
    %c0_i32_0 = arith.constant 0 : i32
    %c0_i32_1 = arith.constant 0 : i32
    return %c0_i32, %c0_i32_0 : i32, i32
  }
  func.func @transform_13(%arg0: i32) -> (i32, i32) {
    %c0_i32 = arith.constant 0 : i32
    %c0_i32_0 = arith.constant 0 : i32
    %c0_i32_1 = arith.constant 0 : i32
    return %c0_i32, %c0_i32_0 : i32, i32
  }
  func.func @transform_14(%arg0: i32) -> (i32, i32) {
    %c0_i32 = arith.constant 0 : i32
    %c0_i32_0 = arith.constant 0 : i32
    %c0_i32_1 = arith.constant 0 : i32
    return %c0_i32, %c0_i32_0 : i32, i32
  }
  func.func @transform_15(%arg0: i32) -> (i32, i32) {
    %c0_i32 = arith.constant 0 : i32
    %c0_i32_0 = arith.constant 0 : i32
    %c0_i32_1 = arith.constant 0 : i32
    return %c0_i32, %c0_i32_0 : i32, i32
  }
  func.func @transform_16(%arg0: i32) -> (i32, i32, i32) {
    %c0_i32 = arith.constant 0 : i32
    %c0_i32_0 = arith.constant 0 : i32
    %c0_i32_1 = arith.constant 0 : i32
    return %arg0, %c0_i32, %c0_i32_0 : i32, i32, i32
  }
}

</mosaic_0001>

<llo_original>
// kernel: sub.23
$region0: #{sub.23}
  %s0 = inlined_call_operand.vmem [shape: s32[8,8], index: 0, kind: input, shape index: {}]
  %s1 = inlined_call_operand.vmem [shape: s32[64], index: 1, kind: output, shape index: {}]
  $region1: #{sub.23} parent=0
    #allocation0 [shape = 'u8[4096]{0}', space=vmem, size = 0x1000, scoped, tag = 'scoped mem for output reshape']
    %v2 = vld [vmem:[%s0] sm:$0x1]
    %vm3 = vcmask 64512
    %4 = vst.msk [vmem:[#allocation0] sm:$0x1] %vm3, %v2
    %s5 = scalar_lea.vmem %s0, 7
    %v6 = vld [vmem:[%s5] sm:$0x1]
    %7 = vrot.lane.b32.xlu0 %v6, 56
    %v8 = vpop.permute.xlu0 %7
    %vm9 = vcmask 523712
    %10 = vst.msk [vmem:[#allocation0] sm:$0x1] %vm9, %v8
    %s11 = scalar_lea.vmem %s0, 6
    %v12 = vld [vmem:[%s11] sm:$0x1]
    %13 = vrot.lane.b32.xlu0 %v12, 48
    %v14 = vpop.permute.xlu0 %13
    %vm15 = vcmask 458112
    %16 = vst.msk [vmem:[#allocation0] sm:$0x1] %vm15, %v14
    %s17 = scalar_lea.vmem %s0, 5
    %v18 = vld [vmem:[%s17] sm:$0x1]
    %19 = vrot.lane.b32.xlu0 %v18, 40
    %v20 = vpop.permute.xlu0 %19
    %vm21 = vcmask 392512
    %22 = vst.msk [vmem:[#allocation0] sm:$0x1] %vm21, %v20
    %s23 = scalar_lea.vmem %s0, 4
    %v24 = vld [vmem:[%s23] sm:$0x1]
    %25 = vrot.lane.b32.xlu0 %v24, 32
    %v26 = vpop.permute.xlu0 %25
    %vm27 = vcmask 326912
    %28 = vst.msk [vmem:[#allocation0] sm:$0x1] %vm27, %v26
    %s29 = scalar_lea.vmem %s0, 3
    %v30 = vld [vmem:[%s29] sm:$0x1]
    %31 = vrot.lane.b32.xlu0 %v30, 24
    %v32 = vpop.permute.xlu0 %31
    %vm33 = vcmask 261312
    %34 = vst.msk [vmem:[#allocation0] sm:$0x1] %vm33, %v32
    %s35 = scalar_lea.vmem %s0, 2
    %v36 = vld [vmem:[%s35] sm:$0x1]
    %37 = vrot.lane.b32.xlu0 %v36, 16
    %v38 = vpop.permute.xlu0 %37
    %vm39 = vcmask 195712
    %40 = vst.msk [vmem:[#allocation0] sm:$0x1] %vm39, %v38
    %s41 = scalar_lea.vmem %s0, 1
    %v42 = vld [vmem:[%s41] sm:$0x1]
    %43 = vrot.lane.b32.xlu0 %v42, 8
    %v44 = vpop.permute.xlu0 %43
    %vm45 = vcmask 130112
    %46 = vst.msk [vmem:[#allocation0] sm:$0x1] %vm45, %v44
    %s48 = sshll.u32 1, 1
    %s49 = ssub.s32 %s48, 1
    %v51 = vld [vmem:[#allocation0] sm:%s49]
    %s52 = sshll.u32 1, 1
    %s53 = ssub.s32 %s52, 1
    %54 = vst [vmem:[%s1] sm:%s53] %v51

// kernel: jsa_transformer_block.1
$region0: #{jsa_transformer_block.1}
  #allocation0 [shape = 'u32[]', space=smem, size = 0x4, offset = 0x4, fixed_abs, tag = 'smem constant byte address 0x4 - core index']
  #allocation1 [shape = 'u32[144,128]{1,0:T(1,128)}', space=vmem, size = 0x12000, scoped, tag = 'internal scratch']
  %s0 = inlined_call_operand.vmem [shape: f32[2,64,32], index: 0, kind: input, shape index: {}]
  %s1 = inlined_call_operand.vmem [shape: f32[2,64,32], index: 1, kind: input, shape index: {}]
  %s2 = inlined_call_operand.vmem [shape: f32[6,32], index: 2, kind: input, shape index: {}]
  %s3 = inlined_call_operand.vmem [shape: f32[32,96], index: 3, kind: input, shape index: {}]
  %s4 = inlined_call_operand.vmem [shape: f32[1,96], index: 4, kind: input, shape index: {}]
  %s5 = inlined_call_operand.vmem [shape: f32[32,64], index: 5, kind: input, shape index: {}]
  %s6 = inlined_call_operand.vmem [shape: f32[1,64], index: 6, kind: input, shape index: {}]
  %s7 = inlined_call_operand.vmem [shape: f32[5,64,64], index: 7, kind: input, shape index: {}]
  %s8 = inlined_call_operand.vmem [shape: f32[32,32], index: 8, kind: input, shape index: {}]
  %s9 = inlined_call_operand.vmem [shape: f32[1,32], index: 9, kind: input, shape index: {}]
  %s10 = inlined_call_operand.vmem [shape: f32[32,128], index: 10, kind: input, shape index: {}]
  %s11 = inlined_call_operand.vmem [shape: f32[1,128], index: 11, kind: input, shape index: {}]
  %s12 = inlined_call_operand.vmem [shape: f32[9,128], index: 12, kind: input, shape index: {}]
  %s13 = inlined_call_operand.vmem [shape: f32[1,128], index: 13, kind: input, shape index: {}]
  %s14 = inlined_call_operand.vmem [shape: f32[128,32], index: 14, kind: input, shape index: {}]
  %s15 = inlined_call_operand.vmem [shape: f32[1,32], index: 15, kind: input, shape index: {}]
  %s16 = inlined_call_operand.vmem [shape: f32[2,64,32], index: 16, kind: output, shape index: {}]
  %s17 = sld [smem:[#allocation0]]
  $region97: #{jsa_transformer_block.1} parent=0
    _
  %s19 = ssub.s32 1, %s17
  %s20 = scalar_select 0, %s19, %s17
  loop: start=0, step=1, limit=4
  $region2: #{jsa_transformer_block.1} parent=0 // loop_pre_header
    _
  $region3: #{jsa_transformer_block.1} parent=0 // loop_header
    %s22 = sphi 0, %s26
    %p23 = scmp.ge.s32.totalorder %s22, 4
    %s32 = sphi 0, %s34
    %s35 = sphi 0, %s32
    %s36 = sphi 0, %s35
    %s52 = sphi 0, %s36
    %s58 = sphi 0, %s60
    %s61 = sphi 0, %s58
    %s62 = sphi 0, %s61
    %s78 = sphi 0, %s62
    %s82 = sphi 0, %s82
    %s84 = sphi 0, %s82
    %s85 = sphi 0, %s84
    %s99 = sphi 0, %s85
    %s103 = sphi 0, %s103
    %s105 = sphi 0, %s103
    %s106 = sphi 0, %s105
    %s120 = sphi 0, %s106
    %s124 = sphi 0, %s124
    %s126 = sphi 0, %s124
    %s127 = sphi 0, %s126
    %s141 = sphi 0, %s127
    %s145 = sphi 0, %s145
    %s147 = sphi 0, %s145
    %s148 = sphi 0, %s147
    %s162 = sphi 0, %s148
    %s166 = sphi 0, %s166
    %s168 = sphi 0, %s166
    %s169 = sphi 0, %s168
    %s183 = sphi 0, %s169
    %s187 = sphi 0, %s187
    %s189 = sphi 0, %s187
    %s190 = sphi 0, %s189
    %s204 = sphi 0, %s190
    %s208 = sphi 0, %s208
    %s210 = sphi 0, %s208
    %s211 = sphi 0, %s210
    %s225 = sphi 0, %s211
    %s229 = sphi 0, %s229
    %s231 = sphi 0, %s229
    %s232 = sphi 0, %s231
    %s246 = sphi 0, %s232
    %s250 = sphi 0, %s250
    %s252 = sphi 0, %s250
    %s253 = sphi 0, %s252
    %s267 = sphi 0, %s253
    %s271 = sphi 0, %s271
    %s273 = sphi 0, %s271
    %s274 = sphi 0, %s273
    %s288 = sphi 0, %s274
    %s292 = sphi 0, %s292
    %s294 = sphi 0, %s292
    %s295 = sphi 0, %s294
    %s309 = sphi 0, %s295
    %s313 = sphi 0, %s313
    %s315 = sphi 0, %s313
    %s316 = sphi 0, %s315
    %s330 = sphi 0, %s316
    %s334 = sphi 0, %s334
    %s336 = sphi 0, %s334
    %s337 = sphi 0, %s336
    %s351 = sphi 0, %s337
    %s355 = sphi 0, %s355
    %s357 = sphi 0, %s355
    %s358 = sphi 0, %s357
    %s372 = sphi 0, %s358
    %s378 = sphi 0, %s380
    %s381 = sphi 0, %s378
    %s382 = sphi 0, %s381
    %s398 = sphi 0, %s382
  $region4: #{jsa_transformer_block.1} parent=0 // loop_header_branch
    %25 = sbr.rel (%p23) target = $region8
  $region5: #{jsa_transformer_block.1} parent=0 // loop_body
    %s27 = ssub.s32 %s22, 1
    %s28 = ssub.s32 %s22, 2
    %s29 = sadd.s32 %s22, 1
    %s30 = ssub.s32 %s22, %s29
    %p31 = scmp.eq.s32.totalorder %s30, 0
    %s33 = sadd.s32 %s32, 1
    %s34 = scalar_select %p31, %s32, %s33
    %p37 = pneg %p31
    %p38 = scmp.eq.s32.totalorder %s22, 1
    %p39 = por %p37, %p38
    %p40 = scmp.ne.s32.totalorder %s32, %s35
    %p41 = scmp.eq.s32.totalorder %s22, 0
    %p42 = por %p40, %p41
    %p43 = scmp.ne.s32.totalorder %s32, %s35
    %p44 = scmp.eq.s32.totalorder %s27, 1
    %p45 = por %p43, %p44
    %p46 = scmp.ne.s32.totalorder %s35, %s36
    %p47 = scmp.eq.s32.totalorder %s27, 0
    %p48 = por %p46, %p47
    %p49 = scmp.ne.s32.totalorder %s35, %s36
    %p50 = scmp.eq.s32.totalorder %s28, 1
    %p51 = por %p49, %p50
    %p53 = scmp.ne.s32.totalorder %s36, %s52
    %p54 = scmp.eq.s32.totalorder %s28, 0
    %p55 = por %p53, %p54
    %s56 = ssub.s32 %s22, %s29
    %p57 = scmp.eq.s32.totalorder %s56, 0
    %s59 = sadd.s32 %s58, 1
    %s60 = scalar_select %p57, %s58, %s59
    %p63 = pneg %p57
    %p64 = scmp.eq.s32.totalorder %s22, 1
    %p65 = por %p63, %p64
    %p66 = scmp.ne.s32.totalorder %s58, %s61
    %p67 = scmp.eq.s32.totalorder %s22, 0
    %p68 = por %p66, %p67
    %p69 = scmp.ne.s32.totalorder %s58, %s61
    %p70 = scmp.eq.s32.totalorder %s27, 1
    %p71 = por %p69, %p70
    %p72 = scmp.ne.s32.totalorder %s61, %s62
    %p73 = scmp.eq.s32.totalorder %s27, 0
    %p74 = por %p72, %p73
    %p75 = scmp.ne.s32.totalorder %s61, %s62
    %p76 = scmp.eq.s32.totalorder %s28, 1
    %p77 = por %p75, %p76
    %p79 = scmp.ne.s32.totalorder %s62, %s78
    %p80 = scmp.eq.s32.totalorder %s28, 0
    %p81 = por %p79, %p80
    %s83 = sadd.s32 %s82, 1
    %p86 = scmp.eq.s32.totalorder %s22, 1
    %p87 = scmp.ne.s32.totalorder %s82, %s84
    %p88 = scmp.eq.s32.totalorder %s22, 0
    %p89 = por %p87, %p88
    %p90 = scmp.ne.s32.totalorder %s82, %s84
    %p91 = scmp.eq.s32.totalorder %s27, 1
    %p92 = por %p90, %p91
    %p93 = scmp.ne.s32.totalorder %s84, %s85
    %p94 = scmp.eq.s32.totalorder %s27, 0
    %p95 = por %p93, %p94
    %p96 = scmp.ne.s32.totalorder %s84, %s85
    %p97 = scmp.eq.s32.totalorder %s28, 1
    %p98 = por %p96, %p97
    %p100 = scmp.ne.s32.totalorder %s85, %s99
    %p101 = scmp.eq.s32.totalorder %s28, 0
    %p102 = por %p100, %p101
    %s104 = sadd.s32 %s103, 1
    %p107 = scmp.eq.s32.totalorder %s22, 1
    %p108 = scmp.ne.s32.totalorder %s103, %s105
    %p109 = scmp.eq.s32.totalorder %s22, 0
    %p110 = por %p108, %p109
    %p111 = scmp.ne.s32.totalorder %s103, %s105
    %p112 = scmp.eq.s32.totalorder %s27, 1
    %p113 = por %p111, %p112
    %p114 = scmp.ne.s32.totalorder %s105, %s106
    %p115 = scmp.eq.s32.totalorder %s27, 0
    %p116 = por %p114, %p115
    %p117 = scmp.ne.s32.totalorder %s105, %s106
    %p118 = scmp.eq.s32.totalorder %s28, 1
    %p119 = por %p117, %p118
    %p121 = scmp.ne.s32.totalorder %s106, %s120
    %p122 = scmp.eq.s32.totalorder %s28, 0
    %p123 = por %p121, %p122
    %s125 = sadd.s32 %s124, 1
    %p128 = scmp.eq.s32.totalorder %s22, 1
    %p129 = scmp.ne.s32.totalorder %s124, %s126
    %p130 = scmp.eq.s32.totalorder %s22, 0
    %p131 = por %p129, %p130
    %p132 = scmp.ne.s32.totalorder %s124, %s126
    %p133 = scmp.eq.s32.totalorder %s27, 1
    %p134 = por %p132, %p133
    %p135 = scmp.ne.s32.totalorder %s126, %s127
    %p136 = scmp.eq.s32.totalorder %s27, 0
    %p137 = por %p135, %p136
    %p138 = scmp.ne.s32.totalorder %s126, %s127
    %p139 = scmp.eq.s32.totalorder %s28, 1
    %p140 = por %p138, %p139
    %p142 = scmp.ne.s32.totalorder %s127, %s141
    %p143 = scmp.eq.s32.totalorder %s28, 0
    %p144 = por %p142, %p143
    %s146 = sadd.s32 %s145, 1
    %p149 = scmp.eq.s32.totalorder %s22, 1
    %p150 = scmp.ne.s32.totalorder %s145, %s147
    %p151 = scmp.eq.s32.totalorder %s22, 0
    %p152 = por %p150, %p151
    %p153 = scmp.ne.s32.totalorder %s145, %s147
    %p154 = scmp.eq.s32.totalorder %s27, 1
    %p155 = por %p153, %p154
    %p156 = scmp.ne.s32.totalorder %s147, %s148
    %p157 = scmp.eq.s32.totalorder %s27, 0
    %p158 = por %p156, %p157
    %p159 = scmp.ne.s32.totalorder %s147, %s148
    %p160 = scmp.eq.s32.totalorder %s28, 1
    %p161 = por %p159, %p160
    %p163 = scmp.ne.s32.totalorder %s148, %s162
    %p164 = scmp.eq.s32.totalorder %s28, 0
    %p165 = por %p163, %p164
    %s167 = sadd.s32 %s166, 1
    %p170 = scmp.eq.s32.totalorder %s22, 1
    %p171 = scmp.ne.s32.totalorder %s166, %s168
    %p172 = scmp.eq.s32.totalorder %s22, 0
    %p173 = por %p171, %p172
    %p174 = scmp.ne.s32.totalorder %s166, %s168
    %p175 = scmp.eq.s32.totalorder %s27, 1
    %p176 = por %p174, %p175
    %p177 = scmp.ne.s32.totalorder %s168, %s169
    %p178 = scmp.eq.s32.totalorder %s27, 0
    %p179 = por %p177, %p178
    %p180 = scmp.ne.s32.totalorder %s168, %s169
    %p181 = scmp.eq.s32.totalorder %s28, 1
    %p182 = por %p180, %p181
    %p184 = scmp.ne.s32.totalorder %s169, %s183
    %p185 = scmp.eq.s32.totalorder %s28, 0
    %p186 = por %p184, %p185
    %s188 = sadd.s32 %s187, 1
    %p191 = scmp.eq.s32.totalorder %s22, 1
    %p192 = scmp.ne.s32.totalorder %s187, %s189
    %p193 = scmp.eq.s32.totalorder %s22, 0
    %p194 = por %p192, %p193
    %p195 = scmp.ne.s32.totalorder %s187, %s189
    %p196 = scmp.eq.s32.totalorder %s27, 1
    %p197 = por %p195, %p196
    %p198 = scmp.ne.s32.totalorder %s189, %s190
    %p199 = scmp.eq.s32.totalorder %s27, 0
    %p200 = por %p198, %p199
    %p201 = scmp.ne.s32.totalorder %s189, %s190
    %p202 = scmp.eq.s32.totalorder %s28, 1
    %p203 = por %p201, %p202
    %p205 = scmp.ne.s32.totalorder %s190, %s204
    %p206 = scmp.eq.s32.totalorder %s28, 0
    %p207 = por %p205, %p206
    %s209 = sadd.s32 %s208, 1
    %p212 = scmp.eq.s32.totalorder %s22, 1
    %p213 = scmp.ne.s32.totalorder %s208, %s210
    %p214 = scmp.eq.s32.totalorder %s22, 0
    %p215 = por %p213, %p214
    %p216 = scmp.ne.s32.totalorder %s208, %s210
    %p217 = scmp.eq.s32.totalorder %s27, 1
    %p218 = por %p216, %p217
    %p219 = scmp.ne.s32.totalorder %s210, %s211
    %p220 = scmp.eq.s32.totalorder %s27, 0
    %p221 = por %p219, %p220
    %p222 = scmp.ne.s32.totalorder %s210, %s211
    %p223 = scmp.eq.s32.totalorder %s28, 1
    %p224 = por %p222, %p223
    %p226 = scmp.ne.s32.totalorder %s211, %s225
    %p227 = scmp.eq.s32.totalorder %s28, 0
    %p228 = por %p226, %p227
    %s230 = sadd.s32 %s229, 1
    %p233 = scmp.eq.s32.totalorder %s22, 1
    %p234 = scmp.ne.s32.totalorder %s229, %s231
    %p235 = scmp.eq.s32.totalorder %s22, 0
    %p236 = por %p234, %p235
    %p237 = scmp.ne.s32.totalorder %s229, %s231
    %p238 = scmp.eq.s32.totalorder %s27, 1
    %p239 = por %p237, %p238
    %p240 = scmp.ne.s32.totalorder %s231, %s232
    %p241 = scmp.eq.s32.totalorder %s27, 0
    %p242 = por %p240, %p241
    %p243 = scmp.ne.s32.totalorder %s231, %s232
    %p244 = scmp.eq.s32.totalorder %s28, 1
    %p245 = por %p243, %p244
    %p247 = scmp.ne.s32.totalorder %s232, %s246
    %p248 = scmp.eq.s32.totalorder %s28, 0
    %p249 = por %p247, %p248
    %s251 = sadd.s32 %s250, 1
    %p254 = scmp.eq.s32.totalorder %s22, 1
    %p255 = scmp.ne.s32.totalorder %s250, %s252
    %p256 = scmp.eq.s32.totalorder %s22, 0
    %p257 = por %p255, %p256
    %p258 = scmp.ne.s32.totalorder %s250, %s252
    %p259 = scmp.eq.s32.totalorder %s27, 1
    %p260 = por %p258, %p259
    %p261 = scmp.ne.s32.totalorder %s252, %s253
    %p262 = scmp.eq.s32.totalorder %s27, 0
    %p263 = por %p261, %p262
    %p264 = scmp.ne.s32.totalorder %s252, %s253
    %p265 = scmp.eq.s32.totalorder %s28, 1
    %p266 = por %p264, %p265
    %p268 = scmp.ne.s32.totalorder %s253, %s267
    %p269 = scmp.eq.s32.totalorder %s28, 0
    %p270 = por %p268, %p269
    %s272 = sadd.s32 %s271, 1
    %p275 = scmp.eq.s32.totalorder %s22, 1
    %p276 = scmp.ne.s32.totalorder %s271, %s273
    %p277 = scmp.eq.s32.totalorder %s22, 0
    %p278 = por %p276, %p277
    %p279 = scmp.ne.s32.totalorder %s271, %s273
    %p280 = scmp.eq.s32.totalorder %s27, 1
    %p281 = por %p279, %p280
    %p282 = scmp.ne.s32.totalorder %s273, %s274
    %p283 = scmp.eq.s32.totalorder %s27, 0
    %p284 = por %p282, %p283
    %p285 = scmp.ne.s32.totalorder %s273, %s274
    %p286 = scmp.eq.s32.totalorder %s28, 1
    %p287 = por %p285, %p286
    %p289 = scmp.ne.s32.totalorder %s274, %s288
    %p290 = scmp.eq.s32.totalorder %s28, 0
    %p291 = por %p289, %p290
    %s293 = sadd.s32 %s292, 1
    %p296 = scmp.eq.s32.totalorder %s22, 1
    %p297 = scmp.ne.s32.totalorder %s292, %s294
    %p298 = scmp.eq.s32.totalorder %s22, 0
    %p299 = por %p297, %p298
    %p300 = scmp.ne.s32.totalorder %s292, %s294
    %p301 = scmp.eq.s32.totalorder %s27, 1
    %p302 = por %p300, %p301
    %p303 = scmp.ne.s32.totalorder %s294, %s295
    %p304 = scmp.eq.s32.totalorder %s27, 0
    %p305 = por %p303, %p304
    %p306 = scmp.ne.s32.totalorder %s294, %s295
    %p307 = scmp.eq.s32.totalorder %s28, 1
    %p308 = por %p306, %p307
    %p310 = scmp.ne.s32.totalorder %s295, %s309
    %p311 = scmp.eq.s32.totalorder %s28, 0
    %p312 = por %p310, %p311
    %s314 = sadd.s32 %s313, 1
    %p317 = scmp.eq.s32.totalorder %s22, 1
    %p318 = scmp.ne.s32.totalorder %s313, %s315
    %p319 = scmp.eq.s32.totalorder %s22, 0
    %p320 = por %p318, %p319
    %p321 = scmp.ne.s32.totalorder %s313, %s315
    %p322 = scmp.eq.s32.totalorder %s27, 1
    %p323 = por %p321, %p322
    %p324 = scmp.ne.s32.totalorder %s315, %s316
    %p325 = scmp.eq.s32.totalorder %s27, 0
    %p326 = por %p324, %p325
    %p327 = scmp.ne.s32.totalorder %s315, %s316
    %p328 = scmp.eq.s32.totalorder %s28, 1
    %p329 = por %p327, %p328
    %p331 = scmp.ne.s32.totalorder %s316, %s330
    %p332 = scmp.eq.s32.totalorder %s28, 0
    %p333 = por %p331, %p332
    %s335 = sadd.s32 %s334, 1
    %p338 = scmp.eq.s32.totalorder %s22, 1
    %p339 = scmp.ne.s32.totalorder %s334, %s336
    %p340 = scmp.eq.s32.totalorder %s22, 0
    %p341 = por %p339, %p340
    %p342 = scmp.ne.s32.totalorder %s334, %s336
    %p343 = scmp.eq.s32.totalorder %s27, 1
    %p344 = por %p342, %p343
    %p345 = scmp.ne.s32.totalorder %s336, %s337
    %p346 = scmp.eq.s32.totalorder %s27, 0
    %p347 = por %p345, %p346
    %p348 = scmp.ne.s32.totalorder %s336, %s337
    %p349 = scmp.eq.s32.totalorder %s28, 1
    %p350 = por %p348, %p349
    %p352 = scmp.ne.s32.totalorder %s337, %s351
    %p353 = scmp.eq.s32.totalorder %s28, 0
    %p354 = por %p352, %p353
    %s356 = sadd.s32 %s355, 1
    %p359 = scmp.eq.s32.totalorder %s22, 1
    %p360 = scmp.ne.s32.totalorder %s355, %s357
    %p361 = scmp.eq.s32.totalorder %s22, 0
    %p362 = por %p360, %p361
    %p363 = scmp.ne.s32.totalorder %s355, %s357
    %p364 = scmp.eq.s32.totalorder %s27, 1
    %p365 = por %p363, %p364
    %p366 = scmp.ne.s32.totalorder %s357, %s358
    %p367 = scmp.eq.s32.totalorder %s27, 0
    %p368 = por %p366, %p367
    %p369 = scmp.ne.s32.totalorder %s357, %s358
    %p370 = scmp.eq.s32.totalorder %s28, 1
    %p371 = por %p369, %p370
    %p373 = scmp.ne.s32.totalorder %s358, %s372
    %p374 = scmp.eq.s32.totalorder %s28, 0
    %p375 = por %p373, %p374
    %s376 = ssub.s32 %s22, %s29
    %p377 = scmp.eq.s32.totalorder %s376, 0
    %s379 = sadd.s32 %s378, 1
    %s380 = scalar_select %p377, %s378, %s379
    %p383 = pneg %p377
    %p384 = scmp.eq.s32.totalorder %s22, 1
    %p385 = por %p383, %p384
    %p386 = scmp.ne.s32.totalorder %s378, %s381
    %p387 = scmp.eq.s32.totalorder %s22, 0
    %p388 = por %p386, %p387
    %p389 = scmp.ne.s32.totalorder %s378, %s381
    %p390 = scmp.eq.s32.totalorder %s27, 1
    %p391 = por %p389, %p390
    %p392 = scmp.ne.s32.totalorder %s381, %s382
    %p393 = scmp.eq.s32.totalorder %s27, 0
    %p394 = por %p392, %p393
    %p395 = scmp.ne.s32.totalorder %s381, %s382
    %p396 = scmp.eq.s32.totalorder %s28, 1
    %p397 = por %p395, %p396
    %p399 = scmp.ne.s32.totalorder %s382, %s398
    %p400 = scmp.eq.s32.totalorder %s28, 0
    %p401 = por %p399, %p400
    %p402 = scmp.le.s32.totalorder 1, %s22
    %p403 = scmp.lt.s32.totalorder %s22, 3
    %p404 = pnand %p402, %p403
    %p405 = pneg %p404
    // Predicated region
    $region9: #{jsa_transformer_block.1} parent=5 // pred_check
      _
    $region10: #{jsa_transformer_block.1} parent=5 // pred_check_branch
      %407 = sbr.rel (%p404) target = $region12
    $region11: #{jsa_transformer_block.1} parent=5 // pred_region
      %s408 = ssub.s32 %s22, 1
      // Predicated region
      $region13: #{jsa_transformer_block.1} parent=11 // pred_check
        %p409 = pneg %p95
      $region14: #{jsa_transformer_block.1} parent=11 // pred_check_branch
        %411 = sbr.rel (%p409) target = $region16
      $region15: #{jsa_transformer_block.1} parent=11 // pred_region
        _
      $region16: #{jsa_transformer_block.1} parent=11 // pred_fallthru
        _
      // Predicated region
      $region17: #{jsa_transformer_block.1} parent=11 // pred_check
        %p412 = pneg %p116
      $region18: #{jsa_transformer_block.1} parent=11 // pred_check_branch
        %414 = sbr.rel (%p412) target = $region20
      $region19: #{jsa_transformer_block.1} parent=11 // pred_region
        _
      $region20: #{jsa_transformer_block.1} parent=11 // pred_fallthru
        _
      // Predicated region
      $region21: #{jsa_transformer_block.1} parent=11 // pred_check
        %p415 = pneg %p137
      $region22: #{jsa_transformer_block.1} parent=11 // pred_check_branch
        %417 = sbr.rel (%p415) target = $region24
      $region23: #{jsa_transformer_block.1} parent=11 // pred_region
        _
      $region24: #{jsa_transformer_block.1} parent=11 // pred_fallthru
        _
      // Predicated region
      $region25: #{jsa_transformer_block.1} parent=11 // pred_check
        %p418 = pneg %p158
      $region26: #{jsa_transformer_block.1} parent=11 // pred_check_branch
        %420 = sbr.rel (%p418) target = $region28
      $region27: #{jsa_transformer_block.1} parent=11 // pred_region
        _
      $region28: #{jsa_transformer_block.1} parent=11 // pred_fallthru
        _
      // Predicated region
      $region29: #{jsa_transformer_block.1} parent=11 // pred_check
        %p421 = pneg %p179
      $region30: #{jsa_transformer_block.1} parent=11 // pred_check_branch
        %423 = sbr.rel (%p421) target = $region32
      $region31: #{jsa_transformer_block.1} parent=11 // pred_region
        _
      $region32: #{jsa_transformer_block.1} parent=11 // pred_fallthru
        _
      // Predicated region
      $region33: #{jsa_transformer_block.1} parent=11 // pred_check
        %p424 = pneg %p200
      $region34: #{jsa_transformer_block.1} parent=11 // pred_check_branch
        %426 = sbr.rel (%p424) target = $region36
      $region35: #{jsa_transformer_block.1} parent=11 // pred_region
        _
      $region36: #{jsa_transformer_block.1} parent=11 // pred_fallthru
        _
      // Predicated region
      $region37: #{jsa_transformer_block.1} parent=11 // pred_check
        %p427 = pneg %p221
      $region38: #{jsa_transformer_block.1} parent=11 // pred_check_branch
        %429 = sbr.rel (%p427) target = $region40
      $region39: #{jsa_transformer_block.1} parent=11 // pred_region
        _
      $region40: #{jsa_transformer_block.1} parent=11 // pred_fallthru
        _
      // Predicated region
      $region41: #{jsa_transformer_block.1} parent=11 // pred_check
        %p430 = pneg %p242
      $region42: #{jsa_transformer_block.1} parent=11 // pred_check_branch
        %432 = sbr.rel (%p430) target = $region44
      $region43: #{jsa_transformer_block.1} parent=11 // pred_region
        _
      $region44: #{jsa_transformer_block.1} parent=11 // pred_fallthru
        _
      // Predicated region
      $region45: #{jsa_transformer_block.1} parent=11 // pred_check
        %p433 = pneg %p263
      $region46: #{jsa_transformer_block.1} parent=11 // pred_check_branch
        %435 = sbr.rel (%p433) target = $region48
      $region47: #{jsa_transformer_block.1} parent=11 // pred_region
        _
      $region48: #{jsa_transformer_block.1} parent=11 // pred_fallthru
        _
      // Predicated region
      $region49: #{jsa_transformer_block.1} parent=11 // pred_check
        %p436 = pneg %p284
      $region50: #{jsa_transformer_block.1} parent=11 // pred_check_branch
        %438 = sbr.rel (%p436) target = $region52
      $region51: #{jsa_transformer_block.1} parent=11 // pred_region
        _
      $region52: #{jsa_transformer_block.1} parent=11 // pred_fallthru
        _
      // Predicated region
      $region53: #{jsa_transformer_block.1} parent=11 // pred_check
        %p439 = pneg %p305
      $region54: #{jsa_transformer_block.1} parent=11 // pred_check_branch
        %441 = sbr.rel (%p439) target = $region56
      $region55: #{jsa_transformer_block.1} parent=11 // pred_region
        _
      $region56: #{jsa_transformer_block.1} parent=11 // pred_fallthru
        _
      // Predicated region
      $region57: #{jsa_transformer_block.1} parent=11 // pred_check
        %p442 = pneg %p326
      $region58: #{jsa_transformer_block.1} parent=11 // pred_check_branch
        %444 = sbr.rel (%p442) target = $region60
      $region59: #{jsa_transformer_block.1} parent=11 // pred_region
        _
      $region60: #{jsa_transformer_block.1} parent=11 // pred_fallthru
        _
      // Predicated region
      $region61: #{jsa_transformer_block.1} parent=11 // pred_check
        %p445 = pneg %p347
      $region62: #{jsa_transformer_block.1} parent=11 // pred_check_branch
        %447 = sbr.rel (%p445) target = $region64
      $region63: #{jsa_transformer_block.1} parent=11 // pred_region
        _
      $region64: #{jsa_transformer_block.1} parent=11 // pred_fallthru
        _
      // Predicated region
      $region65: #{jsa_transformer_block.1} parent=11 // pred_check
        %p448 = pneg %p368
      $region66: #{jsa_transformer_block.1} parent=11 // pred_check_branch
        %450 = sbr.rel (%p448) target = $region68
      $region67: #{jsa_transformer_block.1} parent=11 // pred_region
        _
      $region68: #{jsa_transformer_block.1} parent=11 // pred_fallthru
        _
    $region12: #{jsa_transformer_block.1} parent=5 // pred_fallthru
      _
    %p451 = scmp.lt.s32.totalorder %s22, 2
    // Predicated region
    $region69: #{jsa_transformer_block.1} parent=5 // pred_check
      %p452 = pneg %p451
    $region70: #{jsa_transformer_block.1} parent=5 // pred_check_branch
      %454 = sbr.rel (%p452) target = $region72
    $region71: #{jsa_transformer_block.1} parent=5 // pred_region
      // Predicated region
      $region73: #{jsa_transformer_block.1} parent=71 // pred_check
        %p455 = pneg %p42
      $region74: #{jsa_transformer_block.1} parent=71 // pred_check_branch
        %457 = sbr.rel (%p455) target = $region76
      $region75: #{jsa_transformer_block.1} parent=71 // pred_region
        %p458 = scmp.lt.s32.totalorder %s22, 1
        %s459 = scalar_select %p458, %s22, 1
        %s460 = smul.addr %s459, 8
        %s461 = smul.addr %s460, 8
        %s462 = scalar_lea.vmem %s0, %s461
      $region76: #{jsa_transformer_block.1} parent=71 // pred_fallthru
        _
      // Predicated region
      $region77: #{jsa_transformer_block.1} parent=71 // pred_check
        %p463 = pneg %p68
      $region78: #{jsa_transformer_block.1} parent=71 // pred_check_branch
        %465 = sbr.rel (%p463) target = $region80
      $region79: #{jsa_transformer_block.1} parent=71 // pred_region
        %p466 = scmp.lt.s32.totalorder %s22, 1
        %s467 = scalar_select %p466, %s22, 1
        %s468 = smul.addr %s467, 8
        %s469 = smul.addr %s468, 8
        %s470 = scalar_lea.vmem %s1, %s469
      $region80: #{jsa_transformer_block.1} parent=71 // pred_fallthru
        _
    $region72: #{jsa_transformer_block.1} parent=5 // pred_fallthru
      _
    %p471 = scmp.le.s32.totalorder 1, %s22
    %p472 = scmp.lt.s32.totalorder %s22, 3
    %p473 = pnand %p471, %p472
    %p474 = pneg %p473
    // Predicated region
    $region81: #{jsa_transformer_block.1} parent=5 // pred_check
      _
    $region82: #{jsa_transformer_block.1} parent=5 // pred_check_branch
      %476 = sbr.rel (%p473) target = $region84
    $region83: #{jsa_transformer_block.1} parent=5 // pred_region
      %s477 = ssub.s32 %s22, 1
      %p478 = scmp.lt.s32.totalorder %s27, 1
      %s479 = scalar_select %p478, %s27, 1
      %s480 = smul.addr %s479, 8
      %s481 = smul.addr %s480, 8
      %s482 = scalar_lea.vmem %s0, %s481
      %p483 = pneg %p48
      %p484 = pneg %p45
      %p485 = scmp.lt.s32.totalorder %s27, 1
      %s486 = scalar_select %p485, %s27, 1
      %s487 = smul.addr %s486, 8
      %s488 = smul.addr %s487, 8
      %s489 = scalar_lea.vmem %s1, %s488
      %p490 = pneg %p74
      %p491 = pneg %p71
      %p492 = pneg %p95
      %p493 = pneg %p92
      %p494 = pneg %p116
      %p495 = pneg %p113
      %p496 = pneg %p137
      %p497 = pneg %p134
      %p498 = pneg %p158
      %p499 = pneg %p155
      %p500 = pneg %p179
      %p501 = pneg %p176
      %p502 = pneg %p200
      %p503 = pneg %p197
      %p504 = pneg %p221
      %p505 = pneg %p218
      %p506 = pneg %p242
      %p507 = pneg %p239
      %p508 = pneg %p263
      %p509 = pneg %p260
      %p510 = pneg %p284
      %p511 = pneg %p281
      %p512 = pneg %p305
      %p513 = pneg %p302
      %p514 = pneg %p326
      %p515 = pneg %p323
      %p516 = pneg %p347
      %p517 = pneg %p344
      %p518 = pneg %p368
      %p519 = pneg %p365
      %p520 = pneg %p394
      %p521 = pneg %p391
      %p522 = scmp.lt.s32.totalorder %s27, 1
      %s523 = scalar_select %p522, %s27, 1
      %s524 = smul.addr %s523, 8
      %s525 = smul.addr %s524, 8
      %s526 = scalar_lea.vmem %s16, %s525
      %p527 = scmp.lt.s32.totalorder %s27, 1
      %s528 = scalar_select %p527, %s27, 1
      %s529 = smul.addr %s528, 8
      %s530 = smul.addr %s529, 8
      %s531 = scalar_lea.vmem %s0, %s530
      %p532 = scmp.lt.s32.totalorder %s27, 1
      %s533 = scalar_select %p532, %s27, 1
      %s534 = smul.addr %s533, 8
      %s535 = smul.addr %s534, 8
      %s536 = scalar_lea.vmem %s1, %s535
      %p537 = scmp.lt.s32.totalorder %s27, 1
      %s538 = scalar_select %p537, %s27, 1
      %s539 = smul.addr %s538, 8
      %s540 = smul.addr %s539, 8
      %s541 = scalar_lea.vmem %s16, %s540
      %v542 = vld [vmem:[%s531] sm:$0xff]
      %v543 = vld [vmem:[%s531 + $0x8] sm:$0xff]
      %v544 = vld [vmem:[%s531 + $0x10] sm:$0xff]
      %v545 = vld [vmem:[%s531 + $0x18] sm:$0xff]
      %v546 = vld [vmem:[%s531 + $0x20] sm:$0xff]
      %v547 = vld [vmem:[%s531 + $0x28] sm:$0xff]
      %v548 = vld [vmem:[%s531 + $0x30] sm:$0xff]
      %v549 = vld [vmem:[%s531 + $0x38] sm:$0xff]
      %v550 = vld [vmem:[%s536] sm:$0xff]
      %v551 = vld [vmem:[%s536 + $0x8] sm:$0xff]
      %v552 = vld [vmem:[%s536 + $0x10] sm:$0xff]
      %v553 = vld [vmem:[%s536 + $0x18] sm:$0xff]
      %v554 = vld [vmem:[%s536 + $0x20] sm:$0xff]
      %v555 = vld [vmem:[%s536 + $0x28] sm:$0xff]
      %v556 = vld [vmem:[%s536 + $0x30] sm:$0xff]
      %v557 = vld [vmem:[%s536 + $0x38] sm:$0xff]
      %v558 = vld [vmem:[%s2] sm:$0x1]
      %v559 = vld [vmem:[%s2 + $0x1] sm:$0x1]
      %vm560 = vcmask 261120
      %v561 = vsel %vm560, %v542, 0.0
      %562 = vadd.xlane.f32.xlu0 %v561
      %v563 = vpop.xlane.xlu0 %562
      %v564 = vsel %vm560, %v543, 0.0
      %565 = vadd.xlane.f32.xlu0 %v564
      %v566 = vpop.xlane.xlu0 %565
      %v567 = vsel %vm560, %v544, 0.0
      %568 = vadd.xlane.f32.xlu0 %v567
      %v569 = vpop.xlane.xlu0 %568
      %v570 = vsel %vm560, %v545, 0.0
      %571 = vadd.xlane.f32.xlu0 %v570
      %v572 = vpop.xlane.xlu0 %571
      %v573 = vsel %vm560, %v546, 0.0
      %574 = vadd.xlane.f32.xlu0 %v573
      %v575 = vpop.xlane.xlu0 %574
      %v576 = vsel %vm560, %v547, 0.0
      %577 = vadd.xlane.f32.xlu0 %v576
      %v578 = vpop.xlane.xlu0 %577
      %v579 = vsel %vm560, %v548, 0.0
      %580 = vadd.xlane.f32.xlu0 %v579
      %v581 = vpop.xlane.xlu0 %580
      %v582 = vsel %vm560, %v549, 0.0
      %583 = vadd.xlane.f32.xlu0 %v582
      %v584 = vpop.xlane.xlu0 %583
      %v585 = vrcp.pop 32.0
      %v586 = vmul.f32 %v563, %v585
      %v587 = vmul.f32 %v566, %v585
      %v588 = vmul.f32 %v569, %v585
      %v589 = vmul.f32 %v572, %v585
      %v590 = vmul.f32 %v575, %v585
      %v591 = vmul.f32 %v578, %v585
      %v592 = vmul.f32 %v581, %v585
      %v593 = vmul.f32 %v584, %v585
      %v594 = vsub.f32 %v542, %v586
      %v595 = vsub.f32 %v543, %v587
      %v596 = vsub.f32 %v544, %v588
      %v597 = vsub.f32 %v545, %v589
      %v598 = vsub.f32 %v546, %v590
      %v599 = vsub.f32 %v547, %v591
      %v600 = vsub.f32 %v548, %v592
      %v601 = vsub.f32 %v549, %v593
      %v602 = vmul.f32 %v594, %v594
      %v603 = vmul.f32 %v595, %v595
      %v604 = vmul.f32 %v596, %v596
      %v605 = vmul.f32 %v597, %v597
      %v606 = vmul.f32 %v598, %v598
      %v607 = vmul.f32 %v599, %v599
      %v608 = vmul.f32 %v600, %v600
      %v609 = vmul.f32 %v601, %v601
      %v610 = vsel %vm560, %v602, 0.0
      %611 = vadd.xlane.f32.xlu0 %v610
      %v612 = vpop.xlane.xlu0 %611
      %v613 = vsel %vm560, %v603, 0.0
      %614 = vadd.xlane.f32.xlu0 %v613
      %v615 = vpop.xlane.xlu0 %614
      %v616 = vsel %vm560, %v604, 0.0
      %617 = vadd.xlane.f32.xlu0 %v616
      %v618 = vpop.xlane.xlu0 %617
      %v619 = vsel %vm560, %v605, 0.0
      %620 = vadd.xlane.f32.xlu0 %v619
      %v621 = vpop.xlane.xlu0 %620
      %v622 = vsel %vm560, %v606, 0.0
      %623 = vadd.xlane.f32.xlu0 %v622
      %v624 = vpop.xlane.xlu0 %623
      %v625 = vsel %vm560, %v607, 0.0
      %626 = vadd.xlane.f32.xlu0 %v625
      %v627 = vpop.xlane.xlu0 %626
      %v628 = vsel %vm560, %v608, 0.0
      %629 = vadd.xlane.f32.xlu0 %v628
      %v630 = vpop.xlane.xlu0 %629
      %v631 = vsel %vm560, %v609, 0.0
      %632 = vadd.xlane.f32.xlu0 %v631
      %v633 = vpop.xlane.xlu0 %632
      %v634 = vmul.f32 %v612, %v585
      %v635 = vmul.f32 %v615, %v585
      %v636 = vmul.f32 %v618, %v585
      %v637 = vmul.f32 %v621, %v585
      %v638 = vmul.f32 %v624, %v585
      %v639 = vmul.f32 %v627, %v585
      %v640 = vmul.f32 %v630, %v585
      %v641 = vmul.f32 %v633, %v585
      %v642 = vadd.f32 %v634, 1e-05
      %v643 = vadd.f32 %v635, 1e-05
      %v644 = vadd.f32 %v636, 1e-05
      %v645 = vadd.f32 %v637, 1e-05
      %v646 = vadd.f32 %v638, 1e-05
      %v647 = vadd.f32 %v639, 1e-05
      %v648 = vadd.f32 %v640, 1e-05
      %v649 = vadd.f32 %v641, 1e-05
      %v650 = vrsqrt.pop %v642
      %v651 = vrsqrt.pop %v643
      %v652 = vrsqrt.pop %v644
      %v653 = vrsqrt.pop %v645
      %v654 = vrsqrt.pop %v646
      %v655 = vrsqrt.pop %v647
      %v656 = vrsqrt.pop %v648
      %v657 = vrsqrt.pop %v649
      %v658 = vmul.f32 %v594, %v650
      %v659 = vmul.f32 %v595, %v651
      %v660 = vmul.f32 %v596, %v652
      %v661 = vmul.f32 %v597, %v653
      %v662 = vmul.f32 %v598, %v654
      %v663 = vmul.f32 %v599, %v655
      %v664 = vmul.f32 %v600, %v656
      %v665 = vmul.f32 %v601, %v657
      %v666 = vlaneseq
      %v667 = vshrl.u32 %v666, 7
      %v668 = vsub.s32 0, %v667
      %v669 = vrot.slane %v558, %v668
      %v670 = vmul.f32 %v658, %v669
      %v671 = vmul.f32 %v659, %v669
      %v672 = vmul.f32 %v660, %v669
      %v673 = vmul.f32 %v661, %v669
      %v674 = vmul.f32 %v662, %v669
      %v675 = vmul.f32 %v663, %v669
      %v676 = vmul.f32 %v664, %v669
      %v677 = vmul.f32 %v665, %v669
      %v678 = vlaneseq
      %v679 = vshrl.u32 %v678, 7
      %v680 = vsub.s32 0, %v679
      %v681 = vrot.slane %v559, %v680
      %v682 = vadd.f32 %v670, %v681
      %v683 = vadd.f32 %v671, %v681
      %v684 = vadd.f32 %v672, %v681
      %v685 = vadd.f32 %v673, %v681
      %v686 = vadd.f32 %v674, %v681
      %v687 = vadd.f32 %v675, %v681
      %v688 = vadd.f32 %v676, %v681
      %v689 = vadd.f32 %v677, %v681
      %v690 = vld [vmem:[%s2 + $0x2] sm:$0x1]
      %v691 = vld [vmem:[%s2 + $0x3] sm:$0x1]
      %v692 = vsel %vm560, %v550, 0.0
      %693 = vadd.xlane.f32.xlu0 %v692
      %v694 = vpop.xlane.xlu0 %693
      %v695 = vsel %vm560, %v551, 0.0
      %696 = vadd.xlane.f32.xlu0 %v695
      %v697 = vpop.xlane.xlu0 %696
      %v698 = vsel %vm560, %v552, 0.0
      %699 = vadd.xlane.f32.xlu0 %v698
      %v700 = vpop.xlane.xlu0 %699
      %v701 = vsel %vm560, %v553, 0.0
      %702 = vadd.xlane.f32.xlu0 %v701
      %v703 = vpop.xlane.xlu0 %702
      %v704 = vsel %vm560, %v554, 0.0
      %705 = vadd.xlane.f32.xlu0 %v704
      %v706 = vpop.xlane.xlu0 %705
      %v707 = vsel %vm560, %v555, 0.0
      %708 = vadd.xlane.f32.xlu0 %v707
      %v709 = vpop.xlane.xlu0 %708
      %v710 = vsel %vm560, %v556, 0.0
      %711 = vadd.xlane.f32.xlu0 %v710
      %v712 = vpop.xlane.xlu0 %711
      %v713 = vsel %vm560, %v557, 0.0
      %714 = vadd.xlane.f32.xlu0 %v713
      %v715 = vpop.xlane.xlu0 %714
      %v716 = vmul.f32 %v694, %v585
      %v717 = vmul.f32 %v697, %v585
      %v718 = vmul.f32 %v700, %v585
      %v719 = vmul.f32 %v703, %v585
      %v720 = vmul.f32 %v706, %v585
      %v721 = vmul.f32 %v709, %v585
      %v722 = vmul.f32 %v712, %v585
      %v723 = vmul.f32 %v715, %v585
      %v724 = vsub.f32 %v550, %v716
      %v725 = vsub.f32 %v551, %v717
      %v726 = vsub.f32 %v552, %v718
      %v727 = vsub.f32 %v553, %v719
      %v728 = vsub.f32 %v554, %v720
      %v729 = vsub.f32 %v555, %v721
      %v730 = vsub.f32 %v556, %v722
      %v731 = vsub.f32 %v557, %v723
      %v732 = vmul.f32 %v724, %v724
      %v733 = vmul.f32 %v725, %v725
      %v734 = vmul.f32 %v726, %v726
      %v735 = vmul.f32 %v727, %v727
      %v736 = vmul.f32 %v728, %v728
      %v737 = vmul.f32 %v729, %v729
      %v738 = vmul.f32 %v730, %v730
      %v739 = vmul.f32 %v731, %v731
      %v740 = vsel %vm560, %v732, 0.0
      %741 = vadd.xlane.f32.xlu0 %v740
      %v742 = vpop.xlane.xlu0 %741
      %v743 = vsel %vm560, %v733, 0.0
      %744 = vadd.xlane.f32.xlu0 %v743
      %v745 = vpop.xlane.xlu0 %744
      %v746 = vsel %vm560, %v734, 0.0
      %747 = vadd.xlane.f32.xlu0 %v746
      %v748 = vpop.xlane.xlu0 %747
      %v749 = vsel %vm560, %v735, 0.0
      %750 = vadd.xlane.f32.xlu0 %v749
      %v751 = vpop.xlane.xlu0 %750
      %v752 = vsel %vm560, %v736, 0.0
      %753 = vadd.xlane.f32.xlu0 %v752
      %v754 = vpop.xlane.xlu0 %753
      %v755 = vsel %vm560, %v737, 0.0
      %756 = vadd.xlane.f32.xlu0 %v755
      %v757 = vpop.xlane.xlu0 %756
      %v758 = vsel %vm560, %v738, 0.0
      %759 = vadd.xlane.f32.xlu0 %v758
      %v760 = vpop.xlane.xlu0 %759
      %v761 = vsel %vm560, %v739, 0.0
      %762 = vadd.xlane.f32.xlu0 %v761
      %v763 = vpop.xlane.xlu0 %762
      %v764 = vmul.f32 %v742, %v585
      %v765 = vmul.f32 %v745, %v585
      %v766 = vmul.f32 %v748, %v585
      %v767 = vmul.f32 %v751, %v585
      %v768 = vmul.f32 %v754, %v585
      %v769 = vmul.f32 %v757, %v585
      %v770 = vmul.f32 %v760, %v585
      %v771 = vmul.f32 %v763, %v585
      %v772 = vadd.f32 %v764, 1e-05
      %v773 = vadd.f32 %v765, 1e-05
      %v774 = vadd.f32 %v766, 1e-05
      %v775 = vadd.f32 %v767, 1e-05
      %v776 = vadd.f32 %v768, 1e-05
      %v777 = vadd.f32 %v769, 1e-05
      %v778 = vadd.f32 %v770, 1e-05
      %v779 = vadd.f32 %v771, 1e-05
      %v780 = vrsqrt.pop %v772
      %v781 = vrsqrt.pop %v773
      %v782 = vrsqrt.pop %v774
      %v783 = vrsqrt.pop %v775
      %v784 = vrsqrt.pop %v776
      %v785 = vrsqrt.pop %v777
      %v786 = vrsqrt.pop %v778
      %v787 = vrsqrt.pop %v779
      %v788 = vmul.f32 %v724, %v780
      %v789 = vmul.f32 %v725, %v781
      %v790 = vmul.f32 %v726, %v782
      %v791 = vmul.f32 %v727, %v783
      %v792 = vmul.f32 %v728, %v784
      %v793 = vmul.f32 %v729, %v785
      %v794 = vmul.f32 %v730, %v786
      %v795 = vmul.f32 %v731, %v787
      %v796 = vlaneseq
      %v797 = vshrl.u32 %v796, 7
      %v798 = vsub.s32 0, %v797
      %v799 = vrot.slane %v690, %v798
      %v800 = vmul.f32 %v788, %v799
      %v801 = vmul.f32 %v789, %v799
      %v802 = vmul.f32 %v790, %v799
      %v803 = vmul.f32 %v791, %v799
      %v804 = vmul.f32 %v792, %v799
      %v805 = vmul.f32 %v793, %v799
      %v806 = vmul.f32 %v794, %v799
      %v807 = vmul.f32 %v795, %v799
      %v808 = vlaneseq
      %v809 = vshrl.u32 %v808, 7
      %v810 = vsub.s32 0, %v809
      %v811 = vrot.slane %v691, %v810
      %v812 = vadd.f32 %v800, %v811
      %v813 = vadd.f32 %v801, %v811
      %v814 = vadd.f32 %v802, %v811
      %v815 = vadd.f32 %v803, %v811
      %v816 = vadd.f32 %v804, %v811
      %v817 = vadd.f32 %v805, %v811
      %v818 = vadd.f32 %v806, %v811
      %v819 = vadd.f32 %v807, %v811
      %v820 = vld [vmem:[%s3] sm:$0xff]
      %v821 = vld [vmem:[%s3 + $0x8] sm:$0xff]
      %v822 = vld [vmem:[%s3 + $0x10] sm:$0xff]
      %v823 = vld [vmem:[%s3 + $0x18] sm:$0xff]
      %v824 = vld [vmem:[%s4] sm:$0x1]
      %v826 = vlaneseq
      %v827 = vshrl.u32 %v826, 7
      %v828 = vsub.s32 0, %v827
      %v829 = vrot.slane %v824, %v828
      %v832 = vsel %vm560, %v682, 0
      %v835 = vsel %vm560, %v683, 0
      %v838 = vsel %vm560, %v684, 0
      %v841 = vsel %vm560, %v685, 0
      %v844 = vsel %vm560, %v686, 0
      %v847 = vsel %vm560, %v687, 0
      %v850 = vsel %vm560, %v688, 0
      %v853 = vsel %vm560, %v689, 0
      %855 = vmatprep.subr.mxu0 0.0
      %856 = vmatpush1.msra.mxu0 0.0
      %857 = vmatprep.subr.mxu0 0.0
      %858 = vmatpush1.msra.mxu0 0.0
      %859 = vmatprep.subr.mxu0 0.0
      %860 = vmatpush1.msra.mxu0 0.0
      %861 = vmatprep.subr.mxu0 0.0
      %862 = vmatpush1.msra.mxu0 0.0
      %863 = vmatprep.subr.mxu0 0.0
      %864 = vmatpush1.msra.mxu0 0.0
      %865 = vmatprep.subr.mxu0 0.0
      %866 = vmatpush1.msra.mxu0 0.0
      %867 = vmatprep.subr.mxu0 0.0
      %868 = vmatpush1.msra.mxu0 0.0
      %869 = vmatprep.subr.mxu0 0.0
      %870 = vmatpush1.msra.mxu0 0.0
      %871 = vmatprep.subr.mxu0 0.0
      %872 = vmatpush1.msra.mxu0 0.0
      %873 = vmatprep.subr.mxu0 0.0
      %874 = vmatpush1.msra.mxu0 0.0
      %875 = vmatprep.subr.mxu0 0.0
      %876 = vmatpush1.msra.mxu0 0.0
      %877 = vmatprep.subr.mxu0 0.0
      %878 = vmatpush1.msra.mxu0 0.0
      %879 = vmatprep.subr.mxu0 0.0
      %880 = vmatpush1.msra.mxu0 %v823
      %881 = vmatprep.subr.mxu0 0.0
      %882 = vmatpush1.msra.mxu0 %v822
      %883 = vmatprep.subr.mxu0 0.0
      %884 = vmatpush1.msra.mxu0 %v821
      %885 = vmatprep.subr.mxu0 0.0
      %886 = vmatpush1.msra.mxu0 %v820
      %887 = vmatprep.subr.mxu0 0.0
      %888 = vmatpush2.msra.mxu0 0.0
      %889 = vmatprep.subr.mxu0 0.0
      %890 = vmatpush2.msra.mxu0 0.0
      %891 = vmatprep.subr.mxu0 0.0
      %892 = vmatpush2.msra.mxu0 0.0
      %893 = vmatprep.subr.mxu0 0.0
      %894 = vmatpush2.msra.mxu0 0.0
      %895 = vmatprep.subr.mxu0 0.0
      %896 = vmatpush2.msra.mxu0 0.0
      %897 = vmatprep.subr.mxu0 0.0
      %898 = vmatpush2.msra.mxu0 0.0
      %899 = vmatprep.subr.mxu0 0.0
      %900 = vmatpush2.msra.mxu0 0.0
      %901 = vmatprep.subr.mxu0 0.0
      %902 = vmatpush2.msra.mxu0 0.0
      %903 = vmatprep.subr.mxu0 0.0
      %904 = vmatpush2.msra.mxu0 0.0
      %905 = vmatprep.subr.mxu0 0.0
      %906 = vmatpush2.msra.mxu0 0.0
      %907 = vmatprep.subr.mxu0 0.0
      %908 = vmatpush2.msra.mxu0 0.0
      %909 = vmatprep.subr.mxu0 0.0
      %910 = vmatpush2.msra.mxu0 0.0
      %911 = vmatprep.subr.mxu0 0.0
      %912 = vmatpush2.msra.mxu0 0.0
      %913 = vmatprep.subr.mxu0 0.0
      %914 = vmatpush2.msra.mxu0 0.0
      %915 = vmatprep.subr.mxu0 0.0
      %916 = vmatpush2.msra.mxu0 0.0
      %917 = vmatprep.subr.mxu0 0.0
      %918 = vmatpush2.msra.mxu0 0.0
      %919 = vmatprep.mubr.f32.mxu0 0.0
      %920 = vmatmul.mubr.f32.gmra.mxu0 %v832
      %v921 = vpop.f32.mrf.mxu0
      %v922 = vadd.f32 %v829, %v921
      %v923 = vpop.f32.mrf.mxu0
      %924 = vmatprep.mubr.f32.mxu0 0.0
      %925 = vmatmul.mubr.f32.gmra.mxu0 %v835
      %v926 = vpop.f32.mrf.mxu0
      %v927 = vadd.f32 %v829, %v926
      %v928 = vpop.f32.mrf.mxu0
      %929 = vmatprep.mubr.f32.mxu0 0.0
      %930 = vmatmul.mubr.f32.gmra.mxu0 %v838
      %v931 = vpop.f32.mrf.mxu0
      %v932 = vadd.f32 %v829, %v931
      %v933 = vpop.f32.mrf.mxu0
      %934 = vmatprep.mubr.f32.mxu0 0.0
      %935 = vmatmul.mubr.f32.gmra.mxu0 %v841
      %v936 = vpop.f32.mrf.mxu0
      %v937 = vadd.f32 %v829, %v936
      %v938 = vpop.f32.mrf.mxu0
      %939 = vmatprep.mubr.f32.mxu0 0.0
      %940 = vmatmul.mubr.f32.gmra.mxu0 %v844
      %v941 = vpop.f32.mrf.mxu0
      %v942 = vadd.f32 %v829, %v941
      %v943 = vpop.f32.mrf.mxu0
      %944 = vmatprep.mubr.f32.mxu0 0.0
      %945 = vmatmul.mubr.f32.gmra.mxu0 %v847
      %v946 = vpop.f32.mrf.mxu0
      %v947 = vadd.f32 %v829, %v946
      %v948 = vpop.f32.mrf.mxu0
      %949 = vmatprep.mubr.f32.mxu0 0.0
      %950 = vmatmul.mubr.f32.gmra.mxu0 %v850
      %v951 = vpop.f32.mrf.mxu0
      %v952 = vadd.f32 %v829, %v951
      %v953 = vpop.f32.mrf.mxu0
      %954 = vmatprep.mubr.f32.mxu0 0.0
      %955 = vmatmul.mubr.f32.gmra.mxu0 %v853
      %v956 = vpop.f32.mrf.mxu0
      %v957 = vadd.f32 %v829, %v956
      %v958 = vpop.f32.mrf.mxu0
      %959 = vdwg.mxu0
      %v960 = vld [vmem:[%s5] sm:$0xff]
      %v961 = vld [vmem:[%s5 + $0x8] sm:$0xff]
      %v962 = vld [vmem:[%s5 + $0x10] sm:$0xff]
      %v963 = vld [vmem:[%s5 + $0x18] sm:$0xff]
      %v964 = vld [vmem:[%s6] sm:$0x1]
      %v966 = vlaneseq
      %v967 = vshrl.u32 %v966, 7
      %v968 = vsub.s32 0, %v967
      %v969 = vrot.slane %v964, %v968
      %v972 = vsel %vm560, %v812, 0
      %v975 = vsel %vm560, %v813, 0
      %v978 = vsel %vm560, %v814, 0
      %v981 = vsel %vm560, %v815, 0
      %v984 = vsel %vm560, %v816, 0
      %v987 = vsel %vm560, %v817, 0
      %v990 = vsel %vm560, %v818, 0
      %v993 = vsel %vm560, %v819, 0
      %995 = vmatprep.subr.mxu0 0.0
      %996 = vmatpush1.msra.mxu0 0.0
      %997 = vmatprep.subr.mxu0 0.0
      %998 = vmatpush1.msra.mxu0 0.0
      %999 = vmatprep.subr.mxu0 0.0
      %1000 = vmatpush1.msra.mxu0 0.0
      %1001 = vmatprep.subr.mxu0 0.0
      %1002 = vmatpush1.msra.mxu0 0.0
      %1003 = vmatprep.subr.mxu0 0.0
      %1004 = vmatpush1.msra.mxu0 0.0
      %1005 = vmatprep.subr.mxu0 0.0
      %1006 = vmatpush1.msra.mxu0 0.0
      %1007 = vmatprep.subr.mxu0 0.0
      %1008 = vmatpush1.msra.mxu0 0.0
      %1009 = vmatprep.subr.mxu0 0.0
      %1010 = vmatpush1.msra.mxu0 0.0
      %1011 = vmatprep.subr.mxu0 0.0
      %1012 = vmatpush1.msra.mxu0 0.0
      %1013 = vmatprep.subr.mxu0 0.0
      %1014 = vmatpush1.msra.mxu0 0.0
      %1015 = vmatprep.subr.mxu0 0.0
      %1016 = vmatpush1.msra.mxu0 0.0
      %1017 = vmatprep.subr.mxu0 0.0
      %1018 = vmatpush1.msra.mxu0 0.0
      %1019 = vmatprep.subr.mxu0 0.0
      %1020 = vmatpush1.msra.mxu0 %v963
      %1021 = vmatprep.subr.mxu0 0.0
      %1022 = vmatpush1.msra.mxu0 %v962
      %1023 = vmatprep.subr.mxu0 0.0
      %1024 = vmatpush1.msra.mxu0 %v961
      %1025 = vmatprep.subr.mxu0 0.0
      %1026 = vmatpush1.msra.mxu0 %v960
      %1027 = vmatprep.subr.mxu0 0.0
      %1028 = vmatpush2.msra.mxu0 0.0
      %1029 = vmatprep.subr.mxu0 0.0
      %1030 = vmatpush2.msra.mxu0 0.0
      %1031 = vmatprep.subr.mxu0 0.0
      %1032 = vmatpush2.msra.mxu0 0.0
      %1033 = vmatprep.subr.mxu0 0.0
      %1034 = vmatpush2.msra.mxu0 0.0
      %1035 = vmatprep.subr.mxu0 0.0
      %1036 = vmatpush2.msra.mxu0 0.0
      %1037 = vmatprep.subr.mxu0 0.0
      %1038 = vmatpush2.msra.mxu0 0.0
      %1039 = vmatprep.subr.mxu0 0.0
      %1040 = vmatpush2.msra.mxu0 0.0
      %1041 = vmatprep.subr.mxu0 0.0
      %1042 = vmatpush2.msra.mxu0 0.0
      %1043 = vmatprep.subr.mxu0 0.0
      %1044 = vmatpush2.msra.mxu0 0.0
      %1045 = vmatprep.subr.mxu0 0.0
      %1046 = vmatpush2.msra.mxu0 0.0
      %1047 = vmatprep.subr.mxu0 0.0
      %1048 = vmatpush2.msra.mxu0 0.0
      %1049 = vmatprep.subr.mxu0 0.0
      %1050 = vmatpush2.msra.mxu0 0.0
      %1051 = vmatprep.subr.mxu0 0.0
      %1052 = vmatpush2.msra.mxu0 0.0
      %1053 = vmatprep.subr.mxu0 0.0
      %1054 = vmatpush2.msra.mxu0 0.0
      %1055 = vmatprep.subr.mxu0 0.0
      %1056 = vmatpush2.msra.mxu0 0.0
      %1057 = vmatprep.subr.mxu0 0.0
      %1058 = vmatpush2.msra.mxu0 0.0
      %1059 = vmatprep.mubr.f32.mxu0 0.0
      %1060 = vmatmul.mubr.f32.gmra.mxu0 %v972
      %v1061 = vpop.f32.mrf.mxu0
      %v1062 = vadd.f32 %v969, %v1061
      %v1063 = vpop.f32.mrf.mxu0
      %1064 = vmatprep.mubr.f32.mxu0 0.0
      %1065 = vmatmul.mubr.f32.gmra.mxu0 %v975
      %v1066 = vpop.f32.mrf.mxu0
      %v1067 = vadd.f32 %v969, %v1066
      %v1068 = vpop.f32.mrf.mxu0
      %1069 = vmatprep.mubr.f32.mxu0 0.0
      %1070 = vmatmul.mubr.f32.gmra.mxu0 %v978
      %v1071 = vpop.f32.mrf.mxu0
      %v1072 = vadd.f32 %v969, %v1071
      %v1073 = vpop.f32.mrf.mxu0
      %1074 = vmatprep.mubr.f32.mxu0 0.0
      %1075 = vmatmul.mubr.f32.gmra.mxu0 %v981
      %v1076 = vpop.f32.mrf.mxu0
      %v1077 = vadd.f32 %v969, %v1076
      %v1078 = vpop.f32.mrf.mxu0
      %1079 = vmatprep.mubr.f32.mxu0 0.0
      %1080 = vmatmul.mubr.f32.gmra.mxu0 %v984
      %v1081 = vpop.f32.mrf.mxu0
      %v1082 = vadd.f32 %v969, %v1081
      %v1083 = vpop.f32.mrf.mxu0
      %1084 = vmatprep.mubr.f32.mxu0 0.0
      %1085 = vmatmul.mubr.f32.gmra.mxu0 %v987
      %v1086 = vpop.f32.mrf.mxu0
      %v1087 = vadd.f32 %v969, %v1086
      %v1088 = vpop.f32.mrf.mxu0
      %1089 = vmatprep.mubr.f32.mxu0 0.0
      %1090 = vmatmul.mubr.f32.gmra.mxu0 %v990
      %v1091 = vpop.f32.mrf.mxu0
      %v1092 = vadd.f32 %v969, %v1091
      %v1093 = vpop.f32.mrf.mxu0
      %1094 = vmatprep.mubr.f32.mxu0 0.0
      %1095 = vmatmul.mubr.f32.gmra.mxu0 %v993
      %v1096 = vpop.f32.mrf.mxu0
      %v1097 = vadd.f32 %v969, %v1096
      %v1098 = vpop.f32.mrf.mxu0
      %1099 = vdwg.mxu0
      %s1100 = scalar_lea.vmem %s7, 256
      %v1101 = vld [vmem:[%s1100] sm:$0xff]
      %v1102 = vld [vmem:[%s1100 + $0x8] sm:$0xff]
      %v1103 = vld [vmem:[%s1100 + $0x10] sm:$0xff]
      %v1104 = vld [vmem:[%s1100 + $0x18] sm:$0xff]
      %v1105 = vld [vmem:[%s1100 + $0x20] sm:$0xff]
      %v1106 = vld [vmem:[%s1100 + $0x28] sm:$0xff]
      %v1107 = vld [vmem:[%s1100 + $0x30] sm:$0xff]
      %v1108 = vld [vmem:[%s1100 + $0x38] sm:$0xff]
      %v1109 = vmul.f32 %v922, 0.35355338
      %v1110 = vmul.f32 %v927, 0.35355338
      %v1111 = vmul.f32 %v932, 0.35355338
      %v1112 = vmul.f32 %v937, 0.35355338
      %v1113 = vmul.f32 %v942, 0.35355338
      %v1114 = vmul.f32 %v947, 0.35355338
      %v1115 = vmul.f32 %v952, 0.35355338
      %v1116 = vmul.f32 %v957, 0.35355338
      %v1117 = vmul.f32 %v1062, 0.35355338
      %v1118 = vmul.f32 %v1067, 0.35355338
      %v1119 = vmul.f32 %v1072, 0.35355338
      %v1120 = vmul.f32 %v1077, 0.35355338
      %v1121 = vmul.f32 %v1082, 0.35355338
      %v1122 = vmul.f32 %v1087, 0.35355338
      %v1123 = vmul.f32 %v1092, 0.35355338
      %v1124 = vmul.f32 %v1097, 0.35355338
      %v1125 = vld [vmem:[%s7] sm:$0xff]
      %v1126 = vld [vmem:[%s7 + $0x8] sm:$0xff]
      %v1127 = vld [vmem:[%s7 + $0x10] sm:$0xff]
      %v1128 = vld [vmem:[%s7 + $0x18] sm:$0xff]
      %v1129 = vld [vmem:[%s7 + $0x20] sm:$0xff]
      %v1130 = vld [vmem:[%s7 + $0x28] sm:$0xff]
      %v1131 = vld [vmem:[%s7 + $0x30] sm:$0xff]
      %v1132 = vld [vmem:[%s7 + $0x38] sm:$0xff]
      %1141 = vrot.lane.b32.xlu0 %v922, 96
      %v1142 = vpop.permute.xlu0 %1141
      %1143 = vrot.lane.b32.xlu0 %v927, 96
      %v1144 = vpop.permute.xlu0 %1143
      %1145 = vrot.lane.b32.xlu0 %v932, 96
      %v1146 = vpop.permute.xlu0 %1145
      %1147 = vrot.lane.b32.xlu0 %v937, 96
      %v1148 = vpop.permute.xlu0 %1147
      %1149 = vrot.lane.b32.xlu0 %v942, 96
      %v1150 = vpop.permute.xlu0 %1149
      %1151 = vrot.lane.b32.xlu0 %v947, 96
      %v1152 = vpop.permute.xlu0 %1151
      %1153 = vrot.lane.b32.xlu0 %v952, 96
      %v1154 = vpop.permute.xlu0 %1153
      %1155 = vrot.lane.b32.xlu0 %v957, 96
      %v1156 = vpop.permute.xlu0 %1155
      %vm1157 = vcmask 64512
      %v1159 = vsel %vm1157, %v1109, 0
      %v1162 = vsel %vm1157, %v1110, 0
      %v1165 = vsel %vm1157, %v1111, 0
      %v1168 = vsel %vm1157, %v1112, 0
      %v1171 = vsel %vm1157, %v1113, 0
      %v1174 = vsel %vm1157, %v1114, 0
      %v1177 = vsel %vm1157, %v1115, 0
      %v1180 = vsel %vm1157, %v1116, 0
      %v1182 = vsel %vm1157, %v1142, 0
      %v1184 = vsel %vm1157, %v1144, 0
      %v1186 = vsel %vm1157, %v1146, 0
      %v1188 = vsel %vm1157, %v1148, 0
      %v1190 = vsel %vm1157, %v1150, 0
      %v1192 = vsel %vm1157, %v1152, 0
      %v1194 = vsel %vm1157, %v1154, 0
      %v1196 = vsel %vm1157, %v1156, 0
      %1198 = vmatprep.subr.mxu0 0.0
      %1199 = vmatpush1.xpose.msra.mxu0 0.0
      %1200 = vmatprep.subr.mxu0 0.0
      %1201 = vmatpush1.xpose.msra.mxu0 0.0
      %1202 = vmatprep.subr.mxu0 0.0
      %1203 = vmatpush1.xpose.msra.mxu0 0.0
      %1204 = vmatprep.subr.mxu0 0.0
      %1205 = vmatpush1.xpose.msra.mxu0 0.0
      %1206 = vmatprep.subr.mxu0 0.0
      %1207 = vmatpush1.xpose.msra.mxu0 0.0
      %1208 = vmatprep.subr.mxu0 0.0
      %1209 = vmatpush1.xpose.msra.mxu0 0.0
      %1210 = vmatprep.subr.mxu0 0.0
      %1211 = vmatpush1.xpose.msra.mxu0 0.0
      %1212 = vmatprep.subr.mxu0 0.0
      %1213 = vmatpush1.xpose.msra.mxu0 0.0
      %1214 = vmatprep.subr.mxu0 0.0
      %1215 = vmatpush1.xpose.msra.mxu0 %v1196
      %1216 = vmatprep.subr.mxu0 0.0
      %1217 = vmatpush1.xpose.msra.mxu0 %v1194
      %1218 = vmatprep.subr.mxu0 0.0
      %1219 = vmatpush1.xpose.msra.mxu0 %v1192
      %1220 = vmatprep.subr.mxu0 0.0
      %1221 = vmatpush1.xpose.msra.mxu0 %v1190
      %1222 = vmatprep.subr.mxu0 0.0
      %1223 = vmatpush1.xpose.msra.mxu0 %v1188
      %1224 = vmatprep.subr.mxu0 0.0
      %1225 = vmatpush1.xpose.msra.mxu0 %v1186
      %1226 = vmatprep.subr.mxu0 0.0
      %1227 = vmatpush1.xpose.msra.mxu0 %v1184
      %1228 = vmatprep.subr.mxu0 0.0
      %1229 = vmatpush1.xpose.msra.mxu0 %v1182
      %1230 = vmatprep.subr.mxu0 0.0
      %1231 = vmatpush2.xpose.msra.mxu0 0.0
      %1232 = vmatprep.subr.mxu0 0.0
      %1233 = vmatpush2.xpose.msra.mxu0 0.0
      %1234 = vmatprep.subr.mxu0 0.0
      %1235 = vmatpush2.xpose.msra.mxu0 0.0
      %1236 = vmatprep.subr.mxu0 0.0
      %1237 = vmatpush2.xpose.msra.mxu0 0.0
      %1238 = vmatprep.subr.mxu0 0.0
      %1239 = vmatpush2.xpose.msra.mxu0 0.0
      %1240 = vmatprep.subr.mxu0 0.0
      %1241 = vmatpush2.xpose.msra.mxu0 0.0
      %1242 = vmatprep.subr.mxu0 0.0
      %1243 = vmatpush2.xpose.msra.mxu0 0.0
      %1244 = vmatprep.subr.mxu0 0.0
      %1245 = vmatpush2.xpose.msra.mxu0 0.0
      %1246 = vmatprep.subr.mxu0 0.0
      %1247 = vmatpush2.xpose.msra.mxu0 0.0
      %1248 = vmatprep.subr.mxu0 0.0
      %1249 = vmatpush2.xpose.msra.mxu0 0.0
      %1250 = vmatprep.subr.mxu0 0.0
      %1251 = vmatpush2.xpose.msra.mxu0 0.0
      %1252 = vmatprep.subr.mxu0 0.0
      %1253 = vmatpush2.xpose.msra.mxu0 0.0
      %1254 = vmatprep.subr.mxu0 0.0
      %1255 = vmatpush2.xpose.msra.mxu0 0.0
      %1256 = vmatprep.subr.mxu0 0.0
      %1257 = vmatpush2.xpose.msra.mxu0 0.0
      %1258 = vmatprep.subr.mxu0 0.0
      %1259 = vmatpush2.xpose.msra.mxu0 0.0
      %1260 = vmatprep.subr.mxu0 0.0
      %1261 = vmatpush2.xpose.msra.mxu0 0.0
      %1262 = vmatprep.mubr.f32.mxu0 0.0
      %1263 = vmatmul.mubr.f32.gmra.mxu0 %v1159
      %v1264 = vpop.f32.mrf.mxu0
      %v1265 = vadd.f32 %v1125, %v1264
      %v1266 = vpop.f32.mrf.mxu0
      %1267 = vmatprep.mubr.f32.mxu0 0.0
      %1268 = vmatmul.mubr.f32.gmra.mxu0 %v1162
      %v1269 = vpop.f32.mrf.mxu0
      %v1270 = vadd.f32 %v1126, %v1269
      %v1271 = vpop.f32.mrf.mxu0
      %1272 = vmatprep.mubr.f32.mxu0 0.0
      %1273 = vmatmul.mubr.f32.gmra.mxu0 %v1165
      %v1274 = vpop.f32.mrf.mxu0
      %v1275 = vadd.f32 %v1127, %v1274
      %v1276 = vpop.f32.mrf.mxu0
      %1277 = vmatprep.mubr.f32.mxu0 0.0
      %1278 = vmatmul.mubr.f32.gmra.mxu0 %v1168
      %v1279 = vpop.f32.mrf.mxu0
      %v1280 = vadd.f32 %v1128, %v1279
      %v1281 = vpop.f32.mrf.mxu0
      %1282 = vmatprep.mubr.f32.mxu0 0.0
      %1283 = vmatmul.mubr.f32.gmra.mxu0 %v1171
      %v1284 = vpop.f32.mrf.mxu0
      %v1285 = vadd.f32 %v1129, %v1284
      %v1286 = vpop.f32.mrf.mxu0
      %1287 = vmatprep.mubr.f32.mxu0 0.0
      %1288 = vmatmul.mubr.f32.gmra.mxu0 %v1174
      %v1289 = vpop.f32.mrf.mxu0
      %v1290 = vadd.f32 %v1130, %v1289
      %v1291 = vpop.f32.mrf.mxu0
      %1292 = vmatprep.mubr.f32.mxu0 0.0
      %1293 = vmatmul.mubr.f32.gmra.mxu0 %v1177
      %v1294 = vpop.f32.mrf.mxu0
      %v1295 = vadd.f32 %v1131, %v1294
      %v1296 = vpop.f32.mrf.mxu0
      %1297 = vmatprep.mubr.f32.mxu0 0.0
      %1298 = vmatmul.mubr.f32.gmra.mxu0 %v1180
      %v1299 = vpop.f32.mrf.mxu0
      %v1300 = vadd.f32 %v1132, %v1299
      %v1301 = vpop.f32.mrf.mxu0
      %1302 = vdwg.mxu0
      %1311 = vrot.lane.b32.xlu0 %v1062, 96
      %v1312 = vpop.permute.xlu0 %1311
      %1313 = vrot.lane.b32.xlu0 %v1067, 96
      %v1314 = vpop.permute.xlu0 %1313
      %1315 = vrot.lane.b32.xlu0 %v1072, 96
      %v1316 = vpop.permute.xlu0 %1315
      %1317 = vrot.lane.b32.xlu0 %v1077, 96
      %v1318 = vpop.permute.xlu0 %1317
      %1319 = vrot.lane.b32.xlu0 %v1082, 96
      %v1320 = vpop.permute.xlu0 %1319
      %1321 = vrot.lane.b32.xlu0 %v1087, 96
      %v1322 = vpop.permute.xlu0 %1321
      %1323 = vrot.lane.b32.xlu0 %v1092, 96
      %v1324 = vpop.permute.xlu0 %1323
      %1325 = vrot.lane.b32.xlu0 %v1097, 96
      %v1326 = vpop.permute.xlu0 %1325
      %v1328 = vsel %vm1157, %v1117, 0
      %v1331 = vsel %vm1157, %v1118, 0
      %v1334 = vsel %vm1157, %v1119, 0
      %v1337 = vsel %vm1157, %v1120, 0
      %v1340 = vsel %vm1157, %v1121, 0
      %v1343 = vsel %vm1157, %v1122, 0
      %v1346 = vsel %vm1157, %v1123, 0
      %v1349 = vsel %vm1157, %v1124, 0
      %v1351 = vsel %vm1157, %v1312, 0
      %v1353 = vsel %vm1157, %v1314, 0
      %v1355 = vsel %vm1157, %v1316, 0
      %v1357 = vsel %vm1157, %v1318, 0
      %v1359 = vsel %vm1157, %v1320, 0
      %v1361 = vsel %vm1157, %v1322, 0
      %v1363 = vsel %vm1157, %v1324, 0
      %v1365 = vsel %vm1157, %v1326, 0
      %1367 = vmatprep.subr.mxu0 0.0
      %1368 = vmatpush1.xpose.msra.mxu0 0.0
      %1369 = vmatprep.subr.mxu0 0.0
      %1370 = vmatpush1.xpose.msra.mxu0 0.0
      %1371 = vmatprep.subr.mxu0 0.0
      %1372 = vmatpush1.xpose.msra.mxu0 0.0
      %1373 = vmatprep.subr.mxu0 0.0
      %1374 = vmatpush1.xpose.msra.mxu0 0.0
      %1375 = vmatprep.subr.mxu0 0.0
      %1376 = vmatpush1.xpose.msra.mxu0 0.0
      %1377 = vmatprep.subr.mxu0 0.0
      %1378 = vmatpush1.xpose.msra.mxu0 0.0
      %1379 = vmatprep.subr.mxu0 0.0
      %1380 = vmatpush1.xpose.msra.mxu0 0.0
      %1381 = vmatprep.subr.mxu0 0.0
      %1382 = vmatpush1.xpose.msra.mxu0 0.0
      %1383 = vmatprep.subr.mxu0 0.0
      %1384 = vmatpush1.xpose.msra.mxu0 %v1365
      %1385 = vmatprep.subr.mxu0 0.0
      %1386 = vmatpush1.xpose.msra.mxu0 %v1363
      %1387 = vmatprep.subr.mxu0 0.0
      %1388 = vmatpush1.xpose.msra.mxu0 %v1361
      %1389 = vmatprep.subr.mxu0 0.0
      %1390 = vmatpush1.xpose.msra.mxu0 %v1359
      %1391 = vmatprep.subr.mxu0 0.0
      %1392 = vmatpush1.xpose.msra.mxu0 %v1357
      %1393 = vmatprep.subr.mxu0 0.0
      %1394 = vmatpush1.xpose.msra.mxu0 %v1355
      %1395 = vmatprep.subr.mxu0 0.0
      %1396 = vmatpush1.xpose.msra.mxu0 %v1353
      %1397 = vmatprep.subr.mxu0 0.0
      %1398 = vmatpush1.xpose.msra.mxu0 %v1351
      %1399 = vmatprep.subr.mxu0 0.0
      %1400 = vmatpush2.xpose.msra.mxu0 0.0
      %1401 = vmatprep.subr.mxu0 0.0
      %1402 = vmatpush2.xpose.msra.mxu0 0.0
      %1403 = vmatprep.subr.mxu0 0.0
      %1404 = vmatpush2.xpose.msra.mxu0 0.0
      %1405 = vmatprep.subr.mxu0 0.0
      %1406 = vmatpush2.xpose.msra.mxu0 0.0
      %1407 = vmatprep.subr.mxu0 0.0
      %1408 = vmatpush2.xpose.msra.mxu0 0.0
      %1409 = vmatprep.subr.mxu0 0.0
      %1410 = vmatpush2.xpose.msra.mxu0 0.0
      %1411 = vmatprep.subr.mxu0 0.0
      %1412 = vmatpush2.xpose.msra.mxu0 0.0
      %1413 = vmatprep.subr.mxu0 0.0
      %1414 = vmatpush2.xpose.msra.mxu0 0.0
      %1415 = vmatprep.subr.mxu0 0.0
      %1416 = vmatpush2.xpose.msra.mxu0 0.0
      %1417 = vmatprep.subr.mxu0 0.0
      %1418 = vmatpush2.xpose.msra.mxu0 0.0
      %1419 = vmatprep.subr.mxu0 0.0
      %1420 = vmatpush2.xpose.msra.mxu0 0.0
      %1421 = vmatprep.subr.mxu0 0.0
      %1422 = vmatpush2.xpose.msra.mxu0 0.0
      %1423 = vmatprep.subr.mxu0 0.0
      %1424 = vmatpush2.xpose.msra.mxu0 0.0
      %1425 = vmatprep.subr.mxu0 0.0
      %1426 = vmatpush2.xpose.msra.mxu0 0.0
      %1427 = vmatprep.subr.mxu0 0.0
      %1428 = vmatpush2.xpose.msra.mxu0 0.0
      %1429 = vmatprep.subr.mxu0 0.0
      %1430 = vmatpush2.xpose.msra.mxu0 0.0
      %1431 = vmatprep.mubr.f32.mxu0 0.0
      %1432 = vmatmul.mubr.f32.gmra.mxu0 %v1328
      %v1433 = vpop.f32.mrf.mxu0
      %v1434 = vadd.f32 %v1125, %v1433
      %v1435 = vpop.f32.mrf.mxu0
      %1436 = vmatprep.mubr.f32.mxu0 0.0
      %1437 = vmatmul.mubr.f32.gmra.mxu0 %v1331
      %v1438 = vpop.f32.mrf.mxu0
      %v1439 = vadd.f32 %v1126, %v1438
      %v1440 = vpop.f32.mrf.mxu0
      %1441 = vmatprep.mubr.f32.mxu0 0.0
      %1442 = vmatmul.mubr.f32.gmra.mxu0 %v1334
      %v1443 = vpop.f32.mrf.mxu0
      %v1444 = vadd.f32 %v1127, %v1443
      %v1445 = vpop.f32.mrf.mxu0
      %1446 = vmatprep.mubr.f32.mxu0 0.0
      %1447 = vmatmul.mubr.f32.gmra.mxu0 %v1337
      %v1448 = vpop.f32.mrf.mxu0
      %v1449 = vadd.f32 %v1128, %v1448
      %v1450 = vpop.f32.mrf.mxu0
      %1451 = vmatprep.mubr.f32.mxu0 0.0
      %1452 = vmatmul.mubr.f32.gmra.mxu0 %v1340
      %v1453 = vpop.f32.mrf.mxu0
      %v1454 = vadd.f32 %v1129, %v1453
      %v1455 = vpop.f32.mrf.mxu0
      %1456 = vmatprep.mubr.f32.mxu0 0.0
      %1457 = vmatmul.mubr.f32.gmra.mxu0 %v1343
      %v1458 = vpop.f32.mrf.mxu0
      %v1459 = vadd.f32 %v1130, %v1458
      %v1460 = vpop.f32.mrf.mxu0
      %1461 = vmatprep.mubr.f32.mxu0 0.0
      %1462 = vmatmul.mubr.f32.gmra.mxu0 %v1346
      %v1463 = vpop.f32.mrf.mxu0
      %v1464 = vadd.f32 %v1131, %v1463
      %v1465 = vpop.f32.mrf.mxu0
      %1466 = vmatprep.mubr.f32.mxu0 0.0
      %1467 = vmatmul.mubr.f32.gmra.mxu0 %v1349
      %v1468 = vpop.f32.mrf.mxu0
      %v1469 = vadd.f32 %v1132, %v1468
      %v1470 = vpop.f32.mrf.mxu0
      %1471 = vdwg.mxu0
      %v1472 = vmul.f32 %v1265, %v1434
      %v1473 = vmul.f32 %v1270, %v1439
      %v1474 = vmul.f32 %v1275, %v1444
      %v1475 = vmul.f32 %v1280, %v1449
      %v1476 = vmul.f32 %v1285, %v1454
      %v1477 = vmul.f32 %v1290, %v1459
      %v1478 = vmul.f32 %v1295, %v1464
      %v1479 = vmul.f32 %v1300, %v1469
      %v1480 = vadd.f32 %v1472, %v1101
      %v1481 = vadd.f32 %v1473, %v1102
      %v1482 = vadd.f32 %v1474, %v1103
      %v1483 = vadd.f32 %v1475, %v1104
      %v1484 = vadd.f32 %v1476, %v1105
      %v1485 = vadd.f32 %v1477, %v1106
      %v1486 = vadd.f32 %v1478, %v1107
      %v1487 = vadd.f32 %v1479, %v1108
      %vm1488 = vcmask 523264
      %v1489 = vsel %vm1488, %v1480, -inf
      %1490 = vmax.xlane.f32.xlu0 %v1489
      %v1491 = vpop.xlane.xlu0 %1490
      %v1492 = vsel %vm1488, %v1481, -inf
      %1493 = vmax.xlane.f32.xlu0 %v1492
      %v1494 = vpop.xlane.xlu0 %1493
      %v1495 = vsel %vm1488, %v1482, -inf
      %1496 = vmax.xlane.f32.xlu0 %v1495
      %v1497 = vpop.xlane.xlu0 %1496
      %v1498 = vsel %vm1488, %v1483, -inf
      %1499 = vmax.xlane.f32.xlu0 %v1498
      %v1500 = vpop.xlane.xlu0 %1499
      %v1501 = vsel %vm1488, %v1484, -inf
      %1502 = vmax.xlane.f32.xlu0 %v1501
      %v1503 = vpop.xlane.xlu0 %1502
      %v1504 = vsel %vm1488, %v1485, -inf
      %1505 = vmax.xlane.f32.xlu0 %v1504
      %v1506 = vpop.xlane.xlu0 %1505
      %v1507 = vsel %vm1488, %v1486, -inf
      %1508 = vmax.xlane.f32.xlu0 %v1507
      %v1509 = vpop.xlane.xlu0 %1508
      %v1510 = vsel %vm1488, %v1487, -inf
      %1511 = vmax.xlane.f32.xlu0 %v1510
      %v1512 = vpop.xlane.xlu0 %1511
      %v1513 = vsub.f32 %v1480, %v1491
      %v1514 = vsub.f32 %v1481, %v1494
      %v1515 = vsub.f32 %v1482, %v1497
      %v1516 = vsub.f32 %v1483, %v1500
      %v1517 = vsub.f32 %v1484, %v1503
      %v1518 = vsub.f32 %v1485, %v1506
      %v1519 = vsub.f32 %v1486, %v1509
      %v1520 = vsub.f32 %v1487, %v1512
      %v1521 = vmul.f32 %v1513, 1.442695
      %v1522 = vpow.pop %v1521
      %v1523 = vmul.f32 %v1514, 1.442695
      %v1524 = vpow.pop %v1523
      %v1525 = vmul.f32 %v1515, 1.442695
      %v1526 = vpow.pop %v1525
      %v1527 = vmul.f32 %v1516, 1.442695
      %v1528 = vpow.pop %v1527
      %v1529 = vmul.f32 %v1517, 1.442695
      %v1530 = vpow.pop %v1529
      %v1531 = vmul.f32 %v1518, 1.442695
      %v1532 = vpow.pop %v1531
      %v1533 = vmul.f32 %v1519, 1.442695
      %v1534 = vpow.pop %v1533
      %v1535 = vmul.f32 %v1520, 1.442695
      %v1536 = vpow.pop %v1535
      %v1537 = vsel %vm1488, %v1522, 0.0
      %1538 = vadd.xlane.f32.xlu0 %v1537
      %v1539 = vpop.xlane.xlu0 %1538
      %v1540 = vsel %vm1488, %v1524, 0.0
      %1541 = vadd.xlane.f32.xlu0 %v1540
      %v1542 = vpop.xlane.xlu0 %1541
      %v1543 = vsel %vm1488, %v1526, 0.0
      %1544 = vadd.xlane.f32.xlu0 %v1543
      %v1545 = vpop.xlane.xlu0 %1544
      %v1546 = vsel %vm1488, %v1528, 0.0
      %1547 = vadd.xlane.f32.xlu0 %v1546
      %v1548 = vpop.xlane.xlu0 %1547
      %v1549 = vsel %vm1488, %v1530, 0.0
      %1550 = vadd.xlane.f32.xlu0 %v1549
      %v1551 = vpop.xlane.xlu0 %1550
      %v1552 = vsel %vm1488, %v1532, 0.0
      %1553 = vadd.xlane.f32.xlu0 %v1552
      %v1554 = vpop.xlane.xlu0 %1553
      %v1555 = vsel %vm1488, %v1534, 0.0
      %1556 = vadd.xlane.f32.xlu0 %v1555
      %v1557 = vpop.xlane.xlu0 %1556
      %v1558 = vsel %vm1488, %v1536, 0.0
      %1559 = vadd.xlane.f32.xlu0 %v1558
      %v1560 = vpop.xlane.xlu0 %1559
      %v1561 = vrcp.pop %v1539
      %v1562 = vrcp.pop %v1542
      %v1563 = vrcp.pop %v1545
      %v1564 = vrcp.pop %v1548
      %v1565 = vrcp.pop %v1551
      %v1566 = vrcp.pop %v1554
      %v1567 = vrcp.pop %v1557
      %v1568 = vrcp.pop %v1560
      %v1569 = vmul.f32 %v1522, %v1561
      %v1570 = vmul.f32 %v1524, %v1562
      %v1571 = vmul.f32 %v1526, %v1563
      %v1572 = vmul.f32 %v1528, %v1564
      %v1573 = vmul.f32 %v1530, %v1565
      %v1574 = vmul.f32 %v1532, %v1566
      %v1575 = vmul.f32 %v1534, %v1567
      %v1576 = vmul.f32 %v1536, %v1568
      %1577 = vrot.lane.b32.xlu0 %v922, 64
      %v1578 = vpop.permute.xlu0 %1577
      %1579 = vrot.lane.b32.xlu0 %v927, 64
      %v1580 = vpop.permute.xlu0 %1579
      %1581 = vrot.lane.b32.xlu0 %v932, 64
      %v1582 = vpop.permute.xlu0 %1581
      %1583 = vrot.lane.b32.xlu0 %v937, 64
      %v1584 = vpop.permute.xlu0 %1583
      %1585 = vrot.lane.b32.xlu0 %v942, 64
      %v1586 = vpop.permute.xlu0 %1585
      %1587 = vrot.lane.b32.xlu0 %v947, 64
      %v1588 = vpop.permute.xlu0 %1587
      %1589 = vrot.lane.b32.xlu0 %v952, 64
      %v1590 = vpop.permute.xlu0 %1589
      %1591 = vrot.lane.b32.xlu0 %v957, 64
      %v1592 = vpop.permute.xlu0 %1591
      %v1602 = vsel %vm1488, %v1569, 0
      %v1605 = vsel %vm1488, %v1570, 0
      %v1608 = vsel %vm1488, %v1571, 0
      %v1611 = vsel %vm1488, %v1572, 0
      %v1614 = vsel %vm1488, %v1573, 0
      %v1617 = vsel %vm1488, %v1574, 0
      %v1620 = vsel %vm1488, %v1575, 0
      %v1623 = vsel %vm1488, %v1576, 0
      %1625 = vmatprep.subr.mxu0 0.0
      %1626 = vmatpush1.msra.mxu0 0.0
      %1627 = vmatprep.subr.mxu0 0.0
      %1628 = vmatpush1.msra.mxu0 0.0
      %1629 = vmatprep.subr.mxu0 0.0
      %1630 = vmatpush1.msra.mxu0 0.0
      %1631 = vmatprep.subr.mxu0 0.0
      %1632 = vmatpush1.msra.mxu0 0.0
      %1633 = vmatprep.subr.mxu0 0.0
      %1634 = vmatpush1.msra.mxu0 0.0
      %1635 = vmatprep.subr.mxu0 0.0
      %1636 = vmatpush1.msra.mxu0 0.0
      %1637 = vmatprep.subr.mxu0 0.0
      %1638 = vmatpush1.msra.mxu0 0.0
      %1639 = vmatprep.subr.mxu0 0.0
      %1640 = vmatpush1.msra.mxu0 0.0
      %1641 = vmatprep.subr.mxu0 0.0
      %1642 = vmatpush1.msra.mxu0 %v1592
      %1643 = vmatprep.subr.mxu0 0.0
      %1644 = vmatpush1.msra.mxu0 %v1590
      %1645 = vmatprep.subr.mxu0 0.0
      %1646 = vmatpush1.msra.mxu0 %v1588
      %1647 = vmatprep.subr.mxu0 0.0
      %1648 = vmatpush1.msra.mxu0 %v1586
      %1649 = vmatprep.subr.mxu0 0.0
      %1650 = vmatpush1.msra.mxu0 %v1584
      %1651 = vmatprep.subr.mxu0 0.0
      %1652 = vmatpush1.msra.mxu0 %v1582
      %1653 = vmatprep.subr.mxu0 0.0
      %1654 = vmatpush1.msra.mxu0 %v1580
      %1655 = vmatprep.subr.mxu0 0.0
      %1656 = vmatpush1.msra.mxu0 %v1578
      %1657 = vmatprep.subr.mxu0 0.0
      %1658 = vmatpush2.msra.mxu0 0.0
      %1659 = vmatprep.subr.mxu0 0.0
      %1660 = vmatpush2.msra.mxu0 0.0
      %1661 = vmatprep.subr.mxu0 0.0
      %1662 = vmatpush2.msra.mxu0 0.0
      %1663 = vmatprep.subr.mxu0 0.0
      %1664 = vmatpush2.msra.mxu0 0.0
      %1665 = vmatprep.subr.mxu0 0.0
      %1666 = vmatpush2.msra.mxu0 0.0
      %1667 = vmatprep.subr.mxu0 0.0
      %1668 = vmatpush2.msra.mxu0 0.0
      %1669 = vmatprep.subr.mxu0 0.0
      %1670 = vmatpush2.msra.mxu0 0.0
      %1671 = vmatprep.subr.mxu0 0.0
      %1672 = vmatpush2.msra.mxu0 0.0
      %1673 = vmatprep.subr.mxu0 0.0
      %1674 = vmatpush2.msra.mxu0 0.0
      %1675 = vmatprep.subr.mxu0 0.0
      %1676 = vmatpush2.msra.mxu0 0.0
      %1677 = vmatprep.subr.mxu0 0.0
      %1678 = vmatpush2.msra.mxu0 0.0
      %1679 = vmatprep.subr.mxu0 0.0
      %1680 = vmatpush2.msra.mxu0 0.0
      %1681 = vmatprep.subr.mxu0 0.0
      %1682 = vmatpush2.msra.mxu0 0.0
      %1683 = vmatprep.subr.mxu0 0.0
      %1684 = vmatpush2.msra.mxu0 0.0
      %1685 = vmatprep.subr.mxu0 0.0
      %1686 = vmatpush2.msra.mxu0 0.0
      %1687 = vmatprep.subr.mxu0 0.0
      %1688 = vmatpush2.msra.mxu0 0.0
      %1689 = vmatprep.mubr.f32.mxu0 0.0
      %1690 = vmatmul.mubr.f32.gmra.mxu0 %v1602
      %v1691 = vpop.f32.mrf.mxu0
      %v1692 = vadd.f32 0.0, %v1691
      %v1693 = vpop.f32.mrf.mxu0
      %1694 = vmatprep.mubr.f32.mxu0 0.0
      %1695 = vmatmul.mubr.f32.gmra.mxu0 %v1605
      %v1696 = vpop.f32.mrf.mxu0
      %v1697 = vadd.f32 0.0, %v1696
      %v1698 = vpop.f32.mrf.mxu0
      %1699 = vmatprep.mubr.f32.mxu0 0.0
      %1700 = vmatmul.mubr.f32.gmra.mxu0 %v1608
      %v1701 = vpop.f32.mrf.mxu0
      %v1702 = vadd.f32 0.0, %v1701
      %v1703 = vpop.f32.mrf.mxu0
      %1704 = vmatprep.mubr.f32.mxu0 0.0
      %1705 = vmatmul.mubr.f32.gmra.mxu0 %v1611
      %v1706 = vpop.f32.mrf.mxu0
      %v1707 = vadd.f32 0.0, %v1706
      %v1708 = vpop.f32.mrf.mxu0
      %1709 = vmatprep.mubr.f32.mxu0 0.0
      %1710 = vmatmul.mubr.f32.gmra.mxu0 %v1614
      %v1711 = vpop.f32.mrf.mxu0
      %v1712 = vadd.f32 0.0, %v1711
      %v1713 = vpop.f32.mrf.mxu0
      %1714 = vmatprep.mubr.f32.mxu0 0.0
      %1715 = vmatmul.mubr.f32.gmra.mxu0 %v1617
      %v1716 = vpop.f32.mrf.mxu0
      %v1717 = vadd.f32 0.0, %v1716
      %v1718 = vpop.f32.mrf.mxu0
      %1719 = vmatprep.mubr.f32.mxu0 0.0
      %1720 = vmatmul.mubr.f32.gmra.mxu0 %v1620
      %v1721 = vpop.f32.mrf.mxu0
      %v1722 = vadd.f32 0.0, %v1721
      %v1723 = vpop.f32.mrf.mxu0
      %1724 = vmatprep.mubr.f32.mxu0 0.0
      %1725 = vmatmul.mubr.f32.gmra.mxu0 %v1623
      %v1726 = vpop.f32.mrf.mxu0
      %v1727 = vadd.f32 0.0, %v1726
      %v1728 = vpop.f32.mrf.mxu0
      %1729 = vdwg.mxu0
      %v1730 = vld [vmem:[%s8] sm:$0xff]
      %s1731 = scalar_lea.vmem %s7, 64
      %v1732 = vld [vmem:[%s1731] sm:$0xff]
      %v1733 = vld [vmem:[%s1731 + $0x8] sm:$0xff]
      %v1734 = vld [vmem:[%s1731 + $0x10] sm:$0xff]
      %v1735 = vld [vmem:[%s1731 + $0x18] sm:$0xff]
      %v1736 = vld [vmem:[%s1731 + $0x20] sm:$0xff]
      %v1737 = vld [vmem:[%s1731 + $0x28] sm:$0xff]
      %v1738 = vld [vmem:[%s1731 + $0x30] sm:$0xff]
      %v1739 = vld [vmem:[%s1731 + $0x38] sm:$0xff]
      %1740 = vrot.lane.b32.xlu0 %v1109, 120
      %v1741 = vpop.permute.xlu0 %1740
      %1742 = vrot.lane.b32.xlu0 %v1110, 120
      %v1743 = vpop.permute.xlu0 %1742
      %1744 = vrot.lane.b32.xlu0 %v1111, 120
      %v1745 = vpop.permute.xlu0 %1744
      %1746 = vrot.lane.b32.xlu0 %v1112, 120
      %v1747 = vpop.permute.xlu0 %1746
      %1748 = vrot.lane.b32.xlu0 %v1113, 120
      %v1749 = vpop.permute.xlu0 %1748
      %1750 = vrot.lane.b32.xlu0 %v1114, 120
      %v1751 = vpop.permute.xlu0 %1750
      %1752 = vrot.lane.b32.xlu0 %v1115, 120
      %v1753 = vpop.permute.xlu0 %1752
      %1754 = vrot.lane.b32.xlu0 %v1116, 120
      %v1755 = vpop.permute.xlu0 %1754
      %1756 = vrot.lane.b32.xlu0 %v922, 88
      %v1757 = vpop.permute.xlu0 %1756
      %1758 = vrot.lane.b32.xlu0 %v927, 88
      %v1759 = vpop.permute.xlu0 %1758
      %1760 = vrot.lane.b32.xlu0 %v932, 88
      %v1761 = vpop.permute.xlu0 %1760
      %1762 = vrot.lane.b32.xlu0 %v937, 88
      %v1763 = vpop.permute.xlu0 %1762
      %1764 = vrot.lane.b32.xlu0 %v942, 88
      %v1765 = vpop.permute.xlu0 %1764
      %1766 = vrot.lane.b32.xlu0 %v947, 88
      %v1767 = vpop.permute.xlu0 %1766
      %1768 = vrot.lane.b32.xlu0 %v952, 88
      %v1769 = vpop.permute.xlu0 %1768
      %1770 = vrot.lane.b32.xlu0 %v957, 88
      %v1771 = vpop.permute.xlu0 %1770
      %v1772 = vsel %vm1157, %v1741, 0
      %v1774 = vsel %vm1157, %v1743, 0
      %v1776 = vsel %vm1157, %v1745, 0
      %v1778 = vsel %vm1157, %v1747, 0
      %v1780 = vsel %vm1157, %v1749, 0
      %v1782 = vsel %vm1157, %v1751, 0
      %v1784 = vsel %vm1157, %v1753, 0
      %v1786 = vsel %vm1157, %v1755, 0
      %v1788 = vsel %vm1157, %v1757, 0
      %v1790 = vsel %vm1157, %v1759, 0
      %v1792 = vsel %vm1157, %v1761, 0
      %v1794 = vsel %vm1157, %v1763, 0
      %v1796 = vsel %vm1157, %v1765, 0
      %v1798 = vsel %vm1157, %v1767, 0
      %v1800 = vsel %vm1157, %v1769, 0
      %v1802 = vsel %vm1157, %v1771, 0
      %1804 = vmatprep.subr.mxu0 0.0
      %1805 = vmatpush1.xpose.msra.mxu0 0.0
      %1806 = vmatprep.subr.mxu0 0.0
      %1807 = vmatpush1.xpose.msra.mxu0 0.0
      %1808 = vmatprep.subr.mxu0 0.0
      %1809 = vmatpush1.xpose.msra.mxu0 0.0
      %1810 = vmatprep.subr.mxu0 0.0
      %1811 = vmatpush1.xpose.msra.mxu0 0.0
      %1812 = vmatprep.subr.mxu0 0.0
      %1813 = vmatpush1.xpose.msra.mxu0 0.0
      %1814 = vmatprep.subr.mxu0 0.0
      %1815 = vmatpush1.xpose.msra.mxu0 0.0
      %1816 = vmatprep.subr.mxu0 0.0
      %1817 = vmatpush1.xpose.msra.mxu0 0.0
      %1818 = vmatprep.subr.mxu0 0.0
      %1819 = vmatpush1.xpose.msra.mxu0 0.0
      %1820 = vmatprep.subr.mxu0 0.0
      %1821 = vmatpush1.xpose.msra.mxu0 %v1802
      %1822 = vmatprep.subr.mxu0 0.0
      %1823 = vmatpush1.xpose.msra.mxu0 %v1800
      %1824 = vmatprep.subr.mxu0 0.0
      %1825 = vmatpush1.xpose.msra.mxu0 %v1798
      %1826 = vmatprep.subr.mxu0 0.0
      %1827 = vmatpush1.xpose.msra.mxu0 %v1796
      %1828 = vmatprep.subr.mxu0 0.0
      %1829 = vmatpush1.xpose.msra.mxu0 %v1794
      %1830 = vmatprep.subr.mxu0 0.0
      %1831 = vmatpush1.xpose.msra.mxu0 %v1792
      %1832 = vmatprep.subr.mxu0 0.0
      %1833 = vmatpush1.xpose.msra.mxu0 %v1790
      %1834 = vmatprep.subr.mxu0 0.0
      %1835 = vmatpush1.xpose.msra.mxu0 %v1788
      %1836 = vmatprep.subr.mxu0 0.0
      %1837 = vmatpush2.xpose.msra.mxu0 0.0
      %1838 = vmatprep.subr.mxu0 0.0
      %1839 = vmatpush2.xpose.msra.mxu0 0.0
      %1840 = vmatprep.subr.mxu0 0.0
      %1841 = vmatpush2.xpose.msra.mxu0 0.0
      %1842 = vmatprep.subr.mxu0 0.0
      %1843 = vmatpush2.xpose.msra.mxu0 0.0
      %1844 = vmatprep.subr.mxu0 0.0
      %1845 = vmatpush2.xpose.msra.mxu0 0.0
      %1846 = vmatprep.subr.mxu0 0.0
      %1847 = vmatpush2.xpose.msra.mxu0 0.0
      %1848 = vmatprep.subr.mxu0 0.0
      %1849 = vmatpush2.xpose.msra.mxu0 0.0
      %1850 = vmatprep.subr.mxu0 0.0
      %1851 = vmatpush2.xpose.msra.mxu0 0.0
      %1852 = vmatprep.subr.mxu0 0.0
      %1853 = vmatpush2.xpose.msra.mxu0 0.0
      %1854 = vmatprep.subr.mxu0 0.0
      %1855 = vmatpush2.xpose.msra.mxu0 0.0
      %1856 = vmatprep.subr.mxu0 0.0
      %1857 = vmatpush2.xpose.msra.mxu0 0.0
      %1858 = vmatprep.subr.mxu0 0.0
      %1859 = vmatpush2.xpose.msra.mxu0 0.0
      %1860 = vmatprep.subr.mxu0 0.0
      %1861 = vmatpush2.xpose.msra.mxu0 0.0
      %1862 = vmatprep.subr.mxu0 0.0
      %1863 = vmatpush2.xpose.msra.mxu0 0.0
      %1864 = vmatprep.subr.mxu0 0.0
      %1865 = vmatpush2.xpose.msra.mxu0 0.0
      %1866 = vmatprep.subr.mxu0 0.0
      %1867 = vmatpush2.xpose.msra.mxu0 0.0
      %1868 = vmatprep.mubr.f32.mxu0 0.0
      %1869 = vmatmul.mubr.f32.gmra.mxu0 %v1772
      %v1870 = vpop.f32.mrf.mxu0
      %v1871 = vadd.f32 %v1732, %v1870
      %v1872 = vpop.f32.mrf.mxu0
      %1873 = vmatprep.mubr.f32.mxu0 0.0
      %1874 = vmatmul.mubr.f32.gmra.mxu0 %v1774
      %v1875 = vpop.f32.mrf.mxu0
      %v1876 = vadd.f32 %v1733, %v1875
      %v1877 = vpop.f32.mrf.mxu0
      %1878 = vmatprep.mubr.f32.mxu0 0.0
      %1879 = vmatmul.mubr.f32.gmra.mxu0 %v1776
      %v1880 = vpop.f32.mrf.mxu0
      %v1881 = vadd.f32 %v1734, %v1880
      %v1882 = vpop.f32.mrf.mxu0
      %1883 = vmatprep.mubr.f32.mxu0 0.0
      %1884 = vmatmul.mubr.f32.gmra.mxu0 %v1778
      %v1885 = vpop.f32.mrf.mxu0
      %v1886 = vadd.f32 %v1735, %v1885
      %v1887 = vpop.f32.mrf.mxu0
      %1888 = vmatprep.mubr.f32.mxu0 0.0
      %1889 = vmatmul.mubr.f32.gmra.mxu0 %v1780
      %v1890 = vpop.f32.mrf.mxu0
      %v1891 = vadd.f32 %v1736, %v1890
      %v1892 = vpop.f32.mrf.mxu0
      %1893 = vmatprep.mubr.f32.mxu0 0.0
      %1894 = vmatmul.mubr.f32.gmra.mxu0 %v1782
      %v1895 = vpop.f32.mrf.mxu0
      %v1896 = vadd.f32 %v1737, %v1895
      %v1897 = vpop.f32.mrf.mxu0
      %1898 = vmatprep.mubr.f32.mxu0 0.0
      %1899 = vmatmul.mubr.f32.gmra.mxu0 %v1784
      %v1900 = vpop.f32.mrf.mxu0
      %v1901 = vadd.f32 %v1738, %v1900
      %v1902 = vpop.f32.mrf.mxu0
      %1903 = vmatprep.mubr.f32.mxu0 0.0
      %1904 = vmatmul.mubr.f32.gmra.mxu0 %v1786
      %v1905 = vpop.f32.mrf.mxu0
      %v1906 = vadd.f32 %v1739, %v1905
      %v1907 = vpop.f32.mrf.mxu0
      %1908 = vdwg.mxu0
      %1909 = vrot.lane.b32.xlu0 %v1117, 120
      %v1910 = vpop.permute.xlu0 %1909
      %1911 = vrot.lane.b32.xlu0 %v1118, 120
      %v1912 = vpop.permute.xlu0 %1911
      %1913 = vrot.lane.b32.xlu0 %v1119, 120
      %v1914 = vpop.permute.xlu0 %1913
      %1915 = vrot.lane.b32.xlu0 %v1120, 120
      %v1916 = vpop.permute.xlu0 %1915
      %1917 = vrot.lane.b32.xlu0 %v1121, 120
      %v1918 = vpop.permute.xlu0 %1917
      %1919 = vrot.lane.b32.xlu0 %v1122, 120
      %v1920 = vpop.permute.xlu0 %1919
      %1921 = vrot.lane.b32.xlu0 %v1123, 120
      %v1922 = vpop.permute.xlu0 %1921
      %1923 = vrot.lane.b32.xlu0 %v1124, 120
      %v1924 = vpop.permute.xlu0 %1923
      %1925 = vrot.lane.b32.xlu0 %v1062, 88
      %v1926 = vpop.permute.xlu0 %1925
      %1927 = vrot.lane.b32.xlu0 %v1067, 88
      %v1928 = vpop.permute.xlu0 %1927
      %1929 = vrot.lane.b32.xlu0 %v1072, 88
      %v1930 = vpop.permute.xlu0 %1929
      %1931 = vrot.lane.b32.xlu0 %v1077, 88
      %v1932 = vpop.permute.xlu0 %1931
      %1933 = vrot.lane.b32.xlu0 %v1082, 88
      %v1934 = vpop.permute.xlu0 %1933
      %1935 = vrot.lane.b32.xlu0 %v1087, 88
      %v1936 = vpop.permute.xlu0 %1935
      %1937 = vrot.lane.b32.xlu0 %v1092, 88
      %v1938 = vpop.permute.xlu0 %1937
      %1939 = vrot.lane.b32.xlu0 %v1097, 88
      %v1940 = vpop.permute.xlu0 %1939
      %v1941 = vsel %vm1157, %v1910, 0
      %v1943 = vsel %vm1157, %v1912, 0
      %v1945 = vsel %vm1157, %v1914, 0
      %v1947 = vsel %vm1157, %v1916, 0
      %v1949 = vsel %vm1157, %v1918, 0
      %v1951 = vsel %vm1157, %v1920, 0
      %v1953 = vsel %vm1157, %v1922, 0
      %v1955 = vsel %vm1157, %v1924, 0
      %v1957 = vsel %vm1157, %v1926, 0
      %v1959 = vsel %vm1157, %v1928, 0
      %v1961 = vsel %vm1157, %v1930, 0
      %v1963 = vsel %vm1157, %v1932, 0
      %v1965 = vsel %vm1157, %v1934, 0
      %v1967 = vsel %vm1157, %v1936, 0
      %v1969 = vsel %vm1157, %v1938, 0
      %v1971 = vsel %vm1157, %v1940, 0
      %1973 = vmatprep.subr.mxu0 0.0
      %1974 = vmatpush1.xpose.msra.mxu0 0.0
      %1975 = vmatprep.subr.mxu0 0.0
      %1976 = vmatpush1.xpose.msra.mxu0 0.0
      %1977 = vmatprep.subr.mxu0 0.0
      %1978 = vmatpush1.xpose.msra.mxu0 0.0
      %1979 = vmatprep.subr.mxu0 0.0
      %1980 = vmatpush1.xpose.msra.mxu0 0.0
      %1981 = vmatprep.subr.mxu0 0.0
      %1982 = vmatpush1.xpose.msra.mxu0 0.0
      %1983 = vmatprep.subr.mxu0 0.0
      %1984 = vmatpush1.xpose.msra.mxu0 0.0
      %1985 = vmatprep.subr.mxu0 0.0
      %1986 = vmatpush1.xpose.msra.mxu0 0.0
      %1987 = vmatprep.subr.mxu0 0.0
      %1988 = vmatpush1.xpose.msra.mxu0 0.0
      %1989 = vmatprep.subr.mxu0 0.0
      %1990 = vmatpush1.xpose.msra.mxu0 %v1971
      %1991 = vmatprep.subr.mxu0 0.0
      %1992 = vmatpush1.xpose.msra.mxu0 %v1969
      %1993 = vmatprep.subr.mxu0 0.0
      %1994 = vmatpush1.xpose.msra.mxu0 %v1967
      %1995 = vmatprep.subr.mxu0 0.0
      %1996 = vmatpush1.xpose.msra.mxu0 %v1965
      %1997 = vmatprep.subr.mxu0 0.0
      %1998 = vmatpush1.xpose.msra.mxu0 %v1963
      %1999 = vmatprep.subr.mxu0 0.0
      %2000 = vmatpush1.xpose.msra.mxu0 %v1961
      %2001 = vmatprep.subr.mxu0 0.0
      %2002 = vmatpush1.xpose.msra.mxu0 %v1959
      %2003 = vmatprep.subr.mxu0 0.0
      %2004 = vmatpush1.xpose.msra.mxu0 %v1957
      %2005 = vmatprep.subr.mxu0 0.0
      %2006 = vmatpush2.xpose.msra.mxu0 0.0
      %2007 = vmatprep.subr.mxu0 0.0
      %2008 = vmatpush2.xpose.msra.mxu0 0.0
      %2009 = vmatprep.subr.mxu0 0.0
      %2010 = vmatpush2.xpose.msra.mxu0 0.0
      %2011 = vmatprep.subr.mxu0 0.0
      %2012 = vmatpush2.xpose.msra.mxu0 0.0
      %2013 = vmatprep.subr.mxu0 0.0
      %2014 = vmatpush2.xpose.msra.mxu0 0.0
      %2015 = vmatprep.subr.mxu0 0.0
      %2016 = vmatpush2.xpose.msra.mxu0 0.0
      %2017 = vmatprep.subr.mxu0 0.0
      %2018 = vmatpush2.xpose.msra.mxu0 0.0
      %2019 = vmatprep.subr.mxu0 0.0
      %2020 = vmatpush2.xpose.msra.mxu0 0.0
      %2021 = vmatprep.subr.mxu0 0.0
      %2022 = vmatpush2.xpose.msra.mxu0 0.0
      %2023 = vmatprep.subr.mxu0 0.0
      %2024 = vmatpush2.xpose.msra.mxu0 0.0
      %2025 = vmatprep.subr.mxu0 0.0
      %2026 = vmatpush2.xpose.msra.mxu0 0.0
      %2027 = vmatprep.subr.mxu0 0.0
      %2028 = vmatpush2.xpose.msra.mxu0 0.0
      %2029 = vmatprep.subr.mxu0 0.0
      %2030 = vmatpush2.xpose.msra.mxu0 0.0
      %2031 = vmatprep.subr.mxu0 0.0
      %2032 = vmatpush2.xpose.msra.mxu0 0.0
      %2033 = vmatprep.subr.mxu0 0.0
      %2034 = vmatpush2.xpose.msra.mxu0 0.0
      %2035 = vmatprep.subr.mxu0 0.0
      %2036 = vmatpush2.xpose.msra.mxu0 0.0
      %2037 = vmatprep.mubr.f32.mxu0 0.0
      %2038 = vmatmul.mubr.f32.gmra.mxu0 %v1941
      %v2039 = vpop.f32.mrf.mxu0
      %v2040 = vadd.f32 %v1732, %v2039
      %v2041 = vpop.f32.mrf.mxu0
      %2042 = vmatprep.mubr.f32.mxu0 0.0
      %2043 = vmatmul.mubr.f32.gmra.mxu0 %v1943
      %v2044 = vpop.f32.mrf.mxu0
      %v2045 = vadd.f32 %v1733, %v2044
      %v2046 = vpop.f32.mrf.mxu0
      %2047 = vmatprep.mubr.f32.mxu0 0.0
      %2048 = vmatmul.mubr.f32.gmra.mxu0 %v1945
      %v2049 = vpop.f32.mrf.mxu0
      %v2050 = vadd.f32 %v1734, %v2049
      %v2051 = vpop.f32.mrf.mxu0
      %2052 = vmatprep.mubr.f32.mxu0 0.0
      %2053 = vmatmul.mubr.f32.gmra.mxu0 %v1947
      %v2054 = vpop.f32.mrf.mxu0
      %v2055 = vadd.f32 %v1735, %v2054
      %v2056 = vpop.f32.mrf.mxu0
      %2057 = vmatprep.mubr.f32.mxu0 0.0
      %2058 = vmatmul.mubr.f32.gmra.mxu0 %v1949
      %v2059 = vpop.f32.mrf.mxu0
      %v2060 = vadd.f32 %v1736, %v2059
      %v2061 = vpop.f32.mrf.mxu0
      %2062 = vmatprep.mubr.f32.mxu0 0.0
      %2063 = vmatmul.mubr.f32.gmra.mxu0 %v1951
      %v2064 = vpop.f32.mrf.mxu0
      %v2065 = vadd.f32 %v1737, %v2064
      %v2066 = vpop.f32.mrf.mxu0
      %2067 = vmatprep.mubr.f32.mxu0 0.0
      %2068 = vmatmul.mubr.f32.gmra.mxu0 %v1953
      %v2069 = vpop.f32.mrf.mxu0
      %v2070 = vadd.f32 %v1738, %v2069
      %v2071 = vpop.f32.mrf.mxu0
      %2072 = vmatprep.mubr.f32.mxu0 0.0
      %2073 = vmatmul.mubr.f32.gmra.mxu0 %v1955
      %v2074 = vpop.f32.mrf.mxu0
      %v2075 = vadd.f32 %v1739, %v2074
      %v2076 = vpop.f32.mrf.mxu0
      %2077 = vdwg.mxu0
      %v2078 = vmul.f32 %v1871, %v2040
      %v2079 = vmul.f32 %v1876, %v2045
      %v2080 = vmul.f32 %v1881, %v2050
      %v2081 = vmul.f32 %v1886, %v2055
      %v2082 = vmul.f32 %v1891, %v2060
      %v2083 = vmul.f32 %v1896, %v2065
      %v2084 = vmul.f32 %v1901, %v2070
      %v2085 = vmul.f32 %v1906, %v2075
      %v2086 = vadd.f32 %v2078, %v1101
      %v2087 = vadd.f32 %v2079, %v1102
      %v2088 = vadd.f32 %v2080, %v1103
      %v2089 = vadd.f32 %v2081, %v1104
      %v2090 = vadd.f32 %v2082, %v1105
      %v2091 = vadd.f32 %v2083, %v1106
      %v2092 = vadd.f32 %v2084, %v1107
      %v2093 = vadd.f32 %v2085, %v1108
      %v2094 = vsel %vm1488, %v2086, -inf
      %2095 = vmax.xlane.f32.xlu0 %v2094
      %v2096 = vpop.xlane.xlu0 %2095
      %v2097 = vsel %vm1488, %v2087, -inf
      %2098 = vmax.xlane.f32.xlu0 %v2097
      %v2099 = vpop.xlane.xlu0 %2098
      %v2100 = vsel %vm1488, %v2088, -inf
      %2101 = vmax.xlane.f32.xlu0 %v2100
      %v2102 = vpop.xlane.xlu0 %2101
      %v2103 = vsel %vm1488, %v2089, -inf
      %2104 = vmax.xlane.f32.xlu0 %v2103
      %v2105 = vpop.xlane.xlu0 %2104
      %v2106 = vsel %vm1488, %v2090, -inf
      %2107 = vmax.xlane.f32.xlu0 %v2106
      %v2108 = vpop.xlane.xlu0 %2107
      %v2109 = vsel %vm1488, %v2091, -inf
      %2110 = vmax.xlane.f32.xlu0 %v2109
      %v2111 = vpop.xlane.xlu0 %2110
      %v2112 = vsel %vm1488, %v2092, -inf
      %2113 = vmax.xlane.f32.xlu0 %v2112
      %v2114 = vpop.xlane.xlu0 %2113
      %v2115 = vsel %vm1488, %v2093, -inf
      %2116 = vmax.xlane.f32.xlu0 %v2115
      %v2117 = vpop.xlane.xlu0 %2116
      %v2118 = vsub.f32 %v2086, %v2096
      %v2119 = vsub.f32 %v2087, %v2099
      %v2120 = vsub.f32 %v2088, %v2102
      %v2121 = vsub.f32 %v2089, %v2105
      %v2122 = vsub.f32 %v2090, %v2108
      %v2123 = vsub.f32 %v2091, %v2111
      %v2124 = vsub.f32 %v2092, %v2114
      %v2125 = vsub.f32 %v2093, %v2117
      %v2126 = vmul.f32 %v2118, 1.442695
      %v2127 = vpow.pop %v2126
      %v2128 = vmul.f32 %v2119, 1.442695
      %v2129 = vpow.pop %v2128
      %v2130 = vmul.f32 %v2120, 1.442695
      %v2131 = vpow.pop %v2130
      %v2132 = vmul.f32 %v2121, 1.442695
      %v2133 = vpow.pop %v2132
      %v2134 = vmul.f32 %v2122, 1.442695
      %v2135 = vpow.pop %v2134
      %v2136 = vmul.f32 %v2123, 1.442695
      %v2137 = vpow.pop %v2136
      %v2138 = vmul.f32 %v2124, 1.442695
      %v2139 = vpow.pop %v2138
      %v2140 = vmul.f32 %v2125, 1.442695
      %v2141 = vpow.pop %v2140
      %v2142 = vsel %vm1488, %v2127, 0.0
      %2143 = vadd.xlane.f32.xlu0 %v2142
      %v2144 = vpop.xlane.xlu0 %2143
      %v2145 = vsel %vm1488, %v2129, 0.0
      %2146 = vadd.xlane.f32.xlu0 %v2145
      %v2147 = vpop.xlane.xlu0 %2146
      %v2148 = vsel %vm1488, %v2131, 0.0
      %2149 = vadd.xlane.f32.xlu0 %v2148
      %v2150 = vpop.xlane.xlu0 %2149
      %v2151 = vsel %vm1488, %v2133, 0.0
      %2152 = vadd.xlane.f32.xlu0 %v2151
      %v2153 = vpop.xlane.xlu0 %2152
      %v2154 = vsel %vm1488, %v2135, 0.0
      %2155 = vadd.xlane.f32.xlu0 %v2154
      %v2156 = vpop.xlane.xlu0 %2155
      %v2157 = vsel %vm1488, %v2137, 0.0
      %2158 = vadd.xlane.f32.xlu0 %v2157
      %v2159 = vpop.xlane.xlu0 %2158
      %v2160 = vsel %vm1488, %v2139, 0.0
      %2161 = vadd.xlane.f32.xlu0 %v2160
      %v2162 = vpop.xlane.xlu0 %2161
      %v2163 = vsel %vm1488, %v2141, 0.0
      %2164 = vadd.xlane.f32.xlu0 %v2163
      %v2165 = vpop.xlane.xlu0 %2164
      %v2166 = vrcp.pop %v2144
      %v2167 = vrcp.pop %v2147
      %v2168 = vrcp.pop %v2150
      %v2169 = vrcp.pop %v2153
      %v2170 = vrcp.pop %v2156
      %v2171 = vrcp.pop %v2159
      %v2172 = vrcp.pop %v2162
      %v2173 = vrcp.pop %v2165
      %v2174 = vmul.f32 %v2127, %v2166
      %v2175 = vmul.f32 %v2129, %v2167
      %v2176 = vmul.f32 %v2131, %v2168
      %v2177 = vmul.f32 %v2133, %v2169
      %v2178 = vmul.f32 %v2135, %v2170
      %v2179 = vmul.f32 %v2137, %v2171
      %v2180 = vmul.f32 %v2139, %v2172
      %v2181 = vmul.f32 %v2141, %v2173
      %2182 = vrot.lane.b32.xlu0 %v922, 56
      %v2183 = vpop.permute.xlu0 %2182
      %2184 = vrot.lane.b32.xlu0 %v927, 56
      %v2185 = vpop.permute.xlu0 %2184
      %2186 = vrot.lane.b32.xlu0 %v932, 56
      %v2187 = vpop.permute.xlu0 %2186
      %2188 = vrot.lane.b32.xlu0 %v937, 56
      %v2189 = vpop.permute.xlu0 %2188
      %2190 = vrot.lane.b32.xlu0 %v942, 56
      %v2191 = vpop.permute.xlu0 %2190
      %2192 = vrot.lane.b32.xlu0 %v947, 56
      %v2193 = vpop.permute.xlu0 %2192
      %2194 = vrot.lane.b32.xlu0 %v952, 56
      %v2195 = vpop.permute.xlu0 %2194
      %2196 = vrot.lane.b32.xlu0 %v957, 56
      %v2197 = vpop.permute.xlu0 %2196
      %v2207 = vsel %vm1488, %v2174, 0
      %v2210 = vsel %vm1488, %v2175, 0
      %v2213 = vsel %vm1488, %v2176, 0
      %v2216 = vsel %vm1488, %v2177, 0
      %v2219 = vsel %vm1488, %v2178, 0
      %v2222 = vsel %vm1488, %v2179, 0
      %v2225 = vsel %vm1488, %v2180, 0
      %v2228 = vsel %vm1488, %v2181, 0
      %2230 = vmatprep.subr.mxu0 0.0
      %2231 = vmatpush1.msra.mxu0 0.0
      %2232 = vmatprep.subr.mxu0 0.0
      %2233 = vmatpush1.msra.mxu0 0.0
      %2234 = vmatprep.subr.mxu0 0.0
      %2235 = vmatpush1.msra.mxu0 0.0
      %2236 = vmatprep.subr.mxu0 0.0
      %2237 = vmatpush1.msra.mxu0 0.0
      %2238 = vmatprep.subr.mxu0 0.0
      %2239 = vmatpush1.msra.mxu0 0.0
      %2240 = vmatprep.subr.mxu0 0.0
      %2241 = vmatpush1.msra.mxu0 0.0
      %2242 = vmatprep.subr.mxu0 0.0
      %2243 = vmatpush1.msra.mxu0 0.0
      %2244 = vmatprep.subr.mxu0 0.0
      %2245 = vmatpush1.msra.mxu0 0.0
      %2246 = vmatprep.subr.mxu0 0.0
      %2247 = vmatpush1.msra.mxu0 %v2197
      %2248 = vmatprep.subr.mxu0 0.0
      %2249 = vmatpush1.msra.mxu0 %v2195
      %2250 = vmatprep.subr.mxu0 0.0
      %2251 = vmatpush1.msra.mxu0 %v2193
      %2252 = vmatprep.subr.mxu0 0.0
      %2253 = vmatpush1.msra.mxu0 %v2191
      %2254 = vmatprep.subr.mxu0 0.0
      %2255 = vmatpush1.msra.mxu0 %v2189
      %2256 = vmatprep.subr.mxu0 0.0
      %2257 = vmatpush1.msra.mxu0 %v2187
      %2258 = vmatprep.subr.mxu0 0.0
      %2259 = vmatpush1.msra.mxu0 %v2185
      %2260 = vmatprep.subr.mxu0 0.0
      %2261 = vmatpush1.msra.mxu0 %v2183
      %2262 = vmatprep.subr.mxu0 0.0
      %2263 = vmatpush2.msra.mxu0 0.0
      %2264 = vmatprep.subr.mxu0 0.0
      %2265 = vmatpush2.msra.mxu0 0.0
      %2266 = vmatprep.subr.mxu0 0.0
      %2267 = vmatpush2.msra.mxu0 0.0
      %2268 = vmatprep.subr.mxu0 0.0
      %2269 = vmatpush2.msra.mxu0 0.0
      %2270 = vmatprep.subr.mxu0 0.0
      %2271 = vmatpush2.msra.mxu0 0.0
      %2272 = vmatprep.subr.mxu0 0.0
      %2273 = vmatpush2.msra.mxu0 0.0
      %2274 = vmatprep.subr.mxu0 0.0
      %2275 = vmatpush2.msra.mxu0 0.0
      %2276 = vmatprep.subr.mxu0 0.0
      %2277 = vmatpush2.msra.mxu0 0.0
      %2278 = vmatprep.subr.mxu0 0.0
      %2279 = vmatpush2.msra.mxu0 0.0
      %2280 = vmatprep.subr.mxu0 0.0
      %2281 = vmatpush2.msra.mxu0 0.0
      %2282 = vmatprep.subr.mxu0 0.0
      %2283 = vmatpush2.msra.mxu0 0.0
      %2284 = vmatprep.subr.mxu0 0.0
      %2285 = vmatpush2.msra.mxu0 0.0
      %2286 = vmatprep.subr.mxu0 0.0
      %2287 = vmatpush2.msra.mxu0 0.0
      %2288 = vmatprep.subr.mxu0 0.0
      %2289 = vmatpush2.msra.mxu0 0.0
      %2290 = vmatprep.subr.mxu0 0.0
      %2291 = vmatpush2.msra.mxu0 0.0
      %2292 = vmatprep.subr.mxu0 0.0
      %2293 = vmatpush2.msra.mxu0 0.0
      %2294 = vmatprep.mubr.f32.mxu0 0.0
      %2295 = vmatmul.mubr.f32.gmra.mxu0 %v2207
      %v2296 = vpop.f32.mrf.mxu0
      %v2297 = vadd.f32 0.0, %v2296
      %v2298 = vpop.f32.mrf.mxu0
      %2299 = vmatprep.mubr.f32.mxu0 0.0
      %2300 = vmatmul.mubr.f32.gmra.mxu0 %v2210
      %v2301 = vpop.f32.mrf.mxu0
      %v2302 = vadd.f32 0.0, %v2301
      %v2303 = vpop.f32.mrf.mxu0
      %2304 = vmatprep.mubr.f32.mxu0 0.0
      %2305 = vmatmul.mubr.f32.gmra.mxu0 %v2213
      %v2306 = vpop.f32.mrf.mxu0
      %v2307 = vadd.f32 0.0, %v2306
      %v2308 = vpop.f32.mrf.mxu0
      %2309 = vmatprep.mubr.f32.mxu0 0.0
      %2310 = vmatmul.mubr.f32.gmra.mxu0 %v2216
      %v2311 = vpop.f32.mrf.mxu0
      %v2312 = vadd.f32 0.0, %v2311
      %v2313 = vpop.f32.mrf.mxu0
      %2314 = vmatprep.mubr.f32.mxu0 0.0
      %2315 = vmatmul.mubr.f32.gmra.mxu0 %v2219
      %v2316 = vpop.f32.mrf.mxu0
      %v2317 = vadd.f32 0.0, %v2316
      %v2318 = vpop.f32.mrf.mxu0
      %2319 = vmatprep.mubr.f32.mxu0 0.0
      %2320 = vmatmul.mubr.f32.gmra.mxu0 %v2222
      %v2321 = vpop.f32.mrf.mxu0
      %v2322 = vadd.f32 0.0, %v2321
      %v2323 = vpop.f32.mrf.mxu0
      %2324 = vmatprep.mubr.f32.mxu0 0.0
      %2325 = vmatmul.mubr.f32.gmra.mxu0 %v2225
      %v2326 = vpop.f32.mrf.mxu0
      %v2327 = vadd.f32 0.0, %v2326
      %v2328 = vpop.f32.mrf.mxu0
      %2329 = vmatprep.mubr.f32.mxu0 0.0
      %2330 = vmatmul.mubr.f32.gmra.mxu0 %v2228
      %v2331 = vpop.f32.mrf.mxu0
      %v2332 = vadd.f32 0.0, %v2331
      %v2333 = vpop.f32.mrf.mxu0
      %2334 = vdwg.mxu0
      %v2335 = vld [vmem:[%s8 + $0x8] sm:$0xff]
      %v2337 = vsel %vm1157, %v2297, 0
      %v2340 = vsel %vm1157, %v2302, 0
      %v2343 = vsel %vm1157, %v2307, 0
      %v2346 = vsel %vm1157, %v2312, 0
      %v2349 = vsel %vm1157, %v2317, 0
      %v2352 = vsel %vm1157, %v2322, 0
      %v2355 = vsel %vm1157, %v2327, 0
      %v2358 = vsel %vm1157, %v2332, 0
      %2360 = vmatprep.subr.mxu0 0.0
      %2361 = vmatpush1.msra.mxu0 0.0
      %2362 = vmatprep.subr.mxu0 0.0
      %2363 = vmatpush1.msra.mxu0 0.0
      %2364 = vmatprep.subr.mxu0 0.0
      %2365 = vmatpush1.msra.mxu0 0.0
      %2366 = vmatprep.subr.mxu0 0.0
      %2367 = vmatpush1.msra.mxu0 0.0
      %2368 = vmatprep.subr.mxu0 0.0
      %2369 = vmatpush1.msra.mxu0 0.0
      %2370 = vmatprep.subr.mxu0 0.0
      %2371 = vmatpush1.msra.mxu0 0.0
      %2372 = vmatprep.subr.mxu0 0.0
      %2373 = vmatpush1.msra.mxu0 0.0
      %2374 = vmatprep.subr.mxu0 0.0
      %2375 = vmatpush1.msra.mxu0 0.0
      %2376 = vmatprep.subr.mxu0 0.0
      %2377 = vmatpush1.msra.mxu0 0.0
      %2378 = vmatprep.subr.mxu0 0.0
      %2379 = vmatpush1.msra.mxu0 0.0
      %2380 = vmatprep.subr.mxu0 0.0
      %2381 = vmatpush1.msra.mxu0 0.0
      %2382 = vmatprep.subr.mxu0 0.0
      %2383 = vmatpush1.msra.mxu0 0.0
      %2384 = vmatprep.subr.mxu0 0.0
      %2385 = vmatpush1.msra.mxu0 0.0
      %2386 = vmatprep.subr.mxu0 0.0
      %2387 = vmatpush1.msra.mxu0 0.0
      %2388 = vmatprep.subr.mxu0 0.0
      %2389 = vmatpush1.msra.mxu0 0.0
      %2390 = vmatprep.subr.mxu0 0.0
      %2391 = vmatpush1.msra.mxu0 %v2335
      %2392 = vmatprep.subr.mxu0 0.0
      %2393 = vmatpush2.msra.mxu0 0.0
      %2394 = vmatprep.subr.mxu0 0.0
      %2395 = vmatpush2.msra.mxu0 0.0
      %2396 = vmatprep.subr.mxu0 0.0
      %2397 = vmatpush2.msra.mxu0 0.0
      %2398 = vmatprep.subr.mxu0 0.0
      %2399 = vmatpush2.msra.mxu0 0.0
      %2400 = vmatprep.subr.mxu0 0.0
      %2401 = vmatpush2.msra.mxu0 0.0
      %2402 = vmatprep.subr.mxu0 0.0
      %2403 = vmatpush2.msra.mxu0 0.0
      %2404 = vmatprep.subr.mxu0 0.0
      %2405 = vmatpush2.msra.mxu0 0.0
      %2406 = vmatprep.subr.mxu0 0.0
      %2407 = vmatpush2.msra.mxu0 0.0
      %2408 = vmatprep.subr.mxu0 0.0
      %2409 = vmatpush2.msra.mxu0 0.0
      %2410 = vmatprep.subr.mxu0 0.0
      %2411 = vmatpush2.msra.mxu0 0.0
      %2412 = vmatprep.subr.mxu0 0.0
      %2413 = vmatpush2.msra.mxu0 0.0
      %2414 = vmatprep.subr.mxu0 0.0
      %2415 = vmatpush2.msra.mxu0 0.0
      %2416 = vmatprep.subr.mxu0 0.0
      %2417 = vmatpush2.msra.mxu0 0.0
      %2418 = vmatprep.subr.mxu0 0.0
      %2419 = vmatpush2.msra.mxu0 0.0
      %2420 = vmatprep.subr.mxu0 0.0
      %2421 = vmatpush2.msra.mxu0 0.0
      %2422 = vmatprep.subr.mxu0 0.0
      %2423 = vmatpush2.msra.mxu0 0.0
      %2424 = vmatprep.mubr.f32.mxu0 0.0
      %2425 = vmatmul.mubr.f32.gmra.mxu0 %v2337
      %v2426 = vpop.f32.mrf.mxu0
      %v2427 = vadd.f32 0.0, %v2426
      %v2428 = vpop.f32.mrf.mxu0
      %2429 = vmatprep.mubr.f32.mxu0 0.0
      %2430 = vmatmul.mubr.f32.gmra.mxu0 %v2340
      %v2431 = vpop.f32.mrf.mxu0
      %v2432 = vadd.f32 0.0, %v2431
      %v2433 = vpop.f32.mrf.mxu0
      %2434 = vmatprep.mubr.f32.mxu0 0.0
      %2435 = vmatmul.mubr.f32.gmra.mxu0 %v2343
      %v2436 = vpop.f32.mrf.mxu0
      %v2437 = vadd.f32 0.0, %v2436
      %v2438 = vpop.f32.mrf.mxu0
      %2439 = vmatprep.mubr.f32.mxu0 0.0
      %2440 = vmatmul.mubr.f32.gmra.mxu0 %v2346
      %v2441 = vpop.f32.mrf.mxu0
      %v2442 = vadd.f32 0.0, %v2441
      %v2443 = vpop.f32.mrf.mxu0
      %2444 = vmatprep.mubr.f32.mxu0 0.0
      %2445 = vmatmul.mubr.f32.gmra.mxu0 %v2349
      %v2446 = vpop.f32.mrf.mxu0
      %v2447 = vadd.f32 0.0, %v2446
      %v2448 = vpop.f32.mrf.mxu0
      %2449 = vmatprep.mubr.f32.mxu0 0.0
      %2450 = vmatmul.mubr.f32.gmra.mxu0 %v2352
      %v2451 = vpop.f32.mrf.mxu0
      %v2452 = vadd.f32 0.0, %v2451
      %v2453 = vpop.f32.mrf.mxu0
      %2454 = vmatprep.mubr.f32.mxu0 0.0
      %2455 = vmatmul.mubr.f32.gmra.mxu0 %v2355
      %v2456 = vpop.f32.mrf.mxu0
      %v2457 = vadd.f32 0.0, %v2456
      %v2458 = vpop.f32.mrf.mxu0
      %2459 = vmatprep.mubr.f32.mxu0 0.0
      %2460 = vmatmul.mubr.f32.gmra.mxu0 %v2358
      %v2461 = vpop.f32.mrf.mxu0
      %v2462 = vadd.f32 0.0, %v2461
      %v2463 = vpop.f32.mrf.mxu0
      %2464 = vdwg.mxu0
      %v2466 = vsel %vm1157, %v1692, 0
      %v2469 = vsel %vm1157, %v1697, 0
      %v2472 = vsel %vm1157, %v1702, 0
      %v2475 = vsel %vm1157, %v1707, 0
      %v2478 = vsel %vm1157, %v1712, 0
      %v2481 = vsel %vm1157, %v1717, 0
      %v2484 = vsel %vm1157, %v1722, 0
      %v2487 = vsel %vm1157, %v1727, 0
      %2489 = vmatprep.subr.mxu0 0.0
      %2490 = vmatpush1.msra.mxu0 0.0
      %2491 = vmatprep.subr.mxu0 0.0
      %2492 = vmatpush1.msra.mxu0 0.0
      %2493 = vmatprep.subr.mxu0 0.0
      %2494 = vmatpush1.msra.mxu0 0.0
      %2495 = vmatprep.subr.mxu0 0.0
      %2496 = vmatpush1.msra.mxu0 0.0
      %2497 = vmatprep.subr.mxu0 0.0
      %2498 = vmatpush1.msra.mxu0 0.0
      %2499 = vmatprep.subr.mxu0 0.0
      %2500 = vmatpush1.msra.mxu0 0.0
      %2501 = vmatprep.subr.mxu0 0.0
      %2502 = vmatpush1.msra.mxu0 0.0
      %2503 = vmatprep.subr.mxu0 0.0
      %2504 = vmatpush1.msra.mxu0 0.0
      %2505 = vmatprep.subr.mxu0 0.0
      %2506 = vmatpush1.msra.mxu0 0.0
      %2507 = vmatprep.subr.mxu0 0.0
      %2508 = vmatpush1.msra.mxu0 0.0
      %2509 = vmatprep.subr.mxu0 0.0
      %2510 = vmatpush1.msra.mxu0 0.0
      %2511 = vmatprep.subr.mxu0 0.0
      %2512 = vmatpush1.msra.mxu0 0.0
      %2513 = vmatprep.subr.mxu0 0.0
      %2514 = vmatpush1.msra.mxu0 0.0
      %2515 = vmatprep.subr.mxu0 0.0
      %2516 = vmatpush1.msra.mxu0 0.0
      %2517 = vmatprep.subr.mxu0 0.0
      %2518 = vmatpush1.msra.mxu0 0.0
      %2519 = vmatprep.subr.mxu0 0.0
      %2520 = vmatpush1.msra.mxu0 %v1730
      %2521 = vmatprep.subr.mxu0 0.0
      %2522 = vmatpush2.msra.mxu0 0.0
      %2523 = vmatprep.subr.mxu0 0.0
      %2524 = vmatpush2.msra.mxu0 0.0
      %2525 = vmatprep.subr.mxu0 0.0
      %2526 = vmatpush2.msra.mxu0 0.0
      %2527 = vmatprep.subr.mxu0 0.0
      %2528 = vmatpush2.msra.mxu0 0.0
      %2529 = vmatprep.subr.mxu0 0.0
      %2530 = vmatpush2.msra.mxu0 0.0
      %2531 = vmatprep.subr.mxu0 0.0
      %2532 = vmatpush2.msra.mxu0 0.0
      %2533 = vmatprep.subr.mxu0 0.0
      %2534 = vmatpush2.msra.mxu0 0.0
      %2535 = vmatprep.subr.mxu0 0.0
      %2536 = vmatpush2.msra.mxu0 0.0
      %2537 = vmatprep.subr.mxu0 0.0
      %2538 = vmatpush2.msra.mxu0 0.0
      %2539 = vmatprep.subr.mxu0 0.0
      %2540 = vmatpush2.msra.mxu0 0.0
      %2541 = vmatprep.subr.mxu0 0.0
      %2542 = vmatpush2.msra.mxu0 0.0
      %2543 = vmatprep.subr.mxu0 0.0
      %2544 = vmatpush2.msra.mxu0 0.0
      %2545 = vmatprep.subr.mxu0 0.0
      %2546 = vmatpush2.msra.mxu0 0.0
      %2547 = vmatprep.subr.mxu0 0.0
      %2548 = vmatpush2.msra.mxu0 0.0
      %2549 = vmatprep.subr.mxu0 0.0
      %2550 = vmatpush2.msra.mxu0 0.0
      %2551 = vmatprep.subr.mxu0 0.0
      %2552 = vmatpush2.msra.mxu0 0.0
      %2553 = vmatprep.mubr.f32.mxu0 0.0
      %2554 = vmatmul.mubr.f32.gmra.mxu0 %v2466
      %v2555 = vpop.f32.mrf.mxu0
      %v2556 = vadd.f32 %v2427, %v2555
      %v2557 = vpop.f32.mrf.mxu0
      %2558 = vmatprep.mubr.f32.mxu0 0.0
      %2559 = vmatmul.mubr.f32.gmra.mxu0 %v2469
      %v2560 = vpop.f32.mrf.mxu0
      %v2561 = vadd.f32 %v2432, %v2560
      %v2562 = vpop.f32.mrf.mxu0
      %2563 = vmatprep.mubr.f32.mxu0 0.0
      %2564 = vmatmul.mubr.f32.gmra.mxu0 %v2472
      %v2565 = vpop.f32.mrf.mxu0
      %v2566 = vadd.f32 %v2437, %v2565
      %v2567 = vpop.f32.mrf.mxu0
      %2568 = vmatprep.mubr.f32.mxu0 0.0
      %2569 = vmatmul.mubr.f32.gmra.mxu0 %v2475
      %v2570 = vpop.f32.mrf.mxu0
      %v2571 = vadd.f32 %v2442, %v2570
      %v2572 = vpop.f32.mrf.mxu0
      %2573 = vmatprep.mubr.f32.mxu0 0.0
      %2574 = vmatmul.mubr.f32.gmra.mxu0 %v2478
      %v2575 = vpop.f32.mrf.mxu0
      %v2576 = vadd.f32 %v2447, %v2575
      %v2577 = vpop.f32.mrf.mxu0
      %2578 = vmatprep.mubr.f32.mxu0 0.0
      %2579 = vmatmul.mubr.f32.gmra.mxu0 %v2481
      %v2580 = vpop.f32.mrf.mxu0
      %v2581 = vadd.f32 %v2452, %v2580
      %v2582 = vpop.f32.mrf.mxu0
      %2583 = vmatprep.mubr.f32.mxu0 0.0
      %2584 = vmatmul.mubr.f32.gmra.mxu0 %v2484
      %v2585 = vpop.f32.mrf.mxu0
      %v2586 = vadd.f32 %v2457, %v2585
      %v2587 = vpop.f32.mrf.mxu0
      %2588 = vmatprep.mubr.f32.mxu0 0.0
      %2589 = vmatmul.mubr.f32.gmra.mxu0 %v2487
      %v2590 = vpop.f32.mrf.mxu0
      %v2591 = vadd.f32 %v2462, %v2590
      %v2592 = vpop.f32.mrf.mxu0
      %2593 = vdwg.mxu0
      %s2594 = scalar_lea.vmem %s7, 128
      %v2595 = vld [vmem:[%s2594] sm:$0xff]
      %v2596 = vld [vmem:[%s2594 + $0x8] sm:$0xff]
      %v2597 = vld [vmem:[%s2594 + $0x10] sm:$0xff]
      %v2598 = vld [vmem:[%s2594 + $0x18] sm:$0xff]
      %v2599 = vld [vmem:[%s2594 + $0x20] sm:$0xff]
      %v2600 = vld [vmem:[%s2594 + $0x28] sm:$0xff]
      %v2601 = vld [vmem:[%s2594 + $0x30] sm:$0xff]
      %v2602 = vld [vmem:[%s2594 + $0x38] sm:$0xff]
      %2603 = vrot.lane.b32.xlu0 %v1109, 112
      %v2604 = vpop.permute.xlu0 %2603
      %2605 = vrot.lane.b32.xlu0 %v1110, 112
      %v2606 = vpop.permute.xlu0 %2605
      %2607 = vrot.lane.b32.xlu0 %v1111, 112
      %v2608 = vpop.permute.xlu0 %2607
      %2609 = vrot.lane.b32.xlu0 %v1112, 112
      %v2610 = vpop.permute.xlu0 %2609
      %2611 = vrot.lane.b32.xlu0 %v1113, 112
      %v2612 = vpop.permute.xlu0 %2611
      %2613 = vrot.lane.b32.xlu0 %v1114, 112
      %v2614 = vpop.permute.xlu0 %2613
      %2615 = vrot.lane.b32.xlu0 %v1115, 112
      %v2616 = vpop.permute.xlu0 %2615
      %2617 = vrot.lane.b32.xlu0 %v1116, 112
      %v2618 = vpop.permute.xlu0 %2617
      %2619 = vrot.lane.b32.xlu0 %v922, 80
      %v2620 = vpop.permute.xlu0 %2619
      %2621 = vrot.lane.b32.xlu0 %v927, 80
      %v2622 = vpop.permute.xlu0 %2621
      %2623 = vrot.lane.b32.xlu0 %v932, 80
      %v2624 = vpop.permute.xlu0 %2623
      %2625 = vrot.lane.b32.xlu0 %v937, 80
      %v2626 = vpop.permute.xlu0 %2625
      %2627 = vrot.lane.b32.xlu0 %v942, 80
      %v2628 = vpop.permute.xlu0 %2627
      %2629 = vrot.lane.b32.xlu0 %v947, 80
      %v2630 = vpop.permute.xlu0 %2629
      %2631 = vrot.lane.b32.xlu0 %v952, 80
      %v2632 = vpop.permute.xlu0 %2631
      %2633 = vrot.lane.b32.xlu0 %v957, 80
      %v2634 = vpop.permute.xlu0 %2633
      %v2635 = vsel %vm1157, %v2604, 0
      %v2637 = vsel %vm1157, %v2606, 0
      %v2639 = vsel %vm1157, %v2608, 0
      %v2641 = vsel %vm1157, %v2610, 0
      %v2643 = vsel %vm1157, %v2612, 0
      %v2645 = vsel %vm1157, %v2614, 0
      %v2647 = vsel %vm1157, %v2616, 0
      %v2649 = vsel %vm1157, %v2618, 0
      %v2651 = vsel %vm1157, %v2620, 0
      %v2653 = vsel %vm1157, %v2622, 0
      %v2655 = vsel %vm1157, %v2624, 0
      %v2657 = vsel %vm1157, %v2626, 0
      %v2659 = vsel %vm1157, %v2628, 0
      %v2661 = vsel %vm1157, %v2630, 0
      %v2663 = vsel %vm1157, %v2632, 0
      %v2665 = vsel %vm1157, %v2634, 0
      %2667 = vmatprep.subr.mxu0 0.0
      %2668 = vmatpush1.xpose.msra.mxu0 0.0
      %2669 = vmatprep.subr.mxu0 0.0
      %2670 = vmatpush1.xpose.msra.mxu0 0.0
      %2671 = vmatprep.subr.mxu0 0.0
      %2672 = vmatpush1.xpose.msra.mxu0 0.0
      %2673 = vmatprep.subr.mxu0 0.0
      %2674 = vmatpush1.xpose.msra.mxu0 0.0
      %2675 = vmatprep.subr.mxu0 0.0
      %2676 = vmatpush1.xpose.msra.mxu0 0.0
      %2677 = vmatprep.subr.mxu0 0.0
      %2678 = vmatpush1.xpose.msra.mxu0 0.0
      %2679 = vmatprep.subr.mxu0 0.0
      %2680 = vmatpush1.xpose.msra.mxu0 0.0
      %2681 = vmatprep.subr.mxu0 0.0
      %2682 = vmatpush1.xpose.msra.mxu0 0.0
      %2683 = vmatprep.subr.mxu0 0.0
      %2684 = vmatpush1.xpose.msra.mxu0 %v2665
      %2685 = vmatprep.subr.mxu0 0.0
      %2686 = vmatpush1.xpose.msra.mxu0 %v2663
      %2687 = vmatprep.subr.mxu0 0.0
      %2688 = vmatpush1.xpose.msra.mxu0 %v2661
      %2689 = vmatprep.subr.mxu0 0.0
      %2690 = vmatpush1.xpose.msra.mxu0 %v2659
      %2691 = vmatprep.subr.mxu0 0.0
      %2692 = vmatpush1.xpose.msra.mxu0 %v2657
      %2693 = vmatprep.subr.mxu0 0.0
      %2694 = vmatpush1.xpose.msra.mxu0 %v2655
      %2695 = vmatprep.subr.mxu0 0.0
      %2696 = vmatpush1.xpose.msra.mxu0 %v2653
      %2697 = vmatprep.subr.mxu0 0.0
      %2698 = vmatpush1.xpose.msra.mxu0 %v2651
      %2699 = vmatprep.subr.mxu0 0.0
      %2700 = vmatpush2.xpose.msra.mxu0 0.0
      %2701 = vmatprep.subr.mxu0 0.0
      %2702 = vmatpush2.xpose.msra.mxu0 0.0
      %2703 = vmatprep.subr.mxu0 0.0
      %2704 = vmatpush2.xpose.msra.mxu0 0.0
      %2705 = vmatprep.subr.mxu0 0.0
      %2706 = vmatpush2.xpose.msra.mxu0 0.0
      %2707 = vmatprep.subr.mxu0 0.0
      %2708 = vmatpush2.xpose.msra.mxu0 0.0
      %2709 = vmatprep.subr.mxu0 0.0
      %2710 = vmatpush2.xpose.msra.mxu0 0.0
      %2711 = vmatprep.subr.mxu0 0.0
      %2712 = vmatpush2.xpose.msra.mxu0 0.0
      %2713 = vmatprep.subr.mxu0 0.0
      %2714 = vmatpush2.xpose.msra.mxu0 0.0
      %2715 = vmatprep.subr.mxu0 0.0
      %2716 = vmatpush2.xpose.msra.mxu0 0.0
      %2717 = vmatprep.subr.mxu0 0.0
      %2718 = vmatpush2.xpose.msra.mxu0 0.0
      %2719 = vmatprep.subr.mxu0 0.0
      %2720 = vmatpush2.xpose.msra.mxu0 0.0
      %2721 = vmatprep.subr.mxu0 0.0
      %2722 = vmatpush2.xpose.msra.mxu0 0.0
      %2723 = vmatprep.subr.mxu0 0.0
      %2724 = vmatpush2.xpose.msra.mxu0 0.0
      %2725 = vmatprep.subr.mxu0 0.0
      %2726 = vmatpush2.xpose.msra.mxu0 0.0
      %2727 = vmatprep.subr.mxu0 0.0
      %2728 = vmatpush2.xpose.msra.mxu0 0.0
      %2729 = vmatprep.subr.mxu0 0.0
      %2730 = vmatpush2.xpose.msra.mxu0 0.0
      %2731 = vmatprep.mubr.f32.mxu0 0.0
      %2732 = vmatmul.mubr.f32.gmra.mxu0 %v2635
      %v2733 = vpop.f32.mrf.mxu0
      %v2734 = vadd.f32 %v2595, %v2733
      %v2735 = vpop.f32.mrf.mxu0
      %2736 = vmatprep.mubr.f32.mxu0 0.0
      %2737 = vmatmul.mubr.f32.gmra.mxu0 %v2637
      %v2738 = vpop.f32.mrf.mxu0
      %v2739 = vadd.f32 %v2596, %v2738
      %v2740 = vpop.f32.mrf.mxu0
      %2741 = vmatprep.mubr.f32.mxu0 0.0
      %2742 = vmatmul.mubr.f32.gmra.mxu0 %v2639
      %v2743 = vpop.f32.mrf.mxu0
      %v2744 = vadd.f32 %v2597, %v2743
      %v2745 = vpop.f32.mrf.mxu0
      %2746 = vmatprep.mubr.f32.mxu0 0.0
      %2747 = vmatmul.mubr.f32.gmra.mxu0 %v2641
      %v2748 = vpop.f32.mrf.mxu0
      %v2749 = vadd.f32 %v2598, %v2748
      %v2750 = vpop.f32.mrf.mxu0
      %2751 = vmatprep.mubr.f32.mxu0 0.0
      %2752 = vmatmul.mubr.f32.gmra.mxu0 %v2643
      %v2753 = vpop.f32.mrf.mxu0
      %v2754 = vadd.f32 %v2599, %v2753
      %v2755 = vpop.f32.mrf.mxu0
      %2756 = vmatprep.mubr.f32.mxu0 0.0
      %2757 = vmatmul.mubr.f32.gmra.mxu0 %v2645
      %v2758 = vpop.f32.mrf.mxu0
      %v2759 = vadd.f32 %v2600, %v2758
      %v2760 = vpop.f32.mrf.mxu0
      %2761 = vmatprep.mubr.f32.mxu0 0.0
      %2762 = vmatmul.mubr.f32.gmra.mxu0 %v2647
      %v2763 = vpop.f32.mrf.mxu0
      %v2764 = vadd.f32 %v2601, %v2763
      %v2765 = vpop.f32.mrf.mxu0
      %2766 = vmatprep.mubr.f32.mxu0 0.0
      %2767 = vmatmul.mubr.f32.gmra.mxu0 %v2649
      %v2768 = vpop.f32.mrf.mxu0
      %v2769 = vadd.f32 %v2602, %v2768
      %v2770 = vpop.f32.mrf.mxu0
      %2771 = vdwg.mxu0
      %2772 = vrot.lane.b32.xlu0 %v1117, 112
      %v2773 = vpop.permute.xlu0 %2772
      %2774 = vrot.lane.b32.xlu0 %v1118, 112
      %v2775 = vpop.permute.xlu0 %2774
      %2776 = vrot.lane.b32.xlu0 %v1119, 112
      %v2777 = vpop.permute.xlu0 %2776
      %2778 = vrot.lane.b32.xlu0 %v1120, 112
      %v2779 = vpop.permute.xlu0 %2778
      %2780 = vrot.lane.b32.xlu0 %v1121, 112
      %v2781 = vpop.permute.xlu0 %2780
      %2782 = vrot.lane.b32.xlu0 %v1122, 112
      %v2783 = vpop.permute.xlu0 %2782
      %2784 = vrot.lane.b32.xlu0 %v1123, 112
      %v2785 = vpop.permute.xlu0 %2784
      %2786 = vrot.lane.b32.xlu0 %v1124, 112
      %v2787 = vpop.permute.xlu0 %2786
      %2788 = vrot.lane.b32.xlu0 %v1062, 80
      %v2789 = vpop.permute.xlu0 %2788
      %2790 = vrot.lane.b32.xlu0 %v1067, 80
      %v2791 = vpop.permute.xlu0 %2790
      %2792 = vrot.lane.b32.xlu0 %v1072, 80
      %v2793 = vpop.permute.xlu0 %2792
      %2794 = vrot.lane.b32.xlu0 %v1077, 80
      %v2795 = vpop.permute.xlu0 %2794
      %2796 = vrot.lane.b32.xlu0 %v1082, 80
      %v2797 = vpop.permute.xlu0 %2796
      %2798 = vrot.lane.b32.xlu0 %v1087, 80
      %v2799 = vpop.permute.xlu0 %2798
      %2800 = vrot.lane.b32.xlu0 %v1092, 80
      %v2801 = vpop.permute.xlu0 %2800
      %2802 = vrot.lane.b32.xlu0 %v1097, 80
      %v2803 = vpop.permute.xlu0 %2802
      %v2804 = vsel %vm1157, %v2773, 0
      %v2806 = vsel %vm1157, %v2775, 0
      %v2808 = vsel %vm1157, %v2777, 0
      %v2810 = vsel %vm1157, %v2779, 0
      %v2812 = vsel %vm1157, %v2781, 0
      %v2814 = vsel %vm1157, %v2783, 0
      %v2816 = vsel %vm1157, %v2785, 0
      %v2818 = vsel %vm1157, %v2787, 0
      %v2820 = vsel %vm1157, %v2789, 0
      %v2822 = vsel %vm1157, %v2791, 0
      %v2824 = vsel %vm1157, %v2793, 0
      %v2826 = vsel %vm1157, %v2795, 0
      %v2828 = vsel %vm1157, %v2797, 0
      %v2830 = vsel %vm1157, %v2799, 0
      %v2832 = vsel %vm1157, %v2801, 0
      %v2834 = vsel %vm1157, %v2803, 0
      %2836 = vmatprep.subr.mxu0 0.0
      %2837 = vmatpush1.xpose.msra.mxu0 0.0
      %2838 = vmatprep.subr.mxu0 0.0
      %2839 = vmatpush1.xpose.msra.mxu0 0.0
      %2840 = vmatprep.subr.mxu0 0.0
      %2841 = vmatpush1.xpose.msra.mxu0 0.0
      %2842 = vmatprep.subr.mxu0 0.0
      %2843 = vmatpush1.xpose.msra.mxu0 0.0
      %2844 = vmatprep.subr.mxu0 0.0
      %2845 = vmatpush1.xpose.msra.mxu0 0.0
      %2846 = vmatprep.subr.mxu0 0.0
      %2847 = vmatpush1.xpose.msra.mxu0 0.0
      %2848 = vmatprep.subr.mxu0 0.0
      %2849 = vmatpush1.xpose.msra.mxu0 0.0
      %2850 = vmatprep.subr.mxu0 0.0
      %2851 = vmatpush1.xpose.msra.mxu0 0.0
      %2852 = vmatprep.subr.mxu0 0.0
      %2853 = vmatpush1.xpose.msra.mxu0 %v2834
      %2854 = vmatprep.subr.mxu0 0.0
      %2855 = vmatpush1.xpose.msra.mxu0 %v2832
      %2856 = vmatprep.subr.mxu0 0.0
      %2857 = vmatpush1.xpose.msra.mxu0 %v2830
      %2858 = vmatprep.subr.mxu0 0.0
      %2859 = vmatpush1.xpose.msra.mxu0 %v2828
      %2860 = vmatprep.subr.mxu0 0.0
      %2861 = vmatpush1.xpose.msra.mxu0 %v2826
      %2862 = vmatprep.subr.mxu0 0.0
      %2863 = vmatpush1.xpose.msra.mxu0 %v2824
      %2864 = vmatprep.subr.mxu0 0.0
      %2865 = vmatpush1.xpose.msra.mxu0 %v2822
      %2866 = vmatprep.subr.mxu0 0.0
      %2867 = vmatpush1.xpose.msra.mxu0 %v2820
      %2868 = vmatprep.subr.mxu0 0.0
      %2869 = vmatpush2.xpose.msra.mxu0 0.0
      %2870 = vmatprep.subr.mxu0 0.0
      %2871 = vmatpush2.xpose.msra.mxu0 0.0
      %2872 = vmatprep.subr.mxu0 0.0
      %2873 = vmatpush2.xpose.msra.mxu0 0.0
      %2874 = vmatprep.subr.mxu0 0.0
      %2875 = vmatpush2.xpose.msra.mxu0 0.0
      %2876 = vmatprep.subr.mxu0 0.0
      %2877 = vmatpush2.xpose.msra.mxu0 0.0
      %2878 = vmatprep.subr.mxu0 0.0
      %2879 = vmatpush2.xpose.msra.mxu0 0.0
      %2880 = vmatprep.subr.mxu0 0.0
      %2881 = vmatpush2.xpose.msra.mxu0 0.0
      %2882 = vmatprep.subr.mxu0 0.0
      %2883 = vmatpush2.xpose.msra.mxu0 0.0
      %2884 = vmatprep.subr.mxu0 0.0
      %2885 = vmatpush2.xpose.msra.mxu0 0.0
      %2886 = vmatprep.subr.mxu0 0.0
      %2887 = vmatpush2.xpose.msra.mxu0 0.0
      %2888 = vmatprep.subr.mxu0 0.0
      %2889 = vmatpush2.xpose.msra.mxu0 0.0
      %2890 = vmatprep.subr.mxu0 0.0
      %2891 = vmatpush2.xpose.msra.mxu0 0.0
      %2892 = vmatprep.subr.mxu0 0.0
      %2893 = vmatpush2.xpose.msra.mxu0 0.0
      %2894 = vmatprep.subr.mxu0 0.0
      %2895 = vmatpush2.xpose.msra.mxu0 0.0
      %2896 = vmatprep.subr.mxu0 0.0
      %2897 = vmatpush2.xpose.msra.mxu0 0.0
      %2898 = vmatprep.subr.mxu0 0.0
      %2899 = vmatpush2.xpose.msra.mxu0 0.0
      %2900 = vmatprep.mubr.f32.mxu0 0.0
      %2901 = vmatmul.mubr.f32.gmra.mxu0 %v2804
      %v2902 = vpop.f32.mrf.mxu0
      %v2903 = vadd.f32 %v2595, %v2902
      %v2904 = vpop.f32.mrf.mxu0
      %2905 = vmatprep.mubr.f32.mxu0 0.0
      %2906 = vmatmul.mubr.f32.gmra.mxu0 %v2806
      %v2907 = vpop.f32.mrf.mxu0
      %v2908 = vadd.f32 %v2596, %v2907
      %v2909 = vpop.f32.mrf.mxu0
      %2910 = vmatprep.mubr.f32.mxu0 0.0
      %2911 = vmatmul.mubr.f32.gmra.mxu0 %v2808
      %v2912 = vpop.f32.mrf.mxu0
      %v2913 = vadd.f32 %v2597, %v2912
      %v2914 = vpop.f32.mrf.mxu0
      %2915 = vmatprep.mubr.f32.mxu0 0.0
      %2916 = vmatmul.mubr.f32.gmra.mxu0 %v2810
      %v2917 = vpop.f32.mrf.mxu0
      %v2918 = vadd.f32 %v2598, %v2917
      %v2919 = vpop.f32.mrf.mxu0
      %2920 = vmatprep.mubr.f32.mxu0 0.0
      %2921 = vmatmul.mubr.f32.gmra.mxu0 %v2812
      %v2922 = vpop.f32.mrf.mxu0
      %v2923 = vadd.f32 %v2599, %v2922
      %v2924 = vpop.f32.mrf.mxu0
      %2925 = vmatprep.mubr.f32.mxu0 0.0
      %2926 = vmatmul.mubr.f32.gmra.mxu0 %v2814
      %v2927 = vpop.f32.mrf.mxu0
      %v2928 = vadd.f32 %v2600, %v2927
      %v2929 = vpop.f32.mrf.mxu0
      %2930 = vmatprep.mubr.f32.mxu0 0.0
      %2931 = vmatmul.mubr.f32.gmra.mxu0 %v2816
      %v2932 = vpop.f32.mrf.mxu0
      %v2933 = vadd.f32 %v2601, %v2932
      %v2934 = vpop.f32.mrf.mxu0
      %2935 = vmatprep.mubr.f32.mxu0 0.0
      %2936 = vmatmul.mubr.f32.gmra.mxu0 %v2818
      %v2937 = vpop.f32.mrf.mxu0
      %v2938 = vadd.f32 %v2602, %v2937
      %v2939 = vpop.f32.mrf.mxu0
      %2940 = vdwg.mxu0
      %v2941 = vmul.f32 %v2734, %v2903
      %v2942 = vmul.f32 %v2739, %v2908
      %v2943 = vmul.f32 %v2744, %v2913
      %v2944 = vmul.f32 %v2749, %v2918
      %v2945 = vmul.f32 %v2754, %v2923
      %v2946 = vmul.f32 %v2759, %v2928
      %v2947 = vmul.f32 %v2764, %v2933
      %v2948 = vmul.f32 %v2769, %v2938
      %v2949 = vadd.f32 %v2941, %v1101
      %v2950 = vadd.f32 %v2942, %v1102
      %v2951 = vadd.f32 %v2943, %v1103
      %v2952 = vadd.f32 %v2944, %v1104
      %v2953 = vadd.f32 %v2945, %v1105
      %v2954 = vadd.f32 %v2946, %v1106
      %v2955 = vadd.f32 %v2947, %v1107
      %v2956 = vadd.f32 %v2948, %v1108
      %v2957 = vsel %vm1488, %v2949, -inf
      %2958 = vmax.xlane.f32.xlu0 %v2957
      %v2959 = vpop.xlane.xlu0 %2958
      %v2960 = vsel %vm1488, %v2950, -inf
      %2961 = vmax.xlane.f32.xlu0 %v2960
      %v2962 = vpop.xlane.xlu0 %2961
      %v2963 = vsel %vm1488, %v2951, -inf
      %2964 = vmax.xlane.f32.xlu0 %v2963
      %v2965 = vpop.xlane.xlu0 %2964
      %v2966 = vsel %vm1488, %v2952, -inf
      %2967 = vmax.xlane.f32.xlu0 %v2966
      %v2968 = vpop.xlane.xlu0 %2967
      %v2969 = vsel %vm1488, %v2953, -inf
      %2970 = vmax.xlane.f32.xlu0 %v2969
      %v2971 = vpop.xlane.xlu0 %2970
      %v2972 = vsel %vm1488, %v2954, -inf
      %2973 = vmax.xlane.f32.xlu0 %v2972
      %v2974 = vpop.xlane.xlu0 %2973
      %v2975 = vsel %vm1488, %v2955, -inf
      %2976 = vmax.xlane.f32.xlu0 %v2975
      %v2977 = vpop.xlane.xlu0 %2976
      %v2978 = vsel %vm1488, %v2956, -inf
      %2979 = vmax.xlane.f32.xlu0 %v2978
      %v2980 = vpop.xlane.xlu0 %2979
      %v2981 = vsub.f32 %v2949, %v2959
      %v2982 = vsub.f32 %v2950, %v2962
      %v2983 = vsub.f32 %v2951, %v2965
      %v2984 = vsub.f32 %v2952, %v2968
      %v2985 = vsub.f32 %v2953, %v2971
      %v2986 = vsub.f32 %v2954, %v2974
      %v2987 = vsub.f32 %v2955, %v2977
      %v2988 = vsub.f32 %v2956, %v2980
      %v2989 = vmul.f32 %v2981, 1.442695
      %v2990 = vpow.pop %v2989
      %v2991 = vmul.f32 %v2982, 1.442695
      %v2992 = vpow.pop %v2991
      %v2993 = vmul.f32 %v2983, 1.442695
      %v2994 = vpow.pop %v2993
      %v2995 = vmul.f32 %v2984, 1.442695
      %v2996 = vpow.pop %v2995
      %v2997 = vmul.f32 %v2985, 1.442695
      %v2998 = vpow.pop %v2997
      %v2999 = vmul.f32 %v2986, 1.442695
      %v3000 = vpow.pop %v2999
      %v3001 = vmul.f32 %v2987, 1.442695
      %v3002 = vpow.pop %v3001
      %v3003 = vmul.f32 %v2988, 1.442695
      %v3004 = vpow.pop %v3003
      %v3005 = vsel %vm1488, %v2990, 0.0
      %3006 = vadd.xlane.f32.xlu0 %v3005
      %v3007 = vpop.xlane.xlu0 %3006
      %v3008 = vsel %vm1488, %v2992, 0.0
      %3009 = vadd.xlane.f32.xlu0 %v3008
      %v3010 = vpop.xlane.xlu0 %3009
      %v3011 = vsel %vm1488, %v2994, 0.0
      %3012 = vadd.xlane.f32.xlu0 %v3011
      %v3013 = vpop.xlane.xlu0 %3012
      %v3014 = vsel %vm1488, %v2996, 0.0
      %3015 = vadd.xlane.f32.xlu0 %v3014
      %v3016 = vpop.xlane.xlu0 %3015
      %v3017 = vsel %vm1488, %v2998, 0.0
      %3018 = vadd.xlane.f32.xlu0 %v3017
      %v3019 = vpop.xlane.xlu0 %3018
      %v3020 = vsel %vm1488, %v3000, 0.0
      %3021 = vadd.xlane.f32.xlu0 %v3020
      %v3022 = vpop.xlane.xlu0 %3021
      %v3023 = vsel %vm1488, %v3002, 0.0
      %3024 = vadd.xlane.f32.xlu0 %v3023
      %v3025 = vpop.xlane.xlu0 %3024
      %v3026 = vsel %vm1488, %v3004, 0.0
      %3027 = vadd.xlane.f32.xlu0 %v3026
      %v3028 = vpop.xlane.xlu0 %3027
      %v3029 = vrcp.pop %v3007
      %v3030 = vrcp.pop %v3010
      %v3031 = vrcp.pop %v3013
      %v3032 = vrcp.pop %v3016
      %v3033 = vrcp.pop %v3019
      %v3034 = vrcp.pop %v3022
      %v3035 = vrcp.pop %v3025
      %v3036 = vrcp.pop %v3028
      %v3037 = vmul.f32 %v2990, %v3029
      %v3038 = vmul.f32 %v2992, %v3030
      %v3039 = vmul.f32 %v2994, %v3031
      %v3040 = vmul.f32 %v2996, %v3032
      %v3041 = vmul.f32 %v2998, %v3033
      %v3042 = vmul.f32 %v3000, %v3034
      %v3043 = vmul.f32 %v3002, %v3035
      %v3044 = vmul.f32 %v3004, %v3036
      %3045 = vrot.lane.b32.xlu0 %v922, 48
      %v3046 = vpop.permute.xlu0 %3045
      %3047 = vrot.lane.b32.xlu0 %v927, 48
      %v3048 = vpop.permute.xlu0 %3047
      %3049 = vrot.lane.b32.xlu0 %v932, 48
      %v3050 = vpop.permute.xlu0 %3049
      %3051 = vrot.lane.b32.xlu0 %v937, 48
      %v3052 = vpop.permute.xlu0 %3051
      %3053 = vrot.lane.b32.xlu0 %v942, 48
      %v3054 = vpop.permute.xlu0 %3053
      %3055 = vrot.lane.b32.xlu0 %v947, 48
      %v3056 = vpop.permute.xlu0 %3055
      %3057 = vrot.lane.b32.xlu0 %v952, 48
      %v3058 = vpop.permute.xlu0 %3057
      %3059 = vrot.lane.b32.xlu0 %v957, 48
      %v3060 = vpop.permute.xlu0 %3059
      %v3070 = vsel %vm1488, %v3037, 0
      %v3073 = vsel %vm1488, %v3038, 0
      %v3076 = vsel %vm1488, %v3039, 0
      %v3079 = vsel %vm1488, %v3040, 0
      %v3082 = vsel %vm1488, %v3041, 0
      %v3085 = vsel %vm1488, %v3042, 0
      %v3088 = vsel %vm1488, %v3043, 0
      %v3091 = vsel %vm1488, %v3044, 0
      %3093 = vmatprep.subr.mxu0 0.0
      %3094 = vmatpush1.msra.mxu0 0.0
      %3095 = vmatprep.subr.mxu0 0.0
      %3096 = vmatpush1.msra.mxu0 0.0
      %3097 = vmatprep.subr.mxu0 0.0
      %3098 = vmatpush1.msra.mxu0 0.0
      %3099 = vmatprep.subr.mxu0 0.0
      %3100 = vmatpush1.msra.mxu0 0.0
      %3101 = vmatprep.subr.mxu0 0.0
      %3102 = vmatpush1.msra.mxu0 0.0
      %3103 = vmatprep.subr.mxu0 0.0
      %3104 = vmatpush1.msra.mxu0 0.0
      %3105 = vmatprep.subr.mxu0 0.0
      %3106 = vmatpush1.msra.mxu0 0.0
      %3107 = vmatprep.subr.mxu0 0.0
      %3108 = vmatpush1.msra.mxu0 0.0
      %3109 = vmatprep.subr.mxu0 0.0
      %3110 = vmatpush1.msra.mxu0 %v3060
      %3111 = vmatprep.subr.mxu0 0.0
      %3112 = vmatpush1.msra.mxu0 %v3058
      %3113 = vmatprep.subr.mxu0 0.0
      %3114 = vmatpush1.msra.mxu0 %v3056
      %3115 = vmatprep.subr.mxu0 0.0
      %3116 = vmatpush1.msra.mxu0 %v3054
      %3117 = vmatprep.subr.mxu0 0.0
      %3118 = vmatpush1.msra.mxu0 %v3052
      %3119 = vmatprep.subr.mxu0 0.0
      %3120 = vmatpush1.msra.mxu0 %v3050
      %3121 = vmatprep.subr.mxu0 0.0
      %3122 = vmatpush1.msra.mxu0 %v3048
      %3123 = vmatprep.subr.mxu0 0.0
      %3124 = vmatpush1.msra.mxu0 %v3046
      %3125 = vmatprep.subr.mxu0 0.0
      %3126 = vmatpush2.msra.mxu0 0.0
      %3127 = vmatprep.subr.mxu0 0.0
      %3128 = vmatpush2.msra.mxu0 0.0
      %3129 = vmatprep.subr.mxu0 0.0
      %3130 = vmatpush2.msra.mxu0 0.0
      %3131 = vmatprep.subr.mxu0 0.0
      %3132 = vmatpush2.msra.mxu0 0.0
      %3133 = vmatprep.subr.mxu0 0.0
      %3134 = vmatpush2.msra.mxu0 0.0
      %3135 = vmatprep.subr.mxu0 0.0
      %3136 = vmatpush2.msra.mxu0 0.0
      %3137 = vmatprep.subr.mxu0 0.0
      %3138 = vmatpush2.msra.mxu0 0.0
      %3139 = vmatprep.subr.mxu0 0.0
      %3140 = vmatpush2.msra.mxu0 0.0
      %3141 = vmatprep.subr.mxu0 0.0
      %3142 = vmatpush2.msra.mxu0 0.0
      %3143 = vmatprep.subr.mxu0 0.0
      %3144 = vmatpush2.msra.mxu0 0.0
      %3145 = vmatprep.subr.mxu0 0.0
      %3146 = vmatpush2.msra.mxu0 0.0
      %3147 = vmatprep.subr.mxu0 0.0
      %3148 = vmatpush2.msra.mxu0 0.0
      %3149 = vmatprep.subr.mxu0 0.0
      %3150 = vmatpush2.msra.mxu0 0.0
      %3151 = vmatprep.subr.mxu0 0.0
      %3152 = vmatpush2.msra.mxu0 0.0
      %3153 = vmatprep.subr.mxu0 0.0
      %3154 = vmatpush2.msra.mxu0 0.0
      %3155 = vmatprep.subr.mxu0 0.0
      %3156 = vmatpush2.msra.mxu0 0.0
      %3157 = vmatprep.mubr.f32.mxu0 0.0
      %3158 = vmatmul.mubr.f32.gmra.mxu0 %v3070
      %v3159 = vpop.f32.mrf.mxu0
      %v3160 = vadd.f32 0.0, %v3159
      %v3161 = vpop.f32.mrf.mxu0
      %3162 = vmatprep.mubr.f32.mxu0 0.0
      %3163 = vmatmul.mubr.f32.gmra.mxu0 %v3073
      %v3164 = vpop.f32.mrf.mxu0
      %v3165 = vadd.f32 0.0, %v3164
      %v3166 = vpop.f32.mrf.mxu0
      %3167 = vmatprep.mubr.f32.mxu0 0.0
      %3168 = vmatmul.mubr.f32.gmra.mxu0 %v3076
      %v3169 = vpop.f32.mrf.mxu0
      %v3170 = vadd.f32 0.0, %v3169
      %v3171 = vpop.f32.mrf.mxu0
      %3172 = vmatprep.mubr.f32.mxu0 0.0
      %3173 = vmatmul.mubr.f32.gmra.mxu0 %v3079
      %v3174 = vpop.f32.mrf.mxu0
      %v3175 = vadd.f32 0.0, %v3174
      %v3176 = vpop.f32.mrf.mxu0
      %3177 = vmatprep.mubr.f32.mxu0 0.0
      %3178 = vmatmul.mubr.f32.gmra.mxu0 %v3082
      %v3179 = vpop.f32.mrf.mxu0
      %v3180 = vadd.f32 0.0, %v3179
      %v3181 = vpop.f32.mrf.mxu0
      %3182 = vmatprep.mubr.f32.mxu0 0.0
      %3183 = vmatmul.mubr.f32.gmra.mxu0 %v3085
      %v3184 = vpop.f32.mrf.mxu0
      %v3185 = vadd.f32 0.0, %v3184
      %v3186 = vpop.f32.mrf.mxu0
      %3187 = vmatprep.mubr.f32.mxu0 0.0
      %3188 = vmatmul.mubr.f32.gmra.mxu0 %v3088
      %v3189 = vpop.f32.mrf.mxu0
      %v3190 = vadd.f32 0.0, %v3189
      %v3191 = vpop.f32.mrf.mxu0
      %3192 = vmatprep.mubr.f32.mxu0 0.0
      %3193 = vmatmul.mubr.f32.gmra.mxu0 %v3091
      %v3194 = vpop.f32.mrf.mxu0
      %v3195 = vadd.f32 0.0, %v3194
      %v3196 = vpop.f32.mrf.mxu0
      %3197 = vdwg.mxu0
      %v3198 = vld [vmem:[%s8 + $0x10] sm:$0xff]
      %v3200 = vsel %vm1157, %v3160, 0
      %v3203 = vsel %vm1157, %v3165, 0
      %v3206 = vsel %vm1157, %v3170, 0
      %v3209 = vsel %vm1157, %v3175, 0
      %v3212 = vsel %vm1157, %v3180, 0
      %v3215 = vsel %vm1157, %v3185, 0
      %v3218 = vsel %vm1157, %v3190, 0
      %v3221 = vsel %vm1157, %v3195, 0
      %3223 = vmatprep.subr.mxu0 0.0
      %3224 = vmatpush1.msra.mxu0 0.0
      %3225 = vmatprep.subr.mxu0 0.0
      %3226 = vmatpush1.msra.mxu0 0.0
      %3227 = vmatprep.subr.mxu0 0.0
      %3228 = vmatpush1.msra.mxu0 0.0
      %3229 = vmatprep.subr.mxu0 0.0
      %3230 = vmatpush1.msra.mxu0 0.0
      %3231 = vmatprep.subr.mxu0 0.0
      %3232 = vmatpush1.msra.mxu0 0.0
      %3233 = vmatprep.subr.mxu0 0.0
      %3234 = vmatpush1.msra.mxu0 0.0
      %3235 = vmatprep.subr.mxu0 0.0
      %3236 = vmatpush1.msra.mxu0 0.0
      %3237 = vmatprep.subr.mxu0 0.0
      %3238 = vmatpush1.msra.mxu0 0.0
      %3239 = vmatprep.subr.mxu0 0.0
      %3240 = vmatpush1.msra.mxu0 0.0
      %3241 = vmatprep.subr.mxu0 0.0
      %3242 = vmatpush1.msra.mxu0 0.0
      %3243 = vmatprep.subr.mxu0 0.0
      %3244 = vmatpush1.msra.mxu0 0.0
      %3245 = vmatprep.subr.mxu0 0.0
      %3246 = vmatpush1.msra.mxu0 0.0
      %3247 = vmatprep.subr.mxu0 0.0
      %3248 = vmatpush1.msra.mxu0 0.0
      %3249 = vmatprep.subr.mxu0 0.0
      %3250 = vmatpush1.msra.mxu0 0.0
      %3251 = vmatprep.subr.mxu0 0.0
      %3252 = vmatpush1.msra.mxu0 0.0
      %3253 = vmatprep.subr.mxu0 0.0
      %3254 = vmatpush1.msra.mxu0 %v3198
      %3255 = vmatprep.subr.mxu0 0.0
      %3256 = vmatpush2.msra.mxu0 0.0
      %3257 = vmatprep.subr.mxu0 0.0
      %3258 = vmatpush2.msra.mxu0 0.0
      %3259 = vmatprep.subr.mxu0 0.0
      %3260 = vmatpush2.msra.mxu0 0.0
      %3261 = vmatprep.subr.mxu0 0.0
      %3262 = vmatpush2.msra.mxu0 0.0
      %3263 = vmatprep.subr.mxu0 0.0
      %3264 = vmatpush2.msra.mxu0 0.0
      %3265 = vmatprep.subr.mxu0 0.0
      %3266 = vmatpush2.msra.mxu0 0.0
      %3267 = vmatprep.subr.mxu0 0.0
      %3268 = vmatpush2.msra.mxu0 0.0
      %3269 = vmatprep.subr.mxu0 0.0
      %3270 = vmatpush2.msra.mxu0 0.0
      %3271 = vmatprep.subr.mxu0 0.0
      %3272 = vmatpush2.msra.mxu0 0.0
      %3273 = vmatprep.subr.mxu0 0.0
      %3274 = vmatpush2.msra.mxu0 0.0
      %3275 = vmatprep.subr.mxu0 0.0
      %3276 = vmatpush2.msra.mxu0 0.0
      %3277 = vmatprep.subr.mxu0 0.0
      %3278 = vmatpush2.msra.mxu0 0.0
      %3279 = vmatprep.subr.mxu0 0.0
      %3280 = vmatpush2.msra.mxu0 0.0
      %3281 = vmatprep.subr.mxu0 0.0
      %3282 = vmatpush2.msra.mxu0 0.0
      %3283 = vmatprep.subr.mxu0 0.0
      %3284 = vmatpush2.msra.mxu0 0.0
      %3285 = vmatprep.subr.mxu0 0.0
      %3286 = vmatpush2.msra.mxu0 0.0
      %3287 = vmatprep.mubr.f32.mxu0 0.0
      %3288 = vmatmul.mubr.f32.gmra.mxu0 %v3200
      %v3289 = vpop.f32.mrf.mxu0
      %v3290 = vadd.f32 0.0, %v3289
      %v3291 = vpop.f32.mrf.mxu0
      %3292 = vmatprep.mubr.f32.mxu0 0.0
      %3293 = vmatmul.mubr.f32.gmra.mxu0 %v3203
      %v3294 = vpop.f32.mrf.mxu0
      %v3295 = vadd.f32 0.0, %v3294
      %v3296 = vpop.f32.mrf.mxu0
      %3297 = vmatprep.mubr.f32.mxu0 0.0
      %3298 = vmatmul.mubr.f32.gmra.mxu0 %v3206
      %v3299 = vpop.f32.mrf.mxu0
      %v3300 = vadd.f32 0.0, %v3299
      %v3301 = vpop.f32.mrf.mxu0
      %3302 = vmatprep.mubr.f32.mxu0 0.0
      %3303 = vmatmul.mubr.f32.gmra.mxu0 %v3209
      %v3304 = vpop.f32.mrf.mxu0
      %v3305 = vadd.f32 0.0, %v3304
      %v3306 = vpop.f32.mrf.mxu0
      %3307 = vmatprep.mubr.f32.mxu0 0.0
      %3308 = vmatmul.mubr.f32.gmra.mxu0 %v3212
      %v3309 = vpop.f32.mrf.mxu0
      %v3310 = vadd.f32 0.0, %v3309
      %v3311 = vpop.f32.mrf.mxu0
      %3312 = vmatprep.mubr.f32.mxu0 0.0
      %3313 = vmatmul.mubr.f32.gmra.mxu0 %v3215
      %v3314 = vpop.f32.mrf.mxu0
      %v3315 = vadd.f32 0.0, %v3314
      %v3316 = vpop.f32.mrf.mxu0
      %3317 = vmatprep.mubr.f32.mxu0 0.0
      %3318 = vmatmul.mubr.f32.gmra.mxu0 %v3218
      %v3319 = vpop.f32.mrf.mxu0
      %v3320 = vadd.f32 0.0, %v3319
      %v3321 = vpop.f32.mrf.mxu0
      %3322 = vmatprep.mubr.f32.mxu0 0.0
      %3323 = vmatmul.mubr.f32.gmra.mxu0 %v3221
      %v3324 = vpop.f32.mrf.mxu0
      %v3325 = vadd.f32 0.0, %v3324
      %v3326 = vpop.f32.mrf.mxu0
      %3327 = vdwg.mxu0
      %v3328 = vadd.f32 %v2556, %v3290
      %v3329 = vadd.f32 %v2561, %v3295
      %v3330 = vadd.f32 %v2566, %v3300
      %v3331 = vadd.f32 %v2571, %v3305
      %v3332 = vadd.f32 %v2576, %v3310
      %v3333 = vadd.f32 %v2581, %v3315
      %v3334 = vadd.f32 %v2586, %v3320
      %v3335 = vadd.f32 %v2591, %v3325
      %s3336 = scalar_lea.vmem %s7, 192
      %v3337 = vld [vmem:[%s3336] sm:$0xff]
      %v3338 = vld [vmem:[%s3336 + $0x8] sm:$0xff]
      %v3339 = vld [vmem:[%s3336 + $0x10] sm:$0xff]
      %v3340 = vld [vmem:[%s3336 + $0x18] sm:$0xff]
      %v3341 = vld [vmem:[%s3336 + $0x20] sm:$0xff]
      %v3342 = vld [vmem:[%s3336 + $0x28] sm:$0xff]
      %v3343 = vld [vmem:[%s3336 + $0x30] sm:$0xff]
      %v3344 = vld [vmem:[%s3336 + $0x38] sm:$0xff]
      %3345 = vrot.lane.b32.xlu0 %v1109, 104
      %v3346 = vpop.permute.xlu0 %3345
      %3347 = vrot.lane.b32.xlu0 %v1110, 104
      %v3348 = vpop.permute.xlu0 %3347
      %3349 = vrot.lane.b32.xlu0 %v1111, 104
      %v3350 = vpop.permute.xlu0 %3349
      %3351 = vrot.lane.b32.xlu0 %v1112, 104
      %v3352 = vpop.permute.xlu0 %3351
      %3353 = vrot.lane.b32.xlu0 %v1113, 104
      %v3354 = vpop.permute.xlu0 %3353
      %3355 = vrot.lane.b32.xlu0 %v1114, 104
      %v3356 = vpop.permute.xlu0 %3355
      %3357 = vrot.lane.b32.xlu0 %v1115, 104
      %v3358 = vpop.permute.xlu0 %3357
      %3359 = vrot.lane.b32.xlu0 %v1116, 104
      %v3360 = vpop.permute.xlu0 %3359
      %3361 = vrot.lane.b32.xlu0 %v922, 72
      %v3362 = vpop.permute.xlu0 %3361
      %3363 = vrot.lane.b32.xlu0 %v927, 72
      %v3364 = vpop.permute.xlu0 %3363
      %3365 = vrot.lane.b32.xlu0 %v932, 72
      %v3366 = vpop.permute.xlu0 %3365
      %3367 = vrot.lane.b32.xlu0 %v937, 72
      %v3368 = vpop.permute.xlu0 %3367
      %3369 = vrot.lane.b32.xlu0 %v942, 72
      %v3370 = vpop.permute.xlu0 %3369
      %3371 = vrot.lane.b32.xlu0 %v947, 72
      %v3372 = vpop.permute.xlu0 %3371
      %3373 = vrot.lane.b32.xlu0 %v952, 72
      %v3374 = vpop.permute.xlu0 %3373
      %3375 = vrot.lane.b32.xlu0 %v957, 72
      %v3376 = vpop.permute.xlu0 %3375
      %v3377 = vsel %vm1157, %v3346, 0
      %v3379 = vsel %vm1157, %v3348, 0
      %v3381 = vsel %vm1157, %v3350, 0
      %v3383 = vsel %vm1157, %v3352, 0
      %v3385 = vsel %vm1157, %v3354, 0
      %v3387 = vsel %vm1157, %v3356, 0
      %v3389 = vsel %vm1157, %v3358, 0
      %v3391 = vsel %vm1157, %v3360, 0
      %v3393 = vsel %vm1157, %v3362, 0
      %v3395 = vsel %vm1157, %v3364, 0
      %v3397 = vsel %vm1157, %v3366, 0
      %v3399 = vsel %vm1157, %v3368, 0
      %v3401 = vsel %vm1157, %v3370, 0
      %v3403 = vsel %vm1157, %v3372, 0
      %v3405 = vsel %vm1157, %v3374, 0
      %v3407 = vsel %vm1157, %v3376, 0
      %3409 = vmatprep.subr.mxu0 0.0
      %3410 = vmatpush1.xpose.msra.mxu0 0.0
      %3411 = vmatprep.subr.mxu0 0.0
      %3412 = vmatpush1.xpose.msra.mxu0 0.0
      %3413 = vmatprep.subr.mxu0 0.0
      %3414 = vmatpush1.xpose.msra.mxu0 0.0
      %3415 = vmatprep.subr.mxu0 0.0
      %3416 = vmatpush1.xpose.msra.mxu0 0.0
      %3417 = vmatprep.subr.mxu0 0.0
      %3418 = vmatpush1.xpose.msra.mxu0 0.0
      %3419 = vmatprep.subr.mxu0 0.0
      %3420 = vmatpush1.xpose.msra.mxu0 0.0
      %3421 = vmatprep.subr.mxu0 0.0
      %3422 = vmatpush1.xpose.msra.mxu0 0.0
      %3423 = vmatprep.subr.mxu0 0.0
      %3424 = vmatpush1.xpose.msra.mxu0 0.0
      %3425 = vmatprep.subr.mxu0 0.0
      %3426 = vmatpush1.xpose.msra.mxu0 %v3407
      %3427 = vmatprep.subr.mxu0 0.0
      %3428 = vmatpush1.xpose.msra.mxu0 %v3405
      %3429 = vmatprep.subr.mxu0 0.0
      %3430 = vmatpush1.xpose.msra.mxu0 %v3403
      %3431 = vmatprep.subr.mxu0 0.0
      %3432 = vmatpush1.xpose.msra.mxu0 %v3401
      %3433 = vmatprep.subr.mxu0 0.0
      %3434 = vmatpush1.xpose.msra.mxu0 %v3399
      %3435 = vmatprep.subr.mxu0 0.0
      %3436 = vmatpush1.xpose.msra.mxu0 %v3397
      %3437 = vmatprep.subr.mxu0 0.0
      %3438 = vmatpush1.xpose.msra.mxu0 %v3395
      %3439 = vmatprep.subr.mxu0 0.0
      %3440 = vmatpush1.xpose.msra.mxu0 %v3393
      %3441 = vmatprep.subr.mxu0 0.0
      %3442 = vmatpush2.xpose.msra.mxu0 0.0
      %3443 = vmatprep.subr.mxu0 0.0
      %3444 = vmatpush2.xpose.msra.mxu0 0.0
      %3445 = vmatprep.subr.mxu0 0.0
      %3446 = vmatpush2.xpose.msra.mxu0 0.0
      %3447 = vmatprep.subr.mxu0 0.0
      %3448 = vmatpush2.xpose.msra.mxu0 0.0
      %3449 = vmatprep.subr.mxu0 0.0
      %3450 = vmatpush2.xpose.msra.mxu0 0.0
      %3451 = vmatprep.subr.mxu0 0.0
      %3452 = vmatpush2.xpose.msra.mxu0 0.0
      %3453 = vmatprep.subr.mxu0 0.0
      %3454 = vmatpush2.xpose.msra.mxu0 0.0
      %3455 = vmatprep.subr.mxu0 0.0
      %3456 = vmatpush2.xpose.msra.mxu0 0.0
      %3457 = vmatprep.subr.mxu0 0.0
      %3458 = vmatpush2.xpose.msra.mxu0 0.0
      %3459 = vmatprep.subr.mxu0 0.0
      %3460 = vmatpush2.xpose.msra.mxu0 0.0
      %3461 = vmatprep.subr.mxu0 0.0
      %3462 = vmatpush2.xpose.msra.mxu0 0.0
      %3463 = vmatprep.subr.mxu0 0.0
      %3464 = vmatpush2.xpose.msra.mxu0 0.0
      %3465 = vmatprep.subr.mxu0 0.0
      %3466 = vmatpush2.xpose.msra.mxu0 0.0
      %3467 = vmatprep.subr.mxu0 0.0
      %3468 = vmatpush2.xpose.msra.mxu0 0.0
      %3469 = vmatprep.subr.mxu0 0.0
      %3470 = vmatpush2.xpose.msra.mxu0 0.0
      %3471 = vmatprep.subr.mxu0 0.0
      %3472 = vmatpush2.xpose.msra.mxu0 0.0
      %3473 = vmatprep.mubr.f32.mxu0 0.0
      %3474 = vmatmul.mubr.f32.gmra.mxu0 %v3377
      %v3475 = vpop.f32.mrf.mxu0
      %v3476 = vadd.f32 %v3337, %v3475
      %v3477 = vpop.f32.mrf.mxu0
      %3478 = vmatprep.mubr.f32.mxu0 0.0
      %3479 = vmatmul.mubr.f32.gmra.mxu0 %v3379
      %v3480 = vpop.f32.mrf.mxu0
      %v3481 = vadd.f32 %v3338, %v3480
      %v3482 = vpop.f32.mrf.mxu0
      %3483 = vmatprep.mubr.f32.mxu0 0.0
      %3484 = vmatmul.mubr.f32.gmra.mxu0 %v3381
      %v3485 = vpop.f32.mrf.mxu0
      %v3486 = vadd.f32 %v3339, %v3485
      %v3487 = vpop.f32.mrf.mxu0
      %3488 = vmatprep.mubr.f32.mxu0 0.0
      %3489 = vmatmul.mubr.f32.gmra.mxu0 %v3383
      %v3490 = vpop.f32.mrf.mxu0
      %v3491 = vadd.f32 %v3340, %v3490
      %v3492 = vpop.f32.mrf.mxu0
      %3493 = vmatprep.mubr.f32.mxu0 0.0
      %3494 = vmatmul.mubr.f32.gmra.mxu0 %v3385
      %v3495 = vpop.f32.mrf.mxu0
      %v3496 = vadd.f32 %v3341, %v3495
      %v3497 = vpop.f32.mrf.mxu0
      %3498 = vmatprep.mubr.f32.mxu0 0.0
      %3499 = vmatmul.mubr.f32.gmra.mxu0 %v3387
      %v3500 = vpop.f32.mrf.mxu0
      %v3501 = vadd.f32 %v3342, %v3500
      %v3502 = vpop.f32.mrf.mxu0
      %3503 = vmatprep.mubr.f32.mxu0 0.0
      %3504 = vmatmul.mubr.f32.gmra.mxu0 %v3389
      %v3505 = vpop.f32.mrf.mxu0
      %v3506 = vadd.f32 %v3343, %v3505
      %v3507 = vpop.f32.mrf.mxu0
      %3508 = vmatprep.mubr.f32.mxu0 0.0
      %3509 = vmatmul.mubr.f32.gmra.mxu0 %v3391
      %v3510 = vpop.f32.mrf.mxu0
      %v3511 = vadd.f32 %v3344, %v3510
      %v3512 = vpop.f32.mrf.mxu0
      %3513 = vdwg.mxu0
      %3514 = vrot.lane.b32.xlu0 %v1117, 104
      %v3515 = vpop.permute.xlu0 %3514
      %3516 = vrot.lane.b32.xlu0 %v1118, 104
      %v3517 = vpop.permute.xlu0 %3516
      %3518 = vrot.lane.b32.xlu0 %v1119, 104
      %v3519 = vpop.permute.xlu0 %3518
      %3520 = vrot.lane.b32.xlu0 %v1120, 104
      %v3521 = vpop.permute.xlu0 %3520
      %3522 = vrot.lane.b32.xlu0 %v1121, 104
      %v3523 = vpop.permute.xlu0 %3522
      %3524 = vrot.lane.b32.xlu0 %v1122, 104
      %v3525 = vpop.permute.xlu0 %3524
      %3526 = vrot.lane.b32.xlu0 %v1123, 104
      %v3527 = vpop.permute.xlu0 %3526
      %3528 = vrot.lane.b32.xlu0 %v1124, 104
      %v3529 = vpop.permute.xlu0 %3528
      %3530 = vrot.lane.b32.xlu0 %v1062, 72
      %v3531 = vpop.permute.xlu0 %3530
      %3532 = vrot.lane.b32.xlu0 %v1067, 72
      %v3533 = vpop.permute.xlu0 %3532
      %3534 = vrot.lane.b32.xlu0 %v1072, 72
      %v3535 = vpop.permute.xlu0 %3534
      %3536 = vrot.lane.b32.xlu0 %v1077, 72
      %v3537 = vpop.permute.xlu0 %3536
      %3538 = vrot.lane.b32.xlu0 %v1082, 72
      %v3539 = vpop.permute.xlu0 %3538
      %3540 = vrot.lane.b32.xlu0 %v1087, 72
      %v3541 = vpop.permute.xlu0 %3540
      %3542 = vrot.lane.b32.xlu0 %v1092, 72
      %v3543 = vpop.permute.xlu0 %3542
      %3544 = vrot.lane.b32.xlu0 %v1097, 72
      %v3545 = vpop.permute.xlu0 %3544
      %v3546 = vsel %vm1157, %v3515, 0
      %v3548 = vsel %vm1157, %v3517, 0
      %v3550 = vsel %vm1157, %v3519, 0
      %v3552 = vsel %vm1157, %v3521, 0
      %v3554 = vsel %vm1157, %v3523, 0
      %v3556 = vsel %vm1157, %v3525, 0
      %v3558 = vsel %vm1157, %v3527, 0
      %v3560 = vsel %vm1157, %v3529, 0
      %v3562 = vsel %vm1157, %v3531, 0
      %v3564 = vsel %vm1157, %v3533, 0
      %v3566 = vsel %vm1157, %v3535, 0
      %v3568 = vsel %vm1157, %v3537, 0
      %v3570 = vsel %vm1157, %v3539, 0
      %v3572 = vsel %vm1157, %v3541, 0
      %v3574 = vsel %vm1157, %v3543, 0
      %v3576 = vsel %vm1157, %v3545, 0
      %3578 = vmatprep.subr.mxu0 0.0
      %3579 = vmatpush1.xpose.msra.mxu0 0.0
      %3580 = vmatprep.subr.mxu0 0.0
      %3581 = vmatpush1.xpose.msra.mxu0 0.0
      %3582 = vmatprep.subr.mxu0 0.0
      %3583 = vmatpush1.xpose.msra.mxu0 0.0
      %3584 = vmatprep.subr.mxu0 0.0
      %3585 = vmatpush1.xpose.msra.mxu0 0.0
      %3586 = vmatprep.subr.mxu0 0.0
      %3587 = vmatpush1.xpose.msra.mxu0 0.0
      %3588 = vmatprep.subr.mxu0 0.0
      %3589 = vmatpush1.xpose.msra.mxu0 0.0
      %3590 = vmatprep.subr.mxu0 0.0
      %3591 = vmatpush1.xpose.msra.mxu0 0.0
      %3592 = vmatprep.subr.mxu0 0.0
      %3593 = vmatpush1.xpose.msra.mxu0 0.0
      %3594 = vmatprep.subr.mxu0 0.0
      %3595 = vmatpush1.xpose.msra.mxu0 %v3576
      %3596 = vmatprep.subr.mxu0 0.0
      %3597 = vmatpush1.xpose.msra.mxu0 %v3574
      %3598 = vmatprep.subr.mxu0 0.0
      %3599 = vmatpush1.xpose.msra.mxu0 %v3572
      %3600 = vmatprep.subr.mxu0 0.0
      %3601 = vmatpush1.xpose.msra.mxu0 %v3570
      %3602 = vmatprep.subr.mxu0 0.0
      %3603 = vmatpush1.xpose.msra.mxu0 %v3568
      %3604 = vmatprep.subr.mxu0 0.0
      %3605 = vmatpush1.xpose.msra.mxu0 %v3566
      %3606 = vmatprep.subr.mxu0 0.0
      %3607 = vmatpush1.xpose.msra.mxu0 %v3564
      %3608 = vmatprep.subr.mxu0 0.0
      %3609 = vmatpush1.xpose.msra.mxu0 %v3562
      %3610 = vmatprep.subr.mxu0 0.0
      %3611 = vmatpush2.xpose.msra.mxu0 0.0
      %3612 = vmatprep.subr.mxu0 0.0
      %3613 = vmatpush2.xpose.msra.mxu0 0.0
      %3614 = vmatprep.subr.mxu0 0.0
      %3615 = vmatpush2.xpose.msra.mxu0 0.0
      %3616 = vmatprep.subr.mxu0 0.0
      %3617 = vmatpush2.xpose.msra.mxu0 0.0
      %3618 = vmatprep.subr.mxu0 0.0
      %3619 = vmatpush2.xpose.msra.mxu0 0.0
      %3620 = vmatprep.subr.mxu0 0.0
      %3621 = vmatpush2.xpose.msra.mxu0 0.0
      %3622 = vmatprep.subr.mxu0 0.0
      %3623 = vmatpush2.xpose.msra.mxu0 0.0
      %3624 = vmatprep.subr.mxu0 0.0
      %3625 = vmatpush2.xpose.msra.mxu0 0.0
      %3626 = vmatprep.subr.mxu0 0.0
      %3627 = vmatpush2.xpose.msra.mxu0 0.0
      %3628 = vmatprep.subr.mxu0 0.0
      %3629 = vmatpush2.xpose.msra.mxu0 0.0
      %3630 = vmatprep.subr.mxu0 0.0
      %3631 = vmatpush2.xpose.msra.mxu0 0.0
      %3632 = vmatprep.subr.mxu0 0.0
      %3633 = vmatpush2.xpose.msra.mxu0 0.0
      %3634 = vmatprep.subr.mxu0 0.0
      %3635 = vmatpush2.xpose.msra.mxu0 0.0
      %3636 = vmatprep.subr.mxu0 0.0
      %3637 = vmatpush2.xpose.msra.mxu0 0.0
      %3638 = vmatprep.subr.mxu0 0.0
      %3639 = vmatpush2.xpose.msra.mxu0 0.0
      %3640 = vmatprep.subr.mxu0 0.0
      %3641 = vmatpush2.xpose.msra.mxu0 0.0
      %3642 = vmatprep.mubr.f32.mxu0 0.0
      %3643 = vmatmul.mubr.f32.gmra.mxu0 %v3546
      %v3644 = vpop.f32.mrf.mxu0
      %v3645 = vadd.f32 %v3337, %v3644
      %v3646 = vpop.f32.mrf.mxu0
      %3647 = vmatprep.mubr.f32.mxu0 0.0
      %3648 = vmatmul.mubr.f32.gmra.mxu0 %v3548
      %v3649 = vpop.f32.mrf.mxu0
      %v3650 = vadd.f32 %v3338, %v3649
      %v3651 = vpop.f32.mrf.mxu0
      %3652 = vmatprep.mubr.f32.mxu0 0.0
      %3653 = vmatmul.mubr.f32.gmra.mxu0 %v3550
      %v3654 = vpop.f32.mrf.mxu0
      %v3655 = vadd.f32 %v3339, %v3654
      %v3656 = vpop.f32.mrf.mxu0
      %3657 = vmatprep.mubr.f32.mxu0 0.0
      %3658 = vmatmul.mubr.f32.gmra.mxu0 %v3552
      %v3659 = vpop.f32.mrf.mxu0
      %v3660 = vadd.f32 %v3340, %v3659
      %v3661 = vpop.f32.mrf.mxu0
      %3662 = vmatprep.mubr.f32.mxu0 0.0
      %3663 = vmatmul.mubr.f32.gmra.mxu0 %v3554
      %v3664 = vpop.f32.mrf.mxu0
      %v3665 = vadd.f32 %v3341, %v3664
      %v3666 = vpop.f32.mrf.mxu0
      %3667 = vmatprep.mubr.f32.mxu0 0.0
      %3668 = vmatmul.mubr.f32.gmra.mxu0 %v3556
      %v3669 = vpop.f32.mrf.mxu0
      %v3670 = vadd.f32 %v3342, %v3669
      %v3671 = vpop.f32.mrf.mxu0
      %3672 = vmatprep.mubr.f32.mxu0 0.0
      %3673 = vmatmul.mubr.f32.gmra.mxu0 %v3558
      %v3674 = vpop.f32.mrf.mxu0
      %v3675 = vadd.f32 %v3343, %v3674
      %v3676 = vpop.f32.mrf.mxu0
      %3677 = vmatprep.mubr.f32.mxu0 0.0
      %3678 = vmatmul.mubr.f32.gmra.mxu0 %v3560
      %v3679 = vpop.f32.mrf.mxu0
      %v3680 = vadd.f32 %v3344, %v3679
      %v3681 = vpop.f32.mrf.mxu0
      %3682 = vdwg.mxu0
      %v3683 = vmul.f32 %v3476, %v3645
      %v3684 = vmul.f32 %v3481, %v3650
      %v3685 = vmul.f32 %v3486, %v3655
      %v3686 = vmul.f32 %v3491, %v3660
      %v3687 = vmul.f32 %v3496, %v3665
      %v3688 = vmul.f32 %v3501, %v3670
      %v3689 = vmul.f32 %v3506, %v3675
      %v3690 = vmul.f32 %v3511, %v3680
      %v3691 = vadd.f32 %v3683, %v1101
      %v3692 = vadd.f32 %v3684, %v1102
      %v3693 = vadd.f32 %v3685, %v1103
      %v3694 = vadd.f32 %v3686, %v1104
      %v3695 = vadd.f32 %v3687, %v1105
      %v3696 = vadd.f32 %v3688, %v1106
      %v3697 = vadd.f32 %v3689, %v1107
      %v3698 = vadd.f32 %v3690, %v1108
      %v3699 = vsel %vm1488, %v3691, -inf
      %3700 = vmax.xlane.f32.xlu0 %v3699
      %v3701 = vpop.xlane.xlu0 %3700
      %v3702 = vsel %vm1488, %v3692, -inf
      %3703 = vmax.xlane.f32.xlu0 %v3702
      %v3704 = vpop.xlane.xlu0 %3703
      %v3705 = vsel %vm1488, %v3693, -inf
      %3706 = vmax.xlane.f32.xlu0 %v3705
      %v3707 = vpop.xlane.xlu0 %3706
      %v3708 = vsel %vm1488, %v3694, -inf
      %3709 = vmax.xlane.f32.xlu0 %v3708
      %v3710 = vpop.xlane.xlu0 %3709
      %v3711 = vsel %vm1488, %v3695, -inf
      %3712 = vmax.xlane.f32.xlu0 %v3711
      %v3713 = vpop.xlane.xlu0 %3712
      %v3714 = vsel %vm1488, %v3696, -inf
      %3715 = vmax.xlane.f32.xlu0 %v3714
      %v3716 = vpop.xlane.xlu0 %3715
      %v3717 = vsel %vm1488, %v3697, -inf
      %3718 = vmax.xlane.f32.xlu0 %v3717
      %v3719 = vpop.xlane.xlu0 %3718
      %v3720 = vsel %vm1488, %v3698, -inf
      %3721 = vmax.xlane.f32.xlu0 %v3720
      %v3722 = vpop.xlane.xlu0 %3721
      %v3723 = vsub.f32 %v3691, %v3701
      %v3724 = vsub.f32 %v3692, %v3704
      %v3725 = vsub.f32 %v3693, %v3707
      %v3726 = vsub.f32 %v3694, %v3710
      %v3727 = vsub.f32 %v3695, %v3713
      %v3728 = vsub.f32 %v3696, %v3716
      %v3729 = vsub.f32 %v3697, %v3719
      %v3730 = vsub.f32 %v3698, %v3722
      %v3731 = vmul.f32 %v3723, 1.442695
      %v3732 = vpow.pop %v3731
      %v3733 = vmul.f32 %v3724, 1.442695
      %v3734 = vpow.pop %v3733
      %v3735 = vmul.f32 %v3725, 1.442695
      %v3736 = vpow.pop %v3735
      %v3737 = vmul.f32 %v3726, 1.442695
      %v3738 = vpow.pop %v3737
      %v3739 = vmul.f32 %v3727, 1.442695
      %v3740 = vpow.pop %v3739
      %v3741 = vmul.f32 %v3728, 1.442695
      %v3742 = vpow.pop %v3741
      %v3743 = vmul.f32 %v3729, 1.442695
      %v3744 = vpow.pop %v3743
      %v3745 = vmul.f32 %v3730, 1.442695
      %v3746 = vpow.pop %v3745
      %v3747 = vsel %vm1488, %v3732, 0.0
      %3748 = vadd.xlane.f32.xlu0 %v3747
      %v3749 = vpop.xlane.xlu0 %3748
      %v3750 = vsel %vm1488, %v3734, 0.0
      %3751 = vadd.xlane.f32.xlu0 %v3750
      %v3752 = vpop.xlane.xlu0 %3751
      %v3753 = vsel %vm1488, %v3736, 0.0
      %3754 = vadd.xlane.f32.xlu0 %v3753
      %v3755 = vpop.xlane.xlu0 %3754
      %v3756 = vsel %vm1488, %v3738, 0.0
      %3757 = vadd.xlane.f32.xlu0 %v3756
      %v3758 = vpop.xlane.xlu0 %3757
      %v3759 = vsel %vm1488, %v3740, 0.0
      %3760 = vadd.xlane.f32.xlu0 %v3759
      %v3761 = vpop.xlane.xlu0 %3760
      %v3762 = vsel %vm1488, %v3742, 0.0
      %3763 = vadd.xlane.f32.xlu0 %v3762
      %v3764 = vpop.xlane.xlu0 %3763
      %v3765 = vsel %vm1488, %v3744, 0.0
      %3766 = vadd.xlane.f32.xlu0 %v3765
      %v3767 = vpop.xlane.xlu0 %3766
      %v3768 = vsel %vm1488, %v3746, 0.0
      %3769 = vadd.xlane.f32.xlu0 %v3768
      %v3770 = vpop.xlane.xlu0 %3769
      %v3771 = vrcp.pop %v3749
      %v3772 = vrcp.pop %v3752
      %v3773 = vrcp.pop %v3755
      %v3774 = vrcp.pop %v3758
      %v3775 = vrcp.pop %v3761
      %v3776 = vrcp.pop %v3764
      %v3777 = vrcp.pop %v3767
      %v3778 = vrcp.pop %v3770
      %v3779 = vmul.f32 %v3732, %v3771
      %v3780 = vmul.f32 %v3734, %v3772
      %v3781 = vmul.f32 %v3736, %v3773
      %v3782 = vmul.f32 %v3738, %v3774
      %v3783 = vmul.f32 %v3740, %v3775
      %v3784 = vmul.f32 %v3742, %v3776
      %v3785 = vmul.f32 %v3744, %v3777
      %v3786 = vmul.f32 %v3746, %v3778
      %3787 = vrot.lane.b32.xlu0 %v922, 40
      %v3788 = vpop.permute.xlu0 %3787
      %3789 = vrot.lane.b32.xlu0 %v927, 40
      %v3790 = vpop.permute.xlu0 %3789
      %3791 = vrot.lane.b32.xlu0 %v932, 40
      %v3792 = vpop.permute.xlu0 %3791
      %3793 = vrot.lane.b32.xlu0 %v937, 40
      %v3794 = vpop.permute.xlu0 %3793
      %3795 = vrot.lane.b32.xlu0 %v942, 40
      %v3796 = vpop.permute.xlu0 %3795
      %3797 = vrot.lane.b32.xlu0 %v947, 40
      %v3798 = vpop.permute.xlu0 %3797
      %3799 = vrot.lane.b32.xlu0 %v952, 40
      %v3800 = vpop.permute.xlu0 %3799
      %3801 = vrot.lane.b32.xlu0 %v957, 40
      %v3802 = vpop.permute.xlu0 %3801
      %v3812 = vsel %vm1488, %v3779, 0
      %v3815 = vsel %vm1488, %v3780, 0
      %v3818 = vsel %vm1488, %v3781, 0
      %v3821 = vsel %vm1488, %v3782, 0
      %v3824 = vsel %vm1488, %v3783, 0
      %v3827 = vsel %vm1488, %v3784, 0
      %v3830 = vsel %vm1488, %v3785, 0
      %v3833 = vsel %vm1488, %v3786, 0
      %3835 = vmatprep.subr.mxu0 0.0
      %3836 = vmatpush1.msra.mxu0 0.0
      %3837 = vmatprep.subr.mxu0 0.0
      %3838 = vmatpush1.msra.mxu0 0.0
      %3839 = vmatprep.subr.mxu0 0.0
      %3840 = vmatpush1.msra.mxu0 0.0
      %3841 = vmatprep.subr.mxu0 0.0
      %3842 = vmatpush1.msra.mxu0 0.0
      %3843 = vmatprep.subr.mxu0 0.0
      %3844 = vmatpush1.msra.mxu0 0.0
      %3845 = vmatprep.subr.mxu0 0.0
      %3846 = vmatpush1.msra.mxu0 0.0
      %3847 = vmatprep.subr.mxu0 0.0
      %3848 = vmatpush1.msra.mxu0 0.0
      %3849 = vmatprep.subr.mxu0 0.0
      %3850 = vmatpush1.msra.mxu0 0.0
      %3851 = vmatprep.subr.mxu0 0.0
      %3852 = vmatpush1.msra.mxu0 %v3802
      %3853 = vmatprep.subr.mxu0 0.0
      %3854 = vmatpush1.msra.mxu0 %v3800
      %3855 = vmatprep.subr.mxu0 0.0
      %3856 = vmatpush1.msra.mxu0 %v3798
      %3857 = vmatprep.subr.mxu0 0.0
      %3858 = vmatpush1.msra.mxu0 %v3796
      %3859 = vmatprep.subr.mxu0 0.0
      %3860 = vmatpush1.msra.mxu0 %v3794
      %3861 = vmatprep.subr.mxu0 0.0
      %3862 = vmatpush1.msra.mxu0 %v3792
      %3863 = vmatprep.subr.mxu0 0.0
      %3864 = vmatpush1.msra.mxu0 %v3790
      %3865 = vmatprep.subr.mxu0 0.0
      %3866 = vmatpush1.msra.mxu0 %v3788
      %3867 = vmatprep.subr.mxu0 0.0
      %3868 = vmatpush2.msra.mxu0 0.0
      %3869 = vmatprep.subr.mxu0 0.0
      %3870 = vmatpush2.msra.mxu0 0.0
      %3871 = vmatprep.subr.mxu0 0.0
      %3872 = vmatpush2.msra.mxu0 0.0
      %3873 = vmatprep.subr.mxu0 0.0
      %3874 = vmatpush2.msra.mxu0 0.0
      %3875 = vmatprep.subr.mxu0 0.0
      %3876 = vmatpush2.msra.mxu0 0.0
      %3877 = vmatprep.subr.mxu0 0.0
      %3878 = vmatpush2.msra.mxu0 0.0
      %3879 = vmatprep.subr.mxu0 0.0
      %3880 = vmatpush2.msra.mxu0 0.0
      %3881 = vmatprep.subr.mxu0 0.0
      %3882 = vmatpush2.msra.mxu0 0.0
      %3883 = vmatprep.subr.mxu0 0.0
      %3884 = vmatpush2.msra.mxu0 0.0
      %3885 = vmatprep.subr.mxu0 0.0
      %3886 = vmatpush2.msra.mxu0 0.0
      %3887 = vmatprep.subr.mxu0 0.0
      %3888 = vmatpush2.msra.mxu0 0.0
      %3889 = vmatprep.subr.mxu0 0.0
      %3890 = vmatpush2.msra.mxu0 0.0
      %3891 = vmatprep.subr.mxu0 0.0
      %3892 = vmatpush2.msra.mxu0 0.0
      %3893 = vmatprep.subr.mxu0 0.0
      %3894 = vmatpush2.msra.mxu0 0.0
      %3895 = vmatprep.subr.mxu0 0.0
      %3896 = vmatpush2.msra.mxu0 0.0
      %3897 = vmatprep.subr.mxu0 0.0
      %3898 = vmatpush2.msra.mxu0 0.0
      %3899 = vmatprep.mubr.f32.mxu0 0.0
      %3900 = vmatmul.mubr.f32.gmra.mxu0 %v3812
      %v3901 = vpop.f32.mrf.mxu0
      %v3902 = vadd.f32 0.0, %v3901
      %v3903 = vpop.f32.mrf.mxu0
      %3904 = vmatprep.mubr.f32.mxu0 0.0
      %3905 = vmatmul.mubr.f32.gmra.mxu0 %v3815
      %v3906 = vpop.f32.mrf.mxu0
      %v3907 = vadd.f32 0.0, %v3906
      %v3908 = vpop.f32.mrf.mxu0
      %3909 = vmatprep.mubr.f32.mxu0 0.0
      %3910 = vmatmul.mubr.f32.gmra.mxu0 %v3818
      %v3911 = vpop.f32.mrf.mxu0
      %v3912 = vadd.f32 0.0, %v3911
      %v3913 = vpop.f32.mrf.mxu0
      %3914 = vmatprep.mubr.f32.mxu0 0.0
      %3915 = vmatmul.mubr.f32.gmra.mxu0 %v3821
      %v3916 = vpop.f32.mrf.mxu0
      %v3917 = vadd.f32 0.0, %v3916
      %v3918 = vpop.f32.mrf.mxu0
      %3919 = vmatprep.mubr.f32.mxu0 0.0
      %3920 = vmatmul.mubr.f32.gmra.mxu0 %v3824
      %v3921 = vpop.f32.mrf.mxu0
      %v3922 = vadd.f32 0.0, %v3921
      %v3923 = vpop.f32.mrf.mxu0
      %3924 = vmatprep.mubr.f32.mxu0 0.0
      %3925 = vmatmul.mubr.f32.gmra.mxu0 %v3827
      %v3926 = vpop.f32.mrf.mxu0
      %v3927 = vadd.f32 0.0, %v3926
      %v3928 = vpop.f32.mrf.mxu0
      %3929 = vmatprep.mubr.f32.mxu0 0.0
      %3930 = vmatmul.mubr.f32.gmra.mxu0 %v3830
      %v3931 = vpop.f32.mrf.mxu0
      %v3932 = vadd.f32 0.0, %v3931
      %v3933 = vpop.f32.mrf.mxu0
      %3934 = vmatprep.mubr.f32.mxu0 0.0
      %3935 = vmatmul.mubr.f32.gmra.mxu0 %v3833
      %v3936 = vpop.f32.mrf.mxu0
      %v3937 = vadd.f32 0.0, %v3936
      %v3938 = vpop.f32.mrf.mxu0
      %3939 = vdwg.mxu0
      %v3940 = vld [vmem:[%s8 + $0x18] sm:$0xff]
      %v3942 = vsel %vm1157, %v3902, 0
      %v3945 = vsel %vm1157, %v3907, 0
      %v3948 = vsel %vm1157, %v3912, 0
      %v3951 = vsel %vm1157, %v3917, 0
      %v3954 = vsel %vm1157, %v3922, 0
      %v3957 = vsel %vm1157, %v3927, 0
      %v3960 = vsel %vm1157, %v3932, 0
      %v3963 = vsel %vm1157, %v3937, 0
      %3965 = vmatprep.subr.mxu0 0.0
      %3966 = vmatpush1.msra.mxu0 0.0
      %3967 = vmatprep.subr.mxu0 0.0
      %3968 = vmatpush1.msra.mxu0 0.0
      %3969 = vmatprep.subr.mxu0 0.0
      %3970 = vmatpush1.msra.mxu0 0.0
      %3971 = vmatprep.subr.mxu0 0.0
      %3972 = vmatpush1.msra.mxu0 0.0
      %3973 = vmatprep.subr.mxu0 0.0
      %3974 = vmatpush1.msra.mxu0 0.0
      %3975 = vmatprep.subr.mxu0 0.0
      %3976 = vmatpush1.msra.mxu0 0.0
      %3977 = vmatprep.subr.mxu0 0.0
      %3978 = vmatpush1.msra.mxu0 0.0
      %3979 = vmatprep.subr.mxu0 0.0
      %3980 = vmatpush1.msra.mxu0 0.0
      %3981 = vmatprep.subr.mxu0 0.0
      %3982 = vmatpush1.msra.mxu0 0.0
      %3983 = vmatprep.subr.mxu0 0.0
      %3984 = vmatpush1.msra.mxu0 0.0
      %3985 = vmatprep.subr.mxu0 0.0
      %3986 = vmatpush1.msra.mxu0 0.0
      %3987 = vmatprep.subr.mxu0 0.0
      %3988 = vmatpush1.msra.mxu0 0.0
      %3989 = vmatprep.subr.mxu0 0.0
      %3990 = vmatpush1.msra.mxu0 0.0
      %3991 = vmatprep.subr.mxu0 0.0
      %3992 = vmatpush1.msra.mxu0 0.0
      %3993 = vmatprep.subr.mxu0 0.0
      %3994 = vmatpush1.msra.mxu0 0.0
      %3995 = vmatprep.subr.mxu0 0.0
      %3996 = vmatpush1.msra.mxu0 %v3940
      %3997 = vmatprep.subr.mxu0 0.0
      %3998 = vmatpush2.msra.mxu0 0.0
      %3999 = vmatprep.subr.mxu0 0.0
      %4000 = vmatpush2.msra.mxu0 0.0
      %4001 = vmatprep.subr.mxu0 0.0
      %4002 = vmatpush2.msra.mxu0 0.0
      %4003 = vmatprep.subr.mxu0 0.0
      %4004 = vmatpush2.msra.mxu0 0.0
      %4005 = vmatprep.subr.mxu0 0.0
      %4006 = vmatpush2.msra.mxu0 0.0
      %4007 = vmatprep.subr.mxu0 0.0
      %4008 = vmatpush2.msra.mxu0 0.0
      %4009 = vmatprep.subr.mxu0 0.0
      %4010 = vmatpush2.msra.mxu0 0.0
      %4011 = vmatprep.subr.mxu0 0.0
      %4012 = vmatpush2.msra.mxu0 0.0
      %4013 = vmatprep.subr.mxu0 0.0
      %4014 = vmatpush2.msra.mxu0 0.0
      %4015 = vmatprep.subr.mxu0 0.0
      %4016 = vmatpush2.msra.mxu0 0.0
      %4017 = vmatprep.subr.mxu0 0.0
      %4018 = vmatpush2.msra.mxu0 0.0
      %4019 = vmatprep.subr.mxu0 0.0
      %4020 = vmatpush2.msra.mxu0 0.0
      %4021 = vmatprep.subr.mxu0 0.0
      %4022 = vmatpush2.msra.mxu0 0.0
      %4023 = vmatprep.subr.mxu0 0.0
      %4024 = vmatpush2.msra.mxu0 0.0
      %4025 = vmatprep.subr.mxu0 0.0
      %4026 = vmatpush2.msra.mxu0 0.0
      %4027 = vmatprep.subr.mxu0 0.0
      %4028 = vmatpush2.msra.mxu0 0.0
      %4029 = vmatprep.mubr.f32.mxu0 0.0
      %4030 = vmatmul.mubr.f32.gmra.mxu0 %v3942
      %v4031 = vpop.f32.mrf.mxu0
      %v4032 = vadd.f32 0.0, %v4031
      %v4033 = vpop.f32.mrf.mxu0
      %4034 = vmatprep.mubr.f32.mxu0 0.0
      %4035 = vmatmul.mubr.f32.gmra.mxu0 %v3945
      %v4036 = vpop.f32.mrf.mxu0
      %v4037 = vadd.f32 0.0, %v4036
      %v4038 = vpop.f32.mrf.mxu0
      %4039 = vmatprep.mubr.f32.mxu0 0.0
      %4040 = vmatmul.mubr.f32.gmra.mxu0 %v3948
      %v4041 = vpop.f32.mrf.mxu0
      %v4042 = vadd.f32 0.0, %v4041
      %v4043 = vpop.f32.mrf.mxu0
      %4044 = vmatprep.mubr.f32.mxu0 0.0
      %4045 = vmatmul.mubr.f32.gmra.mxu0 %v3951
      %v4046 = vpop.f32.mrf.mxu0
      %v4047 = vadd.f32 0.0, %v4046
      %v4048 = vpop.f32.mrf.mxu0
      %4049 = vmatprep.mubr.f32.mxu0 0.0
      %4050 = vmatmul.mubr.f32.gmra.mxu0 %v3954
      %v4051 = vpop.f32.mrf.mxu0
      %v4052 = vadd.f32 0.0, %v4051
      %v4053 = vpop.f32.mrf.mxu0
      %4054 = vmatprep.mubr.f32.mxu0 0.0
      %4055 = vmatmul.mubr.f32.gmra.mxu0 %v3957
      %v4056 = vpop.f32.mrf.mxu0
      %v4057 = vadd.f32 0.0, %v4056
      %v4058 = vpop.f32.mrf.mxu0
      %4059 = vmatprep.mubr.f32.mxu0 0.0
      %4060 = vmatmul.mubr.f32.gmra.mxu0 %v3960
      %v4061 = vpop.f32.mrf.mxu0
      %v4062 = vadd.f32 0.0, %v4061
      %v4063 = vpop.f32.mrf.mxu0
      %4064 = vmatprep.mubr.f32.mxu0 0.0
      %4065 = vmatmul.mubr.f32.gmra.mxu0 %v3963
      %v4066 = vpop.f32.mrf.mxu0
      %v4067 = vadd.f32 0.0, %v4066
      %v4068 = vpop.f32.mrf.mxu0
      %4069 = vdwg.mxu0
      %v4070 = vadd.f32 %v3328, %v4032
      %v4071 = vadd.f32 %v3329, %v4037
      %v4072 = vadd.f32 %v3330, %v4042
      %v4073 = vadd.f32 %v3331, %v4047
      %v4074 = vadd.f32 %v3332, %v4052
      %v4075 = vadd.f32 %v3333, %v4057
      %v4076 = vadd.f32 %v3334, %v4062
      %v4077 = vadd.f32 %v3335, %v4067
      %v4078 = vadd.f32 %v542, %v4070
      %v4079 = vadd.f32 %v543, %v4071
      %v4080 = vadd.f32 %v544, %v4072
      %v4081 = vadd.f32 %v545, %v4073
      %v4082 = vadd.f32 %v546, %v4074
      %v4083 = vadd.f32 %v547, %v4075
      %v4084 = vadd.f32 %v548, %v4076
      %v4085 = vadd.f32 %v549, %v4077
      %v4086 = vld [vmem:[%s9] sm:$0x1]
      %v4088 = vlaneseq
      %v4089 = vshrl.u32 %v4088, 7
      %v4090 = vsub.s32 0, %v4089
      %v4091 = vrot.slane %v4086, %v4090
      %v4093 = vadd.f32 %v4078, %v4091
      %v4094 = vadd.f32 %v4079, %v4091
      %v4095 = vadd.f32 %v4080, %v4091
      %v4096 = vadd.f32 %v4081, %v4091
      %v4097 = vadd.f32 %v4082, %v4091
      %v4098 = vadd.f32 %v4083, %v4091
      %v4099 = vadd.f32 %v4084, %v4091
      %v4100 = vadd.f32 %v4085, %v4091
      %v4101 = vld [vmem:[%s2 + $0x4] sm:$0x1]
      %v4102 = vld [vmem:[%s2 + $0x5] sm:$0x1]
      %v4103 = vsel %vm560, %v4093, 0.0
      %4104 = vadd.xlane.f32.xlu0 %v4103
      %v4105 = vpop.xlane.xlu0 %4104
      %v4106 = vsel %vm560, %v4094, 0.0
      %4107 = vadd.xlane.f32.xlu0 %v4106
      %v4108 = vpop.xlane.xlu0 %4107
      %v4109 = vsel %vm560, %v4095, 0.0
      %4110 = vadd.xlane.f32.xlu0 %v4109
      %v4111 = vpop.xlane.xlu0 %4110
      %v4112 = vsel %vm560, %v4096, 0.0
      %4113 = vadd.xlane.f32.xlu0 %v4112
      %v4114 = vpop.xlane.xlu0 %4113
      %v4115 = vsel %vm560, %v4097, 0.0
      %4116 = vadd.xlane.f32.xlu0 %v4115
      %v4117 = vpop.xlane.xlu0 %4116
      %v4118 = vsel %vm560, %v4098, 0.0
      %4119 = vadd.xlane.f32.xlu0 %v4118
      %v4120 = vpop.xlane.xlu0 %4119
      %v4121 = vsel %vm560, %v4099, 0.0
      %4122 = vadd.xlane.f32.xlu0 %v4121
      %v4123 = vpop.xlane.xlu0 %4122
      %v4124 = vsel %vm560, %v4100, 0.0
      %4125 = vadd.xlane.f32.xlu0 %v4124
      %v4126 = vpop.xlane.xlu0 %4125
      %v4127 = vmul.f32 %v4105, %v585
      %v4128 = vmul.f32 %v4108, %v585
      %v4129 = vmul.f32 %v4111, %v585
      %v4130 = vmul.f32 %v4114, %v585
      %v4131 = vmul.f32 %v4117, %v585
      %v4132 = vmul.f32 %v4120, %v585
      %v4133 = vmul.f32 %v4123, %v585
      %v4134 = vmul.f32 %v4126, %v585
      %v4135 = vsub.f32 %v4093, %v4127
      %v4136 = vsub.f32 %v4094, %v4128
      %v4137 = vsub.f32 %v4095, %v4129
      %v4138 = vsub.f32 %v4096, %v4130
      %v4139 = vsub.f32 %v4097, %v4131
      %v4140 = vsub.f32 %v4098, %v4132
      %v4141 = vsub.f32 %v4099, %v4133
      %v4142 = vsub.f32 %v4100, %v4134
      %v4143 = vmul.f32 %v4135, %v4135
      %v4144 = vmul.f32 %v4136, %v4136
      %v4145 = vmul.f32 %v4137, %v4137
      %v4146 = vmul.f32 %v4138, %v4138
      %v4147 = vmul.f32 %v4139, %v4139
      %v4148 = vmul.f32 %v4140, %v4140
      %v4149 = vmul.f32 %v4141, %v4141
      %v4150 = vmul.f32 %v4142, %v4142
      %v4151 = vsel %vm560, %v4143, 0.0
      %4152 = vadd.xlane.f32.xlu0 %v4151
      %v4153 = vpop.xlane.xlu0 %4152
      %v4154 = vsel %vm560, %v4144, 0.0
      %4155 = vadd.xlane.f32.xlu0 %v4154
      %v4156 = vpop.xlane.xlu0 %4155
      %v4157 = vsel %vm560, %v4145, 0.0
      %4158 = vadd.xlane.f32.xlu0 %v4157
      %v4159 = vpop.xlane.xlu0 %4158
      %v4160 = vsel %vm560, %v4146, 0.0
      %4161 = vadd.xlane.f32.xlu0 %v4160
      %v4162 = vpop.xlane.xlu0 %4161
      %v4163 = vsel %vm560, %v4147, 0.0
      %4164 = vadd.xlane.f32.xlu0 %v4163
      %v4165 = vpop.xlane.xlu0 %4164
      %v4166 = vsel %vm560, %v4148, 0.0
      %4167 = vadd.xlane.f32.xlu0 %v4166
      %v4168 = vpop.xlane.xlu0 %4167
      %v4169 = vsel %vm560, %v4149, 0.0
      %4170 = vadd.xlane.f32.xlu0 %v4169
      %v4171 = vpop.xlane.xlu0 %4170
      %v4172 = vsel %vm560, %v4150, 0.0
      %4173 = vadd.xlane.f32.xlu0 %v4172
      %v4174 = vpop.xlane.xlu0 %4173
      %v4175 = vmul.f32 %v4153, %v585
      %v4176 = vmul.f32 %v4156, %v585
      %v4177 = vmul.f32 %v4159, %v585
      %v4178 = vmul.f32 %v4162, %v585
      %v4179 = vmul.f32 %v4165, %v585
      %v4180 = vmul.f32 %v4168, %v585
      %v4181 = vmul.f32 %v4171, %v585
      %v4182 = vmul.f32 %v4174, %v585
      %v4183 = vadd.f32 %v4175, 1e-05
      %v4184 = vadd.f32 %v4176, 1e-05
      %v4185 = vadd.f32 %v4177, 1e-05
      %v4186 = vadd.f32 %v4178, 1e-05
      %v4187 = vadd.f32 %v4179, 1e-05
      %v4188 = vadd.f32 %v4180, 1e-05
      %v4189 = vadd.f32 %v4181, 1e-05
      %v4190 = vadd.f32 %v4182, 1e-05
      %v4191 = vrsqrt.pop %v4183
      %v4192 = vrsqrt.pop %v4184
      %v4193 = vrsqrt.pop %v4185
      %v4194 = vrsqrt.pop %v4186
      %v4195 = vrsqrt.pop %v4187
      %v4196 = vrsqrt.pop %v4188
      %v4197 = vrsqrt.pop %v4189
      %v4198 = vrsqrt.pop %v4190
      %v4199 = vmul.f32 %v4135, %v4191
      %v4200 = vmul.f32 %v4136, %v4192
      %v4201 = vmul.f32 %v4137, %v4193
      %v4202 = vmul.f32 %v4138, %v4194
      %v4203 = vmul.f32 %v4139, %v4195
      %v4204 = vmul.f32 %v4140, %v4196
      %v4205 = vmul.f32 %v4141, %v4197
      %v4206 = vmul.f32 %v4142, %v4198
      %v4207 = vlaneseq
      %v4208 = vshrl.u32 %v4207, 7
      %v4209 = vsub.s32 0, %v4208
      %v4210 = vrot.slane %v4101, %v4209
      %v4211 = vmul.f32 %v4199, %v4210
      %v4212 = vmul.f32 %v4200, %v4210
      %v4213 = vmul.f32 %v4201, %v4210
      %v4214 = vmul.f32 %v4202, %v4210
      %v4215 = vmul.f32 %v4203, %v4210
      %v4216 = vmul.f32 %v4204, %v4210
      %v4217 = vmul.f32 %v4205, %v4210
      %v4218 = vmul.f32 %v4206, %v4210
      %v4219 = vlaneseq
      %v4220 = vshrl.u32 %v4219, 7
      %v4221 = vsub.s32 0, %v4220
      %v4222 = vrot.slane %v4102, %v4221
      %v4223 = vadd.f32 %v4211, %v4222
      %v4224 = vadd.f32 %v4212, %v4222
      %v4225 = vadd.f32 %v4213, %v4222
      %v4226 = vadd.f32 %v4214, %v4222
      %v4227 = vadd.f32 %v4215, %v4222
      %v4228 = vadd.f32 %v4216, %v4222
      %v4229 = vadd.f32 %v4217, %v4222
      %v4230 = vadd.f32 %v4218, %v4222
      %v4231 = vld [vmem:[%s10] sm:$0xff]
      %v4232 = vld [vmem:[%s10 + $0x8] sm:$0xff]
      %v4233 = vld [vmem:[%s10 + $0x10] sm:$0xff]
      %v4234 = vld [vmem:[%s10 + $0x18] sm:$0xff]
      %v4235 = vld [vmem:[%s11] sm:$0x1]
      %v4237 = vlaneseq
      %v4238 = vshrl.u32 %v4237, 7
      %v4239 = vsub.s32 0, %v4238
      %v4240 = vrot.slane %v4235, %v4239
      %v4243 = vsel %vm560, %v4223, 0
      %v4246 = vsel %vm560, %v4224, 0
      %v4249 = vsel %vm560, %v4225, 0
      %v4252 = vsel %vm560, %v4226, 0
      %v4255 = vsel %vm560, %v4227, 0
      %v4258 = vsel %vm560, %v4228, 0
      %v4261 = vsel %vm560, %v4229, 0
      %v4264 = vsel %vm560, %v4230, 0
      %4266 = vmatprep.subr.mxu0 0.0
      %4267 = vmatpush1.msra.mxu0 0.0
      %4268 = vmatprep.subr.mxu0 0.0
      %4269 = vmatpush1.msra.mxu0 0.0
      %4270 = vmatprep.subr.mxu0 0.0
      %4271 = vmatpush1.msra.mxu0 0.0
      %4272 = vmatprep.subr.mxu0 0.0
      %4273 = vmatpush1.msra.mxu0 0.0
      %4274 = vmatprep.subr.mxu0 0.0
      %4275 = vmatpush1.msra.mxu0 0.0
      %4276 = vmatprep.subr.mxu0 0.0
      %4277 = vmatpush1.msra.mxu0 0.0
      %4278 = vmatprep.subr.mxu0 0.0
      %4279 = vmatpush1.msra.mxu0 0.0
      %4280 = vmatprep.subr.mxu0 0.0
      %4281 = vmatpush1.msra.mxu0 0.0
      %4282 = vmatprep.subr.mxu0 0.0
      %4283 = vmatpush1.msra.mxu0 0.0
      %4284 = vmatprep.subr.mxu0 0.0
      %4285 = vmatpush1.msra.mxu0 0.0
      %4286 = vmatprep.subr.mxu0 0.0
      %4287 = vmatpush1.msra.mxu0 0.0
      %4288 = vmatprep.subr.mxu0 0.0
      %4289 = vmatpush1.msra.mxu0 0.0
      %4290 = vmatprep.subr.mxu0 0.0
      %4291 = vmatpush1.msra.mxu0 %v4234
      %4292 = vmatprep.subr.mxu0 0.0
      %4293 = vmatpush1.msra.mxu0 %v4233
      %4294 = vmatprep.subr.mxu0 0.0
      %4295 = vmatpush1.msra.mxu0 %v4232
      %4296 = vmatprep.subr.mxu0 0.0
      %4297 = vmatpush1.msra.mxu0 %v4231
      %4298 = vmatprep.subr.mxu0 0.0
      %4299 = vmatpush2.msra.mxu0 0.0
      %4300 = vmatprep.subr.mxu0 0.0
      %4301 = vmatpush2.msra.mxu0 0.0
      %4302 = vmatprep.subr.mxu0 0.0
      %4303 = vmatpush2.msra.mxu0 0.0
      %4304 = vmatprep.subr.mxu0 0.0
      %4305 = vmatpush2.msra.mxu0 0.0
      %4306 = vmatprep.subr.mxu0 0.0
      %4307 = vmatpush2.msra.mxu0 0.0
      %4308 = vmatprep.subr.mxu0 0.0
      %4309 = vmatpush2.msra.mxu0 0.0
      %4310 = vmatprep.subr.mxu0 0.0
      %4311 = vmatpush2.msra.mxu0 0.0
      %4312 = vmatprep.subr.mxu0 0.0
      %4313 = vmatpush2.msra.mxu0 0.0
      %4314 = vmatprep.subr.mxu0 0.0
      %4315 = vmatpush2.msra.mxu0 0.0
      %4316 = vmatprep.subr.mxu0 0.0
      %4317 = vmatpush2.msra.mxu0 0.0
      %4318 = vmatprep.subr.mxu0 0.0
      %4319 = vmatpush2.msra.mxu0 0.0
      %4320 = vmatprep.subr.mxu0 0.0
      %4321 = vmatpush2.msra.mxu0 0.0
      %4322 = vmatprep.subr.mxu0 0.0
      %4323 = vmatpush2.msra.mxu0 0.0
      %4324 = vmatprep.subr.mxu0 0.0
      %4325 = vmatpush2.msra.mxu0 0.0
      %4326 = vmatprep.subr.mxu0 0.0
      %4327 = vmatpush2.msra.mxu0 0.0
      %4328 = vmatprep.subr.mxu0 0.0
      %4329 = vmatpush2.msra.mxu0 0.0
      %4330 = vmatprep.mubr.f32.mxu0 0.0
      %4331 = vmatmul.mubr.f32.gmra.mxu0 %v4243
      %v4332 = vpop.f32.mrf.mxu0
      %v4333 = vadd.f32 %v4240, %v4332
      %v4334 = vpop.f32.mrf.mxu0
      %4335 = vmatprep.mubr.f32.mxu0 0.0
      %4336 = vmatmul.mubr.f32.gmra.mxu0 %v4246
      %v4337 = vpop.f32.mrf.mxu0
      %v4338 = vadd.f32 %v4240, %v4337
      %v4339 = vpop.f32.mrf.mxu0
      %4340 = vmatprep.mubr.f32.mxu0 0.0
      %4341 = vmatmul.mubr.f32.gmra.mxu0 %v4249
      %v4342 = vpop.f32.mrf.mxu0
      %v4343 = vadd.f32 %v4240, %v4342
      %v4344 = vpop.f32.mrf.mxu0
      %4345 = vmatprep.mubr.f32.mxu0 0.0
      %4346 = vmatmul.mubr.f32.gmra.mxu0 %v4252
      %v4347 = vpop.f32.mrf.mxu0
      %v4348 = vadd.f32 %v4240, %v4347
      %v4349 = vpop.f32.mrf.mxu0
      %4350 = vmatprep.mubr.f32.mxu0 0.0
      %4351 = vmatmul.mubr.f32.gmra.mxu0 %v4255
      %v4352 = vpop.f32.mrf.mxu0
      %v4353 = vadd.f32 %v4240, %v4352
      %v4354 = vpop.f32.mrf.mxu0
      %4355 = vmatprep.mubr.f32.mxu0 0.0
      %4356 = vmatmul.mubr.f32.gmra.mxu0 %v4258
      %v4357 = vpop.f32.mrf.mxu0
      %v4358 = vadd.f32 %v4240, %v4357
      %v4359 = vpop.f32.mrf.mxu0
      %4360 = vmatprep.mubr.f32.mxu0 0.0
      %4361 = vmatmul.mubr.f32.gmra.mxu0 %v4261
      %v4362 = vpop.f32.mrf.mxu0
      %v4363 = vadd.f32 %v4240, %v4362
      %v4364 = vpop.f32.mrf.mxu0
      %4365 = vmatprep.mubr.f32.mxu0 0.0
      %4366 = vmatmul.mubr.f32.gmra.mxu0 %v4264
      %v4367 = vpop.f32.mrf.mxu0
      %v4368 = vadd.f32 %v4240, %v4367
      %v4369 = vpop.f32.mrf.mxu0
      %4370 = vdwg.mxu0
      %v4371 = vlaneseq
      %v4372 = vshrl.u32 %v4371, 7
      %v4373 = vadd.s32 %v4372, 8
      %v4374 = vadd.s32 %v4372, 16
      %v4375 = vadd.s32 %v4372, 24
      %v4376 = vadd.s32 %v4372, 32
      %v4377 = vadd.s32 %v4372, 40
      %v4378 = vadd.s32 %v4372, 48
      %v4379 = vadd.s32 %v4372, 56
      %v4380 = vshra.s32 %v4372, 3
      %v4381 = vshra.s32 %v4373, 3
      %v4382 = vshra.s32 %v4374, 3
      %v4383 = vshra.s32 %v4375, 3
      %v4384 = vshra.s32 %v4376, 3
      %v4385 = vshra.s32 %v4377, 3
      %v4386 = vshra.s32 %v4378, 3
      %v4387 = vshra.s32 %v4379, 3
      %v4388 = vand.u32 %v4372, 7
      %v4389 = vand.u32 %v4373, 7
      %v4390 = vand.u32 %v4374, 7
      %v4391 = vand.u32 %v4375, 7
      %v4392 = vand.u32 %v4376, 7
      %v4393 = vand.u32 %v4377, 7
      %v4394 = vand.u32 %v4378, 7
      %v4395 = vand.u32 %v4379, 7
      %v4396 = vld [vmem:[%s13] sm:$0x1]
      %v4398 = vlaneseq
      %v4399 = vshrl.u32 %v4398, 7
      %v4400 = vsub.s32 0, %v4399
      %v4401 = vrot.slane %v4396, %v4400
      %v4403 = vadd.f32 %v4401, 0.0
      %v4404 = vrot.slane %v4333, 7
      %v4405 = vrot.slane %v4338, 7
      %v4406 = vrot.slane %v4343, 7
      %v4407 = vrot.slane %v4348, 7
      %v4408 = vrot.slane %v4353, 7
      %v4409 = vrot.slane %v4358, 7
      %v4410 = vrot.slane %v4363, 7
      %v4411 = vrot.slane %v4368, 7
      %vm4412 = vcmp.lt.s32.totalorder %v4372, 1
      %v4413 = vsel %vm4412, %v4410, %v4411
      %v4414 = vsel %vm4412, %v4409, %v4410
      %v4415 = vsel %vm4412, %v4408, %v4409
      %v4416 = vsel %vm4412, %v4407, %v4408
      %v4417 = vsel %vm4412, %v4406, %v4407
      %v4418 = vsel %vm4412, %v4405, %v4406
      %v4419 = vsel %vm4412, %v4404, %v4405
      %v4420 = vsel %vm4412, %v4411, %v4404
      %v4421 = vadd.s32 %v4380, 4294967295
      %v4422 = vadd.s32 %v4381, 4294967295
      %v4423 = vadd.s32 %v4382, 4294967295
      %v4424 = vadd.s32 %v4383, 4294967295
      %v4425 = vadd.s32 %v4384, 4294967295
      %v4426 = vadd.s32 %v4385, 4294967295
      %v4427 = vadd.s32 %v4386, 4294967295
      %v4428 = vadd.s32 %v4387, 4294967295
      %vm4429 = vcmp.ge.s32.totalorder %v4421, 0
      %vm4430 = vcmp.ge.s32.totalorder %v4422, 0
      %vm4431 = vcmp.ge.s32.totalorder %v4423, 0
      %vm4432 = vcmp.ge.s32.totalorder %v4424, 0
      %vm4433 = vcmp.ge.s32.totalorder %v4425, 0
      %vm4434 = vcmp.ge.s32.totalorder %v4426, 0
      %vm4435 = vcmp.ge.s32.totalorder %v4427, 0
      %vm4436 = vcmp.ge.s32.totalorder %v4428, 0
      %vm4437 = vcmp.lt.s32.totalorder %v4421, 8
      %vm4438 = vcmp.lt.s32.totalorder %v4422, 8
      %vm4439 = vcmp.lt.s32.totalorder %v4423, 8
      %vm4440 = vcmp.lt.s32.totalorder %v4424, 8
      %vm4441 = vcmp.lt.s32.totalorder %v4425, 8
      %vm4442 = vcmp.lt.s32.totalorder %v4426, 8
      %vm4443 = vcmp.lt.s32.totalorder %v4427, 8
      %vm4444 = vcmp.lt.s32.totalorder %v4428, 8
      %vm4445 = vmand %vm4429, %vm4437
      %vm4446 = vmand %vm4430, %vm4438
      %vm4447 = vmand %vm4431, %vm4439
      %vm4448 = vmand %vm4432, %vm4440
      %vm4449 = vmand %vm4433, %vm4441
      %vm4450 = vmand %vm4434, %vm4442
      %vm4451 = vmand %vm4435, %vm4443
      %vm4452 = vmand %vm4436, %vm4444
      %v4453 = vadd.s32 %v4388, 4294967295
      %v4454 = vadd.s32 %v4389, 4294967295
      %v4455 = vadd.s32 %v4390, 4294967295
      %v4456 = vadd.s32 %v4391, 4294967295
      %v4457 = vadd.s32 %v4392, 4294967295
      %v4458 = vadd.s32 %v4393, 4294967295
      %v4459 = vadd.s32 %v4394, 4294967295
      %v4460 = vadd.s32 %v4395, 4294967295
      %vm4461 = vcmp.ge.s32.totalorder %v4453, 0
      %vm4462 = vcmp.ge.s32.totalorder %v4454, 0
      %vm4463 = vcmp.ge.s32.totalorder %v4455, 0
      %vm4464 = vcmp.ge.s32.totalorder %v4456, 0
      %vm4465 = vcmp.ge.s32.totalorder %v4457, 0
      %vm4466 = vcmp.ge.s32.totalorder %v4458, 0
      %vm4467 = vcmp.ge.s32.totalorder %v4459, 0
      %vm4468 = vcmp.ge.s32.totalorder %v4460, 0
      %vm4469 = vmand %vm4445, %vm4461
      %vm4470 = vmand %vm4446, %vm4462
      %vm4471 = vmand %vm4447, %vm4463
      %vm4472 = vmand %vm4448, %vm4464
      %vm4473 = vmand %vm4449, %vm4465
      %vm4474 = vmand %vm4450, %vm4466
      %vm4475 = vmand %vm4451, %vm4467
      %vm4476 = vmand %vm4452, %vm4468
      %vm4477 = vcmp.lt.s32.totalorder %v4453, 8
      %vm4478 = vcmp.lt.s32.totalorder %v4454, 8
      %vm4479 = vcmp.lt.s32.totalorder %v4455, 8
      %vm4480 = vcmp.lt.s32.totalorder %v4456, 8
      %vm4481 = vcmp.lt.s32.totalorder %v4457, 8
      %vm4482 = vcmp.lt.s32.totalorder %v4458, 8
      %vm4483 = vcmp.lt.s32.totalorder %v4459, 8
      %vm4484 = vcmp.lt.s32.totalorder %v4460, 8
      %vm4485 = vmand %vm4469, %vm4477
      %vm4486 = vmand %vm4470, %vm4478
      %vm4487 = vmand %vm4471, %vm4479
      %vm4488 = vmand %vm4472, %vm4480
      %vm4489 = vmand %vm4473, %vm4481
      %vm4490 = vmand %vm4474, %vm4482
      %vm4491 = vmand %vm4475, %vm4483
      %vm4492 = vmand %vm4476, %vm4484
      %v4493 = vsel %vm4485, 1, 0
      %v4494 = vsel %vm4486, 1, 0
      %v4495 = vsel %vm4487, 1, 0
      %v4496 = vsel %vm4488, 1, 0
      %v4497 = vsel %vm4489, 1, 0
      %v4498 = vsel %vm4490, 1, 0
      %v4499 = vsel %vm4491, 1, 0
      %v4500 = vsel %vm4492, 1, 0
      %v4501 = vcvt.s32.f32 %v4493
      %v4502 = vcvt.s32.f32 %v4494
      %v4503 = vcvt.s32.f32 %v4495
      %v4504 = vcvt.s32.f32 %v4496
      %v4505 = vcvt.s32.f32 %v4497
      %v4506 = vcvt.s32.f32 %v4498
      %v4507 = vcvt.s32.f32 %v4499
      %v4508 = vcvt.s32.f32 %v4500
      %v4509 = vmul.f32 %v4413, %v4501
      %v4510 = vmul.f32 %v4420, %v4502
      %v4511 = vmul.f32 %v4419, %v4503
      %v4512 = vmul.f32 %v4418, %v4504
      %v4513 = vmul.f32 %v4417, %v4505
      %v4514 = vmul.f32 %v4416, %v4506
      %v4515 = vmul.f32 %v4415, %v4507
      %v4516 = vmul.f32 %v4414, %v4508
      %v4517 = vld [vmem:[%s12] sm:$0x1]
      %v4518 = vlaneseq
      %v4519 = vshrl.u32 %v4518, 7
      %v4520 = vsub.s32 0, %v4519
      %v4521 = vrot.slane %v4517, %v4520
      %v4522 = vmul.f32 %v4509, %v4521
      %v4523 = vmul.f32 %v4510, %v4521
      %v4524 = vmul.f32 %v4511, %v4521
      %v4525 = vmul.f32 %v4512, %v4521
      %v4526 = vmul.f32 %v4513, %v4521
      %v4527 = vmul.f32 %v4514, %v4521
      %v4528 = vmul.f32 %v4515, %v4521
      %v4529 = vmul.f32 %v4516, %v4521
      %v4530 = vadd.f32 %v4403, %v4522
      %v4531 = vadd.f32 %v4403, %v4523
      %v4532 = vadd.f32 %v4403, %v4524
      %v4533 = vadd.f32 %v4403, %v4525
      %v4534 = vadd.f32 %v4403, %v4526
      %v4535 = vadd.f32 %v4403, %v4527
      %v4536 = vadd.f32 %v4403, %v4528
      %v4537 = vadd.f32 %v4403, %v4529
      %vm4538 = vcmp.ge.s32.totalorder %v4388, 0
      %vm4539 = vcmp.ge.s32.totalorder %v4389, 0
      %vm4540 = vcmp.ge.s32.totalorder %v4390, 0
      %vm4541 = vcmp.ge.s32.totalorder %v4391, 0
      %vm4542 = vcmp.ge.s32.totalorder %v4392, 0
      %vm4543 = vcmp.ge.s32.totalorder %v4393, 0
      %vm4544 = vcmp.ge.s32.totalorder %v4394, 0
      %vm4545 = vcmp.ge.s32.totalorder %v4395, 0
      %vm4546 = vmand %vm4445, %vm4538
      %vm4547 = vmand %vm4446, %vm4539
      %vm4548 = vmand %vm4447, %vm4540
      %vm4549 = vmand %vm4448, %vm4541
      %vm4550 = vmand %vm4449, %vm4542
      %vm4551 = vmand %vm4450, %vm4543
      %vm4552 = vmand %vm4451, %vm4544
      %vm4553 = vmand %vm4452, %vm4545
      %vm4554 = vcmp.lt.s32.totalorder %v4388, 8
      %vm4555 = vcmp.lt.s32.totalorder %v4389, 8
      %vm4556 = vcmp.lt.s32.totalorder %v4390, 8
      %vm4557 = vcmp.lt.s32.totalorder %v4391, 8
      %vm4558 = vcmp.lt.s32.totalorder %v4392, 8
      %vm4559 = vcmp.lt.s32.totalorder %v4393, 8
      %vm4560 = vcmp.lt.s32.totalorder %v4394, 8
      %vm4561 = vcmp.lt.s32.totalorder %v4395, 8
      %vm4562 = vmand %vm4546, %vm4554
      %vm4563 = vmand %vm4547, %vm4555
      %vm4564 = vmand %vm4548, %vm4556
      %vm4565 = vmand %vm4549, %vm4557
      %vm4566 = vmand %vm4550, %vm4558
      %vm4567 = vmand %vm4551, %vm4559
      %vm4568 = vmand %vm4552, %vm4560
      %vm4569 = vmand %vm4553, %vm4561
      %v4570 = vsel %vm4562, 1, 0
      %v4571 = vsel %vm4563, 1, 0
      %v4572 = vsel %vm4564, 1, 0
      %v4573 = vsel %vm4565, 1, 0
      %v4574 = vsel %vm4566, 1, 0
      %v4575 = vsel %vm4567, 1, 0
      %v4576 = vsel %vm4568, 1, 0
      %v4577 = vsel %vm4569, 1, 0
      %v4578 = vcvt.s32.f32 %v4570
      %v4579 = vcvt.s32.f32 %v4571
      %v4580 = vcvt.s32.f32 %v4572
      %v4581 = vcvt.s32.f32 %v4573
      %v4582 = vcvt.s32.f32 %v4574
      %v4583 = vcvt.s32.f32 %v4575
      %v4584 = vcvt.s32.f32 %v4576
      %v4585 = vcvt.s32.f32 %v4577
      %v4586 = vmul.f32 %v4368, %v4578
      %v4587 = vmul.f32 %v4333, %v4579
      %v4588 = vmul.f32 %v4338, %v4580
      %v4589 = vmul.f32 %v4343, %v4581
      %v4590 = vmul.f32 %v4348, %v4582
      %v4591 = vmul.f32 %v4353, %v4583
      %v4592 = vmul.f32 %v4358, %v4584
      %v4593 = vmul.f32 %v4363, %v4585
      %v4594 = vld [vmem:[%s12 + $0x1] sm:$0x1]
      %v4595 = vlaneseq
      %v4596 = vshrl.u32 %v4595, 7
      %v4597 = vsub.s32 0, %v4596
      %v4598 = vrot.slane %v4594, %v4597
      %v4599 = vmul.f32 %v4586, %v4598
      %v4600 = vmul.f32 %v4587, %v4598
      %v4601 = vmul.f32 %v4588, %v4598
      %v4602 = vmul.f32 %v4589, %v4598
      %v4603 = vmul.f32 %v4590, %v4598
      %v4604 = vmul.f32 %v4591, %v4598
      %v4605 = vmul.f32 %v4592, %v4598
      %v4606 = vmul.f32 %v4593, %v4598
      %v4607 = vadd.f32 %v4530, %v4599
      %v4608 = vadd.f32 %v4531, %v4600
      %v4609 = vadd.f32 %v4532, %v4601
      %v4610 = vadd.f32 %v4533, %v4602
      %v4611 = vadd.f32 %v4534, %v4603
      %v4612 = vadd.f32 %v4535, %v4604
      %v4613 = vadd.f32 %v4536, %v4605
      %v4614 = vadd.f32 %v4537, %v4606
      %v4615 = vrot.slane %v4333, 1
      %v4616 = vrot.slane %v4338, 1
      %v4617 = vrot.slane %v4343, 1
      %v4618 = vrot.slane %v4348, 1
      %v4619 = vrot.slane %v4353, 1
      %v4620 = vrot.slane %v4358, 1
      %v4621 = vrot.slane %v4363, 1
      %v4622 = vrot.slane %v4368, 1
      %vm4623 = vcmp.lt.s32.totalorder %v4372, 7
      %v4624 = vsel %vm4623, %v4621, %v4622
      %v4625 = vsel %vm4623, %v4620, %v4621
      %v4626 = vsel %vm4623, %v4619, %v4620
      %v4627 = vsel %vm4623, %v4618, %v4619
      %v4628 = vsel %vm4623, %v4617, %v4618
      %v4629 = vsel %vm4623, %v4616, %v4617
      %v4630 = vsel %vm4623, %v4615, %v4616
      %v4631 = vsel %vm4623, %v4622, %v4615
      %v4632 = vadd.s32 %v4388, 1
      %v4633 = vadd.s32 %v4389, 1
      %v4634 = vadd.s32 %v4390, 1
      %v4635 = vadd.s32 %v4391, 1
      %v4636 = vadd.s32 %v4392, 1
      %v4637 = vadd.s32 %v4393, 1
      %v4638 = vadd.s32 %v4394, 1
      %v4639 = vadd.s32 %v4395, 1
      %vm4640 = vcmp.ge.s32.totalorder %v4632, 0
      %vm4641 = vcmp.ge.s32.totalorder %v4633, 0
      %vm4642 = vcmp.ge.s32.totalorder %v4634, 0
      %vm4643 = vcmp.ge.s32.totalorder %v4635, 0
      %vm4644 = vcmp.ge.s32.totalorder %v4636, 0
      %vm4645 = vcmp.ge.s32.totalorder %v4637, 0
      %vm4646 = vcmp.ge.s32.totalorder %v4638, 0
      %vm4647 = vcmp.ge.s32.totalorder %v4639, 0
      %vm4648 = vmand %vm4445, %vm4640
      %vm4649 = vmand %vm4446, %vm4641
      %vm4650 = vmand %vm4447, %vm4642
      %vm4651 = vmand %vm4448, %vm4643
      %vm4652 = vmand %vm4449, %vm4644
      %vm4653 = vmand %vm4450, %vm4645
      %vm4654 = vmand %vm4451, %vm4646
      %vm4655 = vmand %vm4452, %vm4647
      %vm4656 = vcmp.lt.s32.totalorder %v4632, 8
      %vm4657 = vcmp.lt.s32.totalorder %v4633, 8
      %vm4658 = vcmp.lt.s32.totalorder %v4634, 8
      %vm4659 = vcmp.lt.s32.totalorder %v4635, 8
      %vm4660 = vcmp.lt.s32.totalorder %v4636, 8
      %vm4661 = vcmp.lt.s32.totalorder %v4637, 8
      %vm4662 = vcmp.lt.s32.totalorder %v4638, 8
      %vm4663 = vcmp.lt.s32.totalorder %v4639, 8
      %vm4664 = vmand %vm4648, %vm4656
      %vm4665 = vmand %vm4649, %vm4657
      %vm4666 = vmand %vm4650, %vm4658
      %vm4667 = vmand %vm4651, %vm4659
      %vm4668 = vmand %vm4652, %vm4660
      %vm4669 = vmand %vm4653, %vm4661
      %vm4670 = vmand %vm4654, %vm4662
      %vm4671 = vmand %vm4655, %vm4663
      %v4672 = vsel %vm4664, 1, 0
      %v4673 = vsel %vm4665, 1, 0
      %v4674 = vsel %vm4666, 1, 0
      %v4675 = vsel %vm4667, 1, 0
      %v4676 = vsel %vm4668, 1, 0
      %v4677 = vsel %vm4669, 1, 0
      %v4678 = vsel %vm4670, 1, 0
      %v4679 = vsel %vm4671, 1, 0
      %v4680 = vcvt.s32.f32 %v4672
      %v4681 = vcvt.s32.f32 %v4673
      %v4682 = vcvt.s32.f32 %v4674
      %v4683 = vcvt.s32.f32 %v4675
      %v4684 = vcvt.s32.f32 %v4676
      %v4685 = vcvt.s32.f32 %v4677
      %v4686 = vcvt.s32.f32 %v4678
      %v4687 = vcvt.s32.f32 %v4679
      %v4688 = vmul.f32 %v4631, %v4680
      %v4689 = vmul.f32 %v4630, %v4681
      %v4690 = vmul.f32 %v4629, %v4682
      %v4691 = vmul.f32 %v4628, %v4683
      %v4692 = vmul.f32 %v4627, %v4684
      %v4693 = vmul.f32 %v4626, %v4685
      %v4694 = vmul.f32 %v4625, %v4686
      %v4695 = vmul.f32 %v4624, %v4687
      %v4696 = vld [vmem:[%s12 + $0x2] sm:$0x1]
      %v4697 = vlaneseq
      %v4698 = vshrl.u32 %v4697, 7
      %v4699 = vsub.s32 0, %v4698
      %v4700 = vrot.slane %v4696, %v4699
      %v4701 = vmul.f32 %v4688, %v4700
      %v4702 = vmul.f32 %v4689, %v4700
      %v4703 = vmul.f32 %v4690, %v4700
      %v4704 = vmul.f32 %v4691, %v4700
      %v4705 = vmul.f32 %v4692, %v4700
      %v4706 = vmul.f32 %v4693, %v4700
      %v4707 = vmul.f32 %v4694, %v4700
      %v4708 = vmul.f32 %v4695, %v4700
      %v4709 = vadd.f32 %v4607, %v4701
      %v4710 = vadd.f32 %v4608, %v4702
      %v4711 = vadd.f32 %v4609, %v4703
      %v4712 = vadd.f32 %v4610, %v4704
      %v4713 = vadd.f32 %v4611, %v4705
      %v4714 = vadd.f32 %v4612, %v4706
      %v4715 = vadd.f32 %v4613, %v4707
      %v4716 = vadd.f32 %v4614, %v4708
      %vm4717 = vcmp.ge.s32.totalorder %v4380, 0
      %vm4718 = vcmp.ge.s32.totalorder %v4381, 0
      %vm4719 = vcmp.ge.s32.totalorder %v4382, 0
      %vm4720 = vcmp.ge.s32.totalorder %v4383, 0
      %vm4721 = vcmp.ge.s32.totalorder %v4384, 0
      %vm4722 = vcmp.ge.s32.totalorder %v4385, 0
      %vm4723 = vcmp.ge.s32.totalorder %v4386, 0
      %vm4724 = vcmp.ge.s32.totalorder %v4387, 0
      %vm4725 = vcmp.lt.s32.totalorder %v4380, 8
      %vm4726 = vcmp.lt.s32.totalorder %v4381, 8
      %vm4727 = vcmp.lt.s32.totalorder %v4382, 8
      %vm4728 = vcmp.lt.s32.totalorder %v4383, 8
      %vm4729 = vcmp.lt.s32.totalorder %v4384, 8
      %vm4730 = vcmp.lt.s32.totalorder %v4385, 8
      %vm4731 = vcmp.lt.s32.totalorder %v4386, 8
      %vm4732 = vcmp.lt.s32.totalorder %v4387, 8
      %vm4733 = vmand %vm4717, %vm4725
      %vm4734 = vmand %vm4718, %vm4726
      %vm4735 = vmand %vm4719, %vm4727
      %vm4736 = vmand %vm4720, %vm4728
      %vm4737 = vmand %vm4721, %vm4729
      %vm4738 = vmand %vm4722, %vm4730
      %vm4739 = vmand %vm4723, %vm4731
      %vm4740 = vmand %vm4724, %vm4732
      %vm4741 = vmand %vm4733, %vm4461
      %vm4742 = vmand %vm4734, %vm4462
      %vm4743 = vmand %vm4735, %vm4463
      %vm4744 = vmand %vm4736, %vm4464
      %vm4745 = vmand %vm4737, %vm4465
      %vm4746 = vmand %vm4738, %vm4466
      %vm4747 = vmand %vm4739, %vm4467
      %vm4748 = vmand %vm4740, %vm4468
      %vm4749 = vmand %vm4741, %vm4477
      %vm4750 = vmand %vm4742, %vm4478
      %vm4751 = vmand %vm4743, %vm4479
      %vm4752 = vmand %vm4744, %vm4480
      %vm4753 = vmand %vm4745, %vm4481
      %vm4754 = vmand %vm4746, %vm4482
      %vm4755 = vmand %vm4747, %vm4483
      %vm4756 = vmand %vm4748, %vm4484
      %v4757 = vsel %vm4749, 1, 0
      %v4758 = vsel %vm4750, 1, 0
      %v4759 = vsel %vm4751, 1, 0
      %v4760 = vsel %vm4752, 1, 0
      %v4761 = vsel %vm4753, 1, 0
      %v4762 = vsel %vm4754, 1, 0
      %v4763 = vsel %vm4755, 1, 0
      %v4764 = vsel %vm4756, 1, 0
      %v4765 = vcvt.s32.f32 %v4757
      %v4766 = vcvt.s32.f32 %v4758
      %v4767 = vcvt.s32.f32 %v4759
      %v4768 = vcvt.s32.f32 %v4760
      %v4769 = vcvt.s32.f32 %v4761
      %v4770 = vcvt.s32.f32 %v4762
      %v4771 = vcvt.s32.f32 %v4763
      %v4772 = vcvt.s32.f32 %v4764
      %v4773 = vmul.f32 %v4420, %v4765
      %v4774 = vmul.f32 %v4419, %v4766
      %v4775 = vmul.f32 %v4418, %v4767
      %v4776 = vmul.f32 %v4417, %v4768
      %v4777 = vmul.f32 %v4416, %v4769
      %v4778 = vmul.f32 %v4415, %v4770
      %v4779 = vmul.f32 %v4414, %v4771
      %v4780 = vmul.f32 %v4413, %v4772
      %v4781 = vld [vmem:[%s12 + $0x3] sm:$0x1]
      %v4782 = vlaneseq
      %v4783 = vshrl.u32 %v4782, 7
      %v4784 = vsub.s32 0, %v4783
      %v4785 = vrot.slane %v4781, %v4784
      %v4786 = vmul.f32 %v4773, %v4785
      %v4787 = vmul.f32 %v4774, %v4785
      %v4788 = vmul.f32 %v4775, %v4785
      %v4789 = vmul.f32 %v4776, %v4785
      %v4790 = vmul.f32 %v4777, %v4785
      %v4791 = vmul.f32 %v4778, %v4785
      %v4792 = vmul.f32 %v4779, %v4785
      %v4793 = vmul.f32 %v4780, %v4785
      %v4794 = vadd.f32 %v4709, %v4786
      %v4795 = vadd.f32 %v4710, %v4787
      %v4796 = vadd.f32 %v4711, %v4788
      %v4797 = vadd.f32 %v4712, %v4789
      %v4798 = vadd.f32 %v4713, %v4790
      %v4799 = vadd.f32 %v4714, %v4791
      %v4800 = vadd.f32 %v4715, %v4792
      %v4801 = vadd.f32 %v4716, %v4793
      %vm4802 = vmand %vm4733, %vm4538
      %vm4803 = vmand %vm4734, %vm4539
      %vm4804 = vmand %vm4735, %vm4540
      %vm4805 = vmand %vm4736, %vm4541
      %vm4806 = vmand %vm4737, %vm4542
      %vm4807 = vmand %vm4738, %vm4543
      %vm4808 = vmand %vm4739, %vm4544
      %vm4809 = vmand %vm4740, %vm4545
      %vm4810 = vmand %vm4802, %vm4554
      %vm4811 = vmand %vm4803, %vm4555
      %vm4812 = vmand %vm4804, %vm4556
      %vm4813 = vmand %vm4805, %vm4557
      %vm4814 = vmand %vm4806, %vm4558
      %vm4815 = vmand %vm4807, %vm4559
      %vm4816 = vmand %vm4808, %vm4560
      %vm4817 = vmand %vm4809, %vm4561
      %v4818 = vsel %vm4810, 1, 0
      %v4819 = vsel %vm4811, 1, 0
      %v4820 = vsel %vm4812, 1, 0
      %v4821 = vsel %vm4813, 1, 0
      %v4822 = vsel %vm4814, 1, 0
      %v4823 = vsel %vm4815, 1, 0
      %v4824 = vsel %vm4816, 1, 0
      %v4825 = vsel %vm4817, 1, 0
      %v4826 = vcvt.s32.f32 %v4818
      %v4827 = vcvt.s32.f32 %v4819
      %v4828 = vcvt.s32.f32 %v4820
      %v4829 = vcvt.s32.f32 %v4821
      %v4830 = vcvt.s32.f32 %v4822
      %v4831 = vcvt.s32.f32 %v4823
      %v4832 = vcvt.s32.f32 %v4824
      %v4833 = vcvt.s32.f32 %v4825
      %v4834 = vmul.f32 %v4333, %v4826
      %v4835 = vmul.f32 %v4338, %v4827
      %v4836 = vmul.f32 %v4343, %v4828
      %v4837 = vmul.f32 %v4348, %v4829
      %v4838 = vmul.f32 %v4353, %v4830
      %v4839 = vmul.f32 %v4358, %v4831
      %v4840 = vmul.f32 %v4363, %v4832
      %v4841 = vmul.f32 %v4368, %v4833
      %v4842 = vld [vmem:[%s12 + $0x4] sm:$0x1]
      %v4843 = vlaneseq
      %v4844 = vshrl.u32 %v4843, 7
      %v4845 = vsub.s32 0, %v4844
      %v4846 = vrot.slane %v4842, %v4845
      %v4847 = vmul.f32 %v4834, %v4846
      %v4848 = vmul.f32 %v4835, %v4846
      %v4849 = vmul.f32 %v4836, %v4846
      %v4850 = vmul.f32 %v4837, %v4846
      %v4851 = vmul.f32 %v4838, %v4846
      %v4852 = vmul.f32 %v4839, %v4846
      %v4853 = vmul.f32 %v4840, %v4846
      %v4854 = vmul.f32 %v4841, %v4846
      %v4855 = vadd.f32 %v4794, %v4847
      %v4856 = vadd.f32 %v4795, %v4848
      %v4857 = vadd.f32 %v4796, %v4849
      %v4858 = vadd.f32 %v4797, %v4850
      %v4859 = vadd.f32 %v4798, %v4851
      %v4860 = vadd.f32 %v4799, %v4852
      %v4861 = vadd.f32 %v4800, %v4853
      %v4862 = vadd.f32 %v4801, %v4854
      %vm4863 = vmand %vm4733, %vm4640
      %vm4864 = vmand %vm4734, %vm4641
      %vm4865 = vmand %vm4735, %vm4642
      %vm4866 = vmand %vm4736, %vm4643
      %vm4867 = vmand %vm4737, %vm4644
      %vm4868 = vmand %vm4738, %vm4645
      %vm4869 = vmand %vm4739, %vm4646
      %vm4870 = vmand %vm4740, %vm4647
      %vm4871 = vmand %vm4863, %vm4656
      %vm4872 = vmand %vm4864, %vm4657
      %vm4873 = vmand %vm4865, %vm4658
      %vm4874 = vmand %vm4866, %vm4659
      %vm4875 = vmand %vm4867, %vm4660
      %vm4876 = vmand %vm4868, %vm4661
      %vm4877 = vmand %vm4869, %vm4662
      %vm4878 = vmand %vm4870, %vm4663
      %v4879 = vsel %vm4871, 1, 0
      %v4880 = vsel %vm4872, 1, 0
      %v4881 = vsel %vm4873, 1, 0
      %v4882 = vsel %vm4874, 1, 0
      %v4883 = vsel %vm4875, 1, 0
      %v4884 = vsel %vm4876, 1, 0
      %v4885 = vsel %vm4877, 1, 0
      %v4886 = vsel %vm4878, 1, 0
      %v4887 = vcvt.s32.f32 %v4879
      %v4888 = vcvt.s32.f32 %v4880
      %v4889 = vcvt.s32.f32 %v4881
      %v4890 = vcvt.s32.f32 %v4882
      %v4891 = vcvt.s32.f32 %v4883
      %v4892 = vcvt.s32.f32 %v4884
      %v4893 = vcvt.s32.f32 %v4885
      %v4894 = vcvt.s32.f32 %v4886
      %v4895 = vmul.f32 %v4630, %v4887
      %v4896 = vmul.f32 %v4629, %v4888
      %v4897 = vmul.f32 %v4628, %v4889
      %v4898 = vmul.f32 %v4627, %v4890
      %v4899 = vmul.f32 %v4626, %v4891
      %v4900 = vmul.f32 %v4625, %v4892
      %v4901 = vmul.f32 %v4624, %v4893
      %v4902 = vmul.f32 %v4631, %v4894
      %v4903 = vld [vmem:[%s12 + $0x5] sm:$0x1]
      %v4904 = vlaneseq
      %v4905 = vshrl.u32 %v4904, 7
      %v4906 = vsub.s32 0, %v4905
      %v4907 = vrot.slane %v4903, %v4906
      %v4908 = vmul.f32 %v4895, %v4907
      %v4909 = vmul.f32 %v4896, %v4907
      %v4910 = vmul.f32 %v4897, %v4907
      %v4911 = vmul.f32 %v4898, %v4907
      %v4912 = vmul.f32 %v4899, %v4907
      %v4913 = vmul.f32 %v4900, %v4907
      %v4914 = vmul.f32 %v4901, %v4907
      %v4915 = vmul.f32 %v4902, %v4907
      %v4916 = vadd.f32 %v4855, %v4908
      %v4917 = vadd.f32 %v4856, %v4909
      %v4918 = vadd.f32 %v4857, %v4910
      %v4919 = vadd.f32 %v4858, %v4911
      %v4920 = vadd.f32 %v4859, %v4912
      %v4921 = vadd.f32 %v4860, %v4913
      %v4922 = vadd.f32 %v4861, %v4914
      %v4923 = vadd.f32 %v4862, %v4915
      %v4924 = vadd.s32 %v4380, 1
      %v4925 = vadd.s32 %v4381, 1
      %v4926 = vadd.s32 %v4382, 1
      %v4927 = vadd.s32 %v4383, 1
      %v4928 = vadd.s32 %v4384, 1
      %v4929 = vadd.s32 %v4385, 1
      %v4930 = vadd.s32 %v4386, 1
      %v4931 = vadd.s32 %v4387, 1
      %vm4932 = vcmp.ge.s32.totalorder %v4924, 0
      %vm4933 = vcmp.ge.s32.totalorder %v4925, 0
      %vm4934 = vcmp.ge.s32.totalorder %v4926, 0
      %vm4935 = vcmp.ge.s32.totalorder %v4927, 0
      %vm4936 = vcmp.ge.s32.totalorder %v4928, 0
      %vm4937 = vcmp.ge.s32.totalorder %v4929, 0
      %vm4938 = vcmp.ge.s32.totalorder %v4930, 0
      %vm4939 = vcmp.ge.s32.totalorder %v4931, 0
      %vm4940 = vcmp.lt.s32.totalorder %v4924, 8
      %vm4941 = vcmp.lt.s32.totalorder %v4925, 8
      %vm4942 = vcmp.lt.s32.totalorder %v4926, 8
      %vm4943 = vcmp.lt.s32.totalorder %v4927, 8
      %vm4944 = vcmp.lt.s32.totalorder %v4928, 8
      %vm4945 = vcmp.lt.s32.totalorder %v4929, 8
      %vm4946 = vcmp.lt.s32.totalorder %v4930, 8
      %vm4947 = vcmp.lt.s32.totalorder %v4931, 8
      %vm4948 = vmand %vm4932, %vm4940
      %vm4949 = vmand %vm4933, %vm4941
      %vm4950 = vmand %vm4934, %vm4942
      %vm4951 = vmand %vm4935, %vm4943
      %vm4952 = vmand %vm4936, %vm4944
      %vm4953 = vmand %vm4937, %vm4945
      %vm4954 = vmand %vm4938, %vm4946
      %vm4955 = vmand %vm4939, %vm4947
      %vm4956 = vmand %vm4948, %vm4461
      %vm4957 = vmand %vm4949, %vm4462
      %vm4958 = vmand %vm4950, %vm4463
      %vm4959 = vmand %vm4951, %vm4464
      %vm4960 = vmand %vm4952, %vm4465
      %vm4961 = vmand %vm4953, %vm4466
      %vm4962 = vmand %vm4954, %vm4467
      %vm4963 = vmand %vm4955, %vm4468
      %vm4964 = vmand %vm4956, %vm4477
      %vm4965 = vmand %vm4957, %vm4478
      %vm4966 = vmand %vm4958, %vm4479
      %vm4967 = vmand %vm4959, %vm4480
      %vm4968 = vmand %vm4960, %vm4481
      %vm4969 = vmand %vm4961, %vm4482
      %vm4970 = vmand %vm4962, %vm4483
      %vm4971 = vmand %vm4963, %vm4484
      %v4972 = vsel %vm4964, 1, 0
      %v4973 = vsel %vm4965, 1, 0
      %v4974 = vsel %vm4966, 1, 0
      %v4975 = vsel %vm4967, 1, 0
      %v4976 = vsel %vm4968, 1, 0
      %v4977 = vsel %vm4969, 1, 0
      %v4978 = vsel %vm4970, 1, 0
      %v4979 = vsel %vm4971, 1, 0
      %v4980 = vcvt.s32.f32 %v4972
      %v4981 = vcvt.s32.f32 %v4973
      %v4982 = vcvt.s32.f32 %v4974
      %v4983 = vcvt.s32.f32 %v4975
      %v4984 = vcvt.s32.f32 %v4976
      %v4985 = vcvt.s32.f32 %v4977
      %v4986 = vcvt.s32.f32 %v4978
      %v4987 = vcvt.s32.f32 %v4979
      %v4988 = vmul.f32 %v4419, %v4980
      %v4989 = vmul.f32 %v4418, %v4981
      %v4990 = vmul.f32 %v4417, %v4982
      %v4991 = vmul.f32 %v4416, %v4983
      %v4992 = vmul.f32 %v4415, %v4984
      %v4993 = vmul.f32 %v4414, %v4985
      %v4994 = vmul.f32 %v4413, %v4986
      %v4995 = vmul.f32 %v4420, %v4987
      %v4996 = vld [vmem:[%s12 + $0x6] sm:$0x1]
      %v4997 = vlaneseq
      %v4998 = vshrl.u32 %v4997, 7
      %v4999 = vsub.s32 0, %v4998
      %v5000 = vrot.slane %v4996, %v4999
      %v5001 = vmul.f32 %v4988, %v5000
      %v5002 = vmul.f32 %v4989, %v5000
      %v5003 = vmul.f32 %v4990, %v5000
      %v5004 = vmul.f32 %v4991, %v5000
      %v5005 = vmul.f32 %v4992, %v5000
      %v5006 = vmul.f32 %v4993, %v5000
      %v5007 = vmul.f32 %v4994, %v5000
      %v5008 = vmul.f32 %v4995, %v5000
      %v5009 = vadd.f32 %v4916, %v5001
      %v5010 = vadd.f32 %v4917, %v5002
      %v5011 = vadd.f32 %v4918, %v5003
      %v5012 = vadd.f32 %v4919, %v5004
      %v5013 = vadd.f32 %v4920, %v5005
      %v5014 = vadd.f32 %v4921, %v5006
      %v5015 = vadd.f32 %v4922, %v5007
      %v5016 = vadd.f32 %v4923, %v5008
      %vm5017 = vmand %vm4948, %vm4538
      %vm5018 = vmand %vm4949, %vm4539
      %vm5019 = vmand %vm4950, %vm4540
      %vm5020 = vmand %vm4951, %vm4541
      %vm5021 = vmand %vm4952, %vm4542
      %vm5022 = vmand %vm4953, %vm4543
      %vm5023 = vmand %vm4954, %vm4544
      %vm5024 = vmand %vm4955, %vm4545
      %vm5025 = vmand %vm5017, %vm4554
      %vm5026 = vmand %vm5018, %vm4555
      %vm5027 = vmand %vm5019, %vm4556
      %vm5028 = vmand %vm5020, %vm4557
      %vm5029 = vmand %vm5021, %vm4558
      %vm5030 = vmand %vm5022, %vm4559
      %vm5031 = vmand %vm5023, %vm4560
      %vm5032 = vmand %vm5024, %vm4561
      %v5033 = vsel %vm5025, 1, 0
      %v5034 = vsel %vm5026, 1, 0
      %v5035 = vsel %vm5027, 1, 0
      %v5036 = vsel %vm5028, 1, 0
      %v5037 = vsel %vm5029, 1, 0
      %v5038 = vsel %vm5030, 1, 0
      %v5039 = vsel %vm5031, 1, 0
      %v5040 = vsel %vm5032, 1, 0
      %v5041 = vcvt.s32.f32 %v5033
      %v5042 = vcvt.s32.f32 %v5034
      %v5043 = vcvt.s32.f32 %v5035
      %v5044 = vcvt.s32.f32 %v5036
      %v5045 = vcvt.s32.f32 %v5037
      %v5046 = vcvt.s32.f32 %v5038
      %v5047 = vcvt.s32.f32 %v5039
      %v5048 = vcvt.s32.f32 %v5040
      %v5049 = vmul.f32 %v4338, %v5041
      %v5050 = vmul.f32 %v4343, %v5042
      %v5051 = vmul.f32 %v4348, %v5043
      %v5052 = vmul.f32 %v4353, %v5044
      %v5053 = vmul.f32 %v4358, %v5045
      %v5054 = vmul.f32 %v4363, %v5046
      %v5055 = vmul.f32 %v4368, %v5047
      %v5056 = vmul.f32 %v4333, %v5048
      %v5057 = vld [vmem:[%s12 + $0x7] sm:$0x1]
      %v5058 = vlaneseq
      %v5059 = vshrl.u32 %v5058, 7
      %v5060 = vsub.s32 0, %v5059
      %v5061 = vrot.slane %v5057, %v5060
      %v5062 = vmul.f32 %v5049, %v5061
      %v5063 = vmul.f32 %v5050, %v5061
      %v5064 = vmul.f32 %v5051, %v5061
      %v5065 = vmul.f32 %v5052, %v5061
      %v5066 = vmul.f32 %v5053, %v5061
      %v5067 = vmul.f32 %v5054, %v5061
      %v5068 = vmul.f32 %v5055, %v5061
      %v5069 = vmul.f32 %v5056, %v5061
      %v5070 = vadd.f32 %v5009, %v5062
      %v5071 = vadd.f32 %v5010, %v5063
      %v5072 = vadd.f32 %v5011, %v5064
      %v5073 = vadd.f32 %v5012, %v5065
      %v5074 = vadd.f32 %v5013, %v5066
      %v5075 = vadd.f32 %v5014, %v5067
      %v5076 = vadd.f32 %v5015, %v5068
      %v5077 = vadd.f32 %v5016, %v5069
      %vm5078 = vmand %vm4948, %vm4640
      %vm5079 = vmand %vm4949, %vm4641
      %vm5080 = vmand %vm4950, %vm4642
      %vm5081 = vmand %vm4951, %vm4643
      %vm5082 = vmand %vm4952, %vm4644
      %vm5083 = vmand %vm4953, %vm4645
      %vm5084 = vmand %vm4954, %vm4646
      %vm5085 = vmand %vm4955, %vm4647
      %vm5086 = vmand %vm5078, %vm4656
      %vm5087 = vmand %vm5079, %vm4657
      %vm5088 = vmand %vm5080, %vm4658
      %vm5089 = vmand %vm5081, %vm4659
      %vm5090 = vmand %vm5082, %vm4660
      %vm5091 = vmand %vm5083, %vm4661
      %vm5092 = vmand %vm5084, %vm4662
      %vm5093 = vmand %vm5085, %vm4663
      %v5094 = vsel %vm5086, 1, 0
      %v5095 = vsel %vm5087, 1, 0
      %v5096 = vsel %vm5088, 1, 0
      %v5097 = vsel %vm5089, 1, 0
      %v5098 = vsel %vm5090, 1, 0
      %v5099 = vsel %vm5091, 1, 0
      %v5100 = vsel %vm5092, 1, 0
      %v5101 = vsel %vm5093, 1, 0
      %v5102 = vcvt.s32.f32 %v5094
      %v5103 = vcvt.s32.f32 %v5095
      %v5104 = vcvt.s32.f32 %v5096
      %v5105 = vcvt.s32.f32 %v5097
      %v5106 = vcvt.s32.f32 %v5098
      %v5107 = vcvt.s32.f32 %v5099
      %v5108 = vcvt.s32.f32 %v5100
      %v5109 = vcvt.s32.f32 %v5101
      %v5110 = vmul.f32 %v4629, %v5102
      %v5111 = vmul.f32 %v4628, %v5103
      %v5112 = vmul.f32 %v4627, %v5104
      %v5113 = vmul.f32 %v4626, %v5105
      %v5114 = vmul.f32 %v4625, %v5106
      %v5115 = vmul.f32 %v4624, %v5107
      %v5116 = vmul.f32 %v4631, %v5108
      %v5117 = vmul.f32 %v4630, %v5109
      %v5118 = vld [vmem:[%s12 + $0x8] sm:$0x1]
      %v5119 = vlaneseq
      %v5120 = vshrl.u32 %v5119, 7
      %v5121 = vsub.s32 0, %v5120
      %v5122 = vrot.slane %v5118, %v5121
      %v5123 = vmul.f32 %v5110, %v5122
      %v5124 = vmul.f32 %v5111, %v5122
      %v5125 = vmul.f32 %v5112, %v5122
      %v5126 = vmul.f32 %v5113, %v5122
      %v5127 = vmul.f32 %v5114, %v5122
      %v5128 = vmul.f32 %v5115, %v5122
      %v5129 = vmul.f32 %v5116, %v5122
      %v5130 = vmul.f32 %v5117, %v5122
      %v5131 = vadd.f32 %v5070, %v5123
      %v5132 = vadd.f32 %v5071, %v5124
      %v5133 = vadd.f32 %v5072, %v5125
      %v5134 = vadd.f32 %v5073, %v5126
      %v5135 = vadd.f32 %v5074, %v5127
      %v5136 = vadd.f32 %v5075, %v5128
      %v5137 = vadd.f32 %v5076, %v5129
      %v5138 = vadd.f32 %v5077, %v5130
      %v5139 = vmax.f32 %v5131, 0.0
      %v5140 = vmax.f32 %v5132, 0.0
      %v5141 = vmax.f32 %v5133, 0.0
      %v5142 = vmax.f32 %v5134, 0.0
      %v5143 = vmax.f32 %v5135, 0.0
      %v5144 = vmax.f32 %v5136, 0.0
      %v5145 = vmax.f32 %v5137, 0.0
      %v5146 = vmax.f32 %v5138, 0.0
      %v5147 = vld [vmem:[%s14] sm:$0xff]
      %v5148 = vld [vmem:[%s14 + $0x8] sm:$0xff]
      %v5149 = vld [vmem:[%s14 + $0x10] sm:$0xff]
      %v5150 = vld [vmem:[%s14 + $0x18] sm:$0xff]
      %v5151 = vld [vmem:[%s14 + $0x20] sm:$0xff]
      %v5152 = vld [vmem:[%s14 + $0x28] sm:$0xff]
      %v5153 = vld [vmem:[%s14 + $0x30] sm:$0xff]
      %v5154 = vld [vmem:[%s14 + $0x38] sm:$0xff]
      %v5155 = vld [vmem:[%s14 + $0x40] sm:$0xff]
      %v5156 = vld [vmem:[%s14 + $0x48] sm:$0xff]
      %v5157 = vld [vmem:[%s14 + $0x50] sm:$0xff]
      %v5158 = vld [vmem:[%s14 + $0x58] sm:$0xff]
      %v5159 = vld [vmem:[%s14 + $0x60] sm:$0xff]
      %v5160 = vld [vmem:[%s14 + $0x68] sm:$0xff]
      %v5161 = vld [vmem:[%s14 + $0x70] sm:$0xff]
      %v5162 = vld [vmem:[%s14 + $0x78] sm:$0xff]
      %v5163 = vld [vmem:[%s15] sm:$0x1]
      %v5165 = vlaneseq
      %v5166 = vshrl.u32 %v5165, 7
      %v5167 = vsub.s32 0, %v5166
      %v5168 = vrot.slane %v5163, %v5167
      %5170 = vmatprep.subr.mxu0 0.0
      %5171 = vmatpush1.msra.mxu0 %v5162
      %5172 = vmatprep.subr.mxu0 0.0
      %5173 = vmatpush1.msra.mxu0 %v5161
      %5174 = vmatprep.subr.mxu0 0.0
      %5175 = vmatpush1.msra.mxu0 %v5160
      %5176 = vmatprep.subr.mxu0 0.0
      %5177 = vmatpush1.msra.mxu0 %v5159
      %5178 = vmatprep.subr.mxu0 0.0
      %5179 = vmatpush1.msra.mxu0 %v5158
      %5180 = vmatprep.subr.mxu0 0.0
      %5181 = vmatpush1.msra.mxu0 %v5157
      %5182 = vmatprep.subr.mxu0 0.0
      %5183 = vmatpush1.msra.mxu0 %v5156
      %5184 = vmatprep.subr.mxu0 0.0
      %5185 = vmatpush1.msra.mxu0 %v5155
      %5186 = vmatprep.subr.mxu0 0.0
      %5187 = vmatpush1.msra.mxu0 %v5154
      %5188 = vmatprep.subr.mxu0 0.0
      %5189 = vmatpush1.msra.mxu0 %v5153
      %5190 = vmatprep.subr.mxu0 0.0
      %5191 = vmatpush1.msra.mxu0 %v5152
      %5192 = vmatprep.subr.mxu0 0.0
      %5193 = vmatpush1.msra.mxu0 %v5151
      %5194 = vmatprep.subr.mxu0 0.0
      %5195 = vmatpush1.msra.mxu0 %v5150
      %5196 = vmatprep.subr.mxu0 0.0
      %5197 = vmatpush1.msra.mxu0 %v5149
      %5198 = vmatprep.subr.mxu0 0.0
      %5199 = vmatpush1.msra.mxu0 %v5148
      %5200 = vmatprep.subr.mxu0 0.0
      %5201 = vmatpush1.msra.mxu0 %v5147
      %5202 = vmatprep.subr.mxu0 0.0
      %5203 = vmatpush2.msra.mxu0 0.0
      %5204 = vmatprep.subr.mxu0 0.0
      %5205 = vmatpush2.msra.mxu0 0.0
      %5206 = vmatprep.subr.mxu0 0.0
      %5207 = vmatpush2.msra.mxu0 0.0
      %5208 = vmatprep.subr.mxu0 0.0
      %5209 = vmatpush2.msra.mxu0 0.0
      %5210 = vmatprep.subr.mxu0 0.0
      %5211 = vmatpush2.msra.mxu0 0.0
      %5212 = vmatprep.subr.mxu0 0.0
      %5213 = vmatpush2.msra.mxu0 0.0
      %5214 = vmatprep.subr.mxu0 0.0
      %5215 = vmatpush2.msra.mxu0 0.0
      %5216 = vmatprep.subr.mxu0 0.0
      %5217 = vmatpush2.msra.mxu0 0.0
      %5218 = vmatprep.subr.mxu0 0.0
      %5219 = vmatpush2.msra.mxu0 0.0
      %5220 = vmatprep.subr.mxu0 0.0
      %5221 = vmatpush2.msra.mxu0 0.0
      %5222 = vmatprep.subr.mxu0 0.0
      %5223 = vmatpush2.msra.mxu0 0.0
      %5224 = vmatprep.subr.mxu0 0.0
      %5225 = vmatpush2.msra.mxu0 0.0
      %5226 = vmatprep.subr.mxu0 0.0
      %5227 = vmatpush2.msra.mxu0 0.0
      %5228 = vmatprep.subr.mxu0 0.0
      %5229 = vmatpush2.msra.mxu0 0.0
      %5230 = vmatprep.subr.mxu0 0.0
      %5231 = vmatpush2.msra.mxu0 0.0
      %5232 = vmatprep.subr.mxu0 0.0
      %5233 = vmatpush2.msra.mxu0 0.0
      %5234 = vmatprep.mubr.f32.mxu0 0.0
      %5235 = vmatmul.mubr.f32.gmra.mxu0 %v5139
      %v5236 = vpop.f32.mrf.mxu0
      %v5237 = vadd.f32 %v5168, %v5236
      %v5238 = vpop.f32.mrf.mxu0
      %5239 = vmatprep.mubr.f32.mxu0 0.0
      %5240 = vmatmul.mubr.f32.gmra.mxu0 %v5140
      %v5241 = vpop.f32.mrf.mxu0
      %v5242 = vadd.f32 %v5168, %v5241
      %v5243 = vpop.f32.mrf.mxu0
      %5244 = vmatprep.mubr.f32.mxu0 0.0
      %5245 = vmatmul.mubr.f32.gmra.mxu0 %v5141
      %v5246 = vpop.f32.mrf.mxu0
      %v5247 = vadd.f32 %v5168, %v5246
      %v5248 = vpop.f32.mrf.mxu0
      %5249 = vmatprep.mubr.f32.mxu0 0.0
      %5250 = vmatmul.mubr.f32.gmra.mxu0 %v5142
      %v5251 = vpop.f32.mrf.mxu0
      %v5252 = vadd.f32 %v5168, %v5251
      %v5253 = vpop.f32.mrf.mxu0
      %5254 = vmatprep.mubr.f32.mxu0 0.0
      %5255 = vmatmul.mubr.f32.gmra.mxu0 %v5143
      %v5256 = vpop.f32.mrf.mxu0
      %v5257 = vadd.f32 %v5168, %v5256
      %v5258 = vpop.f32.mrf.mxu0
      %5259 = vmatprep.mubr.f32.mxu0 0.0
      %5260 = vmatmul.mubr.f32.gmra.mxu0 %v5144
      %v5261 = vpop.f32.mrf.mxu0
      %v5262 = vadd.f32 %v5168, %v5261
      %v5263 = vpop.f32.mrf.mxu0
      %5264 = vmatprep.mubr.f32.mxu0 0.0
      %5265 = vmatmul.mubr.f32.gmra.mxu0 %v5145
      %v5266 = vpop.f32.mrf.mxu0
      %v5267 = vadd.f32 %v5168, %v5266
      %v5268 = vpop.f32.mrf.mxu0
      %5269 = vmatprep.mubr.f32.mxu0 0.0
      %5270 = vmatmul.mubr.f32.gmra.mxu0 %v5146
      %v5271 = vpop.f32.mrf.mxu0
      %v5272 = vadd.f32 %v5168, %v5271
      %v5273 = vpop.f32.mrf.mxu0
      %5274 = vdwg.mxu0
      %v5275 = vadd.f32 %v4093, %v5237
      %v5276 = vadd.f32 %v4094, %v5242
      %v5277 = vadd.f32 %v4095, %v5247
      %v5278 = vadd.f32 %v4096, %v5252
      %v5279 = vadd.f32 %v4097, %v5257
      %v5280 = vadd.f32 %v4098, %v5262
      %v5281 = vadd.f32 %v4099, %v5267
      %v5282 = vadd.f32 %v4100, %v5272
      %5283 = vst.msk [vmem:[%s541] sm:$0xff] %vm560, %v5275
      %5284 = vst.msk [vmem:[%s541 + $0x8] sm:$0xff] %vm560, %v5276
      %5285 = vst.msk [vmem:[%s541 + $0x10] sm:$0xff] %vm560, %v5277
      %5286 = vst.msk [vmem:[%s541 + $0x18] sm:$0xff] %vm560, %v5278
      %5287 = vst.msk [vmem:[%s541 + $0x20] sm:$0xff] %vm560, %v5279
      %5288 = vst.msk [vmem:[%s541 + $0x28] sm:$0xff] %vm560, %v5280
      %5289 = vst.msk [vmem:[%s541 + $0x30] sm:$0xff] %vm560, %v5281
      %5290 = vst.msk [vmem:[%s541 + $0x38] sm:$0xff] %vm560, %v5282
      %p5291 = scmp.lt.s32.totalorder %s27, 1
      %s5292 = scalar_select %p5291, %s27, 1
      %s5293 = smul.addr %s5292, 8
      %s5294 = smul.addr %s5293, 8
      %s5295 = scalar_lea.vmem %s16, %s5294
      // Predicated region
      $region85: #{jsa_transformer_block.1} parent=83 // pred_check
        %p5296 = pneg %p391
      $region86: #{jsa_transformer_block.1} parent=83 // pred_check_branch
        %5298 = sbr.rel (%p5296) target = $region88
      $region87: #{jsa_transformer_block.1} parent=83 // pred_region
        _
      $region88: #{jsa_transformer_block.1} parent=83 // pred_fallthru
        _
    $region84: #{jsa_transformer_block.1} parent=5 // pred_fallthru
      _
    %p5299 = scmp.le.s32.totalorder 2, %s22
    // Predicated region
    $region89: #{jsa_transformer_block.1} parent=5 // pred_check
      %p5300 = pneg %p5299
    $region90: #{jsa_transformer_block.1} parent=5 // pred_check_branch
      %5302 = sbr.rel (%p5300) target = $region92
    $region91: #{jsa_transformer_block.1} parent=5 // pred_region
      %s5303 = ssub.s32 %s22, 2
      // Predicated region
      $region93: #{jsa_transformer_block.1} parent=91 // pred_check
        %p5304 = pneg %p397
      $region94: #{jsa_transformer_block.1} parent=91 // pred_check_branch
        %5306 = sbr.rel (%p5304) target = $region96
      $region95: #{jsa_transformer_block.1} parent=91 // pred_region
        %p5307 = scmp.lt.s32.totalorder %s28, 1
        %s5308 = scalar_select %p5307, %s28, 1
        %s5309 = smul.addr %s5308, 8
        %s5310 = smul.addr %s5309, 8
        %s5311 = scalar_lea.vmem %s16, %s5310
      $region96: #{jsa_transformer_block.1} parent=91 // pred_fallthru
        _
    $region92: #{jsa_transformer_block.1} parent=5 // pred_fallthru
      _
  $region6: #{jsa_transformer_block.1} parent=0 // loop_footer
    %s26 = sadd.s32 1, %s22
  $region7: #{jsa_transformer_block.1} parent=0 // loop_footer_branch
    %21 = sbr.rel target = $region3
  $region8: #{jsa_transformer_block.1} parent=0 // loop_exit
    _

</llo_original>
